<compile_context>
chip_gen: v5e
topology: v5e:2x2
jax: 0.10.0
libtpu: 0.0.40
codegen_flags: <defaults>
</compile_context>

<pallas_src>
import functools

import jax
import jax.numpy as jnp
from jax import lax
from jax.experimental import pallas as pl
from jax.experimental.pallas import tpu as pltpu

EPS = 1e-5
LANE = 128                       # pad every channel dim to a multiple of this
ROW_TILE = 256                   # pixel rows per grid step for the 1x1 kernels
VMEM_LIMIT = 32 * 1024 * 1024    # explicit; safe on v5e/v6e (128 MiB) and v7x (64 MiB)


def _rup(x, m):
    return (x + m - 1) // m * m


def _mosaic(n_axes):
    return pltpu.CompilerParams(
        dimension_semantics=("parallel",) * n_axes,
        vmem_limit_bytes=VMEM_LIMIT)


# --------------------------- Pallas kernels ---------------------------------

def _bn_relu_mm_kernel(x_ref, s_ref, b_ref, w_ref, o_ref):
    # out = relu(x * scale + shift) @ W       (bf16 operands, f32 accumulate)
    a = jnp.maximum(x_ref[...] * s_ref[...] + b_ref[...], 0.0)
    o_ref[...] = jnp.dot(a.astype(jnp.bfloat16), w_ref[...],
                         preferred_element_type=jnp.float32)


def _bn_relu_mm_add_kernel(x_ref, s_ref, b_ref, w_ref, r_ref, o_ref):
    # out = relu(x * scale + shift) @ W + residual
    a = jnp.maximum(x_ref[...] * s_ref[...] + b_ref[...], 0.0)
    o_ref[...] = (jnp.dot(a.astype(jnp.bfloat16), w_ref[...],
                          preferred_element_type=jnp.float32) + r_ref[...])


def _bn_relu_mm_stats_kernel(x_ref, s_ref, b_ref, w_ref,
                             o_ref, sum_ref, ssq_ref, *, rows_real):
    # Fused bn+relu+matmul that also emits per-tile per-channel sum / sum-of-
    # squares of its *output* (so the next BatchNorm's statistics never require
    # re-reading the activation from HBM).
    tm = x_ref.shape[0]
    a = jnp.maximum(x_ref[...] * s_ref[...] + b_ref[...], 0.0)
    # Zero rows that are only padding so both the output and the statistics
    # are exact (full-tensor reduction across all tiles happens in glue).
    ridx = lax.broadcasted_iota(jnp.int32, (tm, 1), 0) + pl.program_id(0) * tm
    a = jnp.where(ridx < rows_real, a, 0.0)
    y = jnp.dot(a.astype(jnp.bfloat16), w_ref[...],
                preferred_element_type=jnp.float32)
    o_ref[...] = y
    sum_ref[0, :, :] = jnp.sum(y, axis=0, keepdims=True)
    ssq_ref[0, :, :] = jnp.sum(y * y, axis=0, keepdims=True)


def _conv3x3_kernel(x_ref, s_ref, b_ref, ml_ref, mr_ref, w_ref,
                    o_ref, slab_ref, *, width, pad_top):
    # Fused bn+relu + dense ('same', stride-1) 3x3 conv of one image, expressed
    # as 9 shifted full-slab matmuls on the flattened (H*W, Cin) layout.
    #   x_ref : (1, H*W, Cin)      s_ref/b_ref : (1, Cin)
    #   ml/mr : (H*W, 1) column-wrap masks for dx = -1 / +1
    #   w_ref : (9, Cin, Cout) bf16
    #   o_ref : (1, H*W, Cout) f32
    #   slab  : VMEM (rows, Cin) f32 zero-framed activation slab (the halo
    #           lives here, so no padded copy of the activation in HBM).
    hw = x_ref.shape[1]
    cin = x_ref.shape[2]
    cout = o_ref.shape[2]
    rows = slab_ref.shape[0]

    a = jnp.maximum(x_ref[0] * s_ref[...] + b_ref[...], 0.0)          # (HW, Cin)
    slab_ref[0:pad_top, :] = jnp.zeros((pad_top, cin), jnp.float32)
    slab_ref[pad_top:pad_top + hw, :] = a                             # aligned
    slab_ref[pad_top + hw:rows, :] = jnp.zeros((rows - pad_top - hw, cin),
                                               jnp.float32)

    mask_l = ml_ref[...]
    mask_r = mr_ref[...]

    acc = jnp.zeros((hw, cout), jnp.float32)
    tap_idx = 0
    for dy in (-1, 0, 1):
        for dx in (-1, 0, 1):
            start = pad_top + dy * width + dx
            tap = slab_ref[start:start + hw, :]                       # (HW, Cin)
            if dx == -1:
                tap = tap * mask_l
            elif dx == 1:
                tap = tap * mask_r
            acc = acc + jnp.dot(tap.astype(jnp.bfloat16), w_ref[tap_idx],
                                preferred_element_type=jnp.float32)
            tap_idx += 1
    o_ref[0] = acc


# --------------------------- Pallas wrappers ---------------------------------

def bn_relu_matmul(x2d, scale, shift, w_bf16, *, residual=None,
                   row_tile=ROW_TILE):
    mp, cin = x2d.shape
    cout = w_bf16.shape[1]
    grid = mp // row_tile
    common = dict(
        grid=(grid,),
        out_shape=jax.ShapeDtypeStruct((mp, cout), jnp.float32),
        out_specs=pl.BlockSpec((row_tile, cout), lambda i: (i, 0)),
        compiler_params=_mosaic(1),
    )
    s2 = scale.reshape(1, cin)
    b2 = shift.reshape(1, cin)
    if residual is None:
        return pl.pallas_call(
            _bn_relu_mm_kernel,
            in_specs=[pl.BlockSpec((row_tile, cin), lambda i: (i, 0)),
                      pl.BlockSpec((1, cin), lambda i: (0, 0)),
                      pl.BlockSpec((1, cin), lambda i: (0, 0)),
                      pl.BlockSpec((cin, cout), lambda i: (0, 0))],
            **common)(x2d, s2, b2, w_bf16)
    return pl.pallas_call(
        _bn_relu_mm_add_kernel,
        in_specs=[pl.BlockSpec((row_tile, cin), lambda i: (i, 0)),
                  pl.BlockSpec((1, cin), lambda i: (0, 0)),
                  pl.BlockSpec((1, cin), lambda i: (0, 0)),
                  pl.BlockSpec((cin, cout), lambda i: (0, 0)),
                  pl.BlockSpec((row_tile, cout), lambda i: (i, 0))],
        **common)(x2d, s2, b2, w_bf16, residual)


def bn_relu_matmul_stats(x2d, scale, shift, w_bf16, *, rows_real,
                         row_tile=ROW_TILE):
    mp, cin = x2d.shape
    cout = w_bf16.shape[1]
    grid = mp // row_tile
    kern = functools.partial(_bn_relu_mm_stats_kernel, rows_real=rows_real)
    y, psum, pssq = pl.pallas_call(
        kern,
        grid=(grid,),
        out_shape=(jax.ShapeDtypeStruct((mp, cout), jnp.float32),
                   jax.ShapeDtypeStruct((grid, 1, cout), jnp.float32),
                   jax.ShapeDtypeStruct((grid, 1, cout), jnp.float32)),
        in_specs=[pl.BlockSpec((row_tile, cin), lambda i: (i, 0)),
                  pl.BlockSpec((1, cin), lambda i: (0, 0)),
                  pl.BlockSpec((1, cin), lambda i: (0, 0)),
                  pl.BlockSpec((cin, cout), lambda i: (0, 0))],
        out_specs=(pl.BlockSpec((row_tile, cout), lambda i: (i, 0)),
                   pl.BlockSpec((1, 1, cout), lambda i: (i, 0, 0)),
                   pl.BlockSpec((1, 1, cout), lambda i: (i, 0, 0))),
        compiler_params=_mosaic(1),
    )(x2d, scale.reshape(1, cin), shift.reshape(1, cin), w_bf16)
    return y, jnp.sum(psum[:, 0, :], axis=0), jnp.sum(pssq[:, 0, :], axis=0)


def conv3x3_bn_relu(y1_img, scale, shift, w9_bf16, *, height, width):
    # y1_img: (N, H*W, Cin_p) f32 -> dense stride-1 conv3x3(relu(bn(y1))),
    # returned as (N, H*W, Cout_p) f32.  Grid over images ("parallel").
    n, hw, cin = y1_img.shape
    cout = w9_bf16.shape[-1]
    del height
    pad_top = _rup(width + 1, 8)                     # sublane-aligned interior
    slab_rows = _rup(pad_top + hw + width + 1, 8)
    col = jnp.arange(hw, dtype=jnp.int32) % width
    mask_l = (col >= 1).astype(jnp.float32).reshape(hw, 1)
    mask_r = (col <= width - 2).astype(jnp.float32).reshape(hw, 1)
    kern = functools.partial(_conv3x3_kernel, width=width, pad_top=pad_top)
    return pl.pallas_call(
        kern,
        grid=(n,),
        out_shape=jax.ShapeDtypeStruct((n, hw, cout), jnp.float32),
        in_specs=[pl.BlockSpec((1, hw, cin), lambda i: (i, 0, 0)),
                  pl.BlockSpec((1, cin), lambda i: (0, 0)),
                  pl.BlockSpec((1, cin), lambda i: (0, 0)),
                  pl.BlockSpec((hw, 1), lambda i: (0, 0)),
                  pl.BlockSpec((hw, 1), lambda i: (0, 0)),
                  pl.BlockSpec((9, cin, cout), lambda i: (0, 0, 0))],
        out_specs=pl.BlockSpec((1, hw, cout), lambda i: (i, 0, 0)),
        scratch_shapes=[pltpu.VMEM((slab_rows, cin), jnp.float32)],
        compiler_params=_mosaic(1),
    )(y1_img, scale.reshape(1, cin), shift.reshape(1, cin),
      mask_l, mask_r, w9_bf16)


# --------------------------- Module forward ----------------------------------

def _fold_bn(gamma, beta, mean, var):
    scale = gamma / jnp.sqrt(var + EPS)
    return scale, beta - mean * scale


def _pad_vec(v, n):
    return jnp.pad(v, (0, n - v.shape[0]))


def _pad_mat(w, rows, cols):
    return jnp.pad(w, ((0, rows - w.shape[0]), (0, cols - w.shape[1])))


def preact_bottleneck_forward(x_nchw, params, stride, row_tile=ROW_TILE):
    x = jnp.transpose(x_nchw, (0, 2, 3, 1)).astype(jnp.float32)   # NCHW -> NHWC
    n, h, w, cin = x.shape
    planes = params["conv1_w"].shape[1]
    out_planes = params["conv3_w"].shape[1]
    cin_p, pln_p, out_p = _rup(cin, LANE), _rup(planes, LANE), _rup(out_planes, LANE)
    hw, m = h * w, n * h * w
    mp = _rup(m, row_tile)

    # Lane-dense (multiple-of-128) weights, cast once to bf16 (native MXU rate).
    w1 = _pad_mat(params["conv1_w"], cin_p, pln_p).astype(jnp.bfloat16)
    w2 = jnp.pad(params["conv2_w"],
                 ((0, 0), (0, 0), (0, pln_p - planes), (0, pln_p - planes))
                 ).reshape(9, pln_p, pln_p).astype(jnp.bfloat16)
    w3 = _pad_mat(params["conv3_w"], pln_p, out_p).astype(jnp.bfloat16)

    # bn1 statistics: x is produced upstream so this one reduction stays in glue;
    # bn2 statistics are fused into the conv1 kernel below.
    s1, b1 = _fold_bn(params["bn1_g"], params["bn1_b"],
                      jnp.mean(x, axis=(0, 1, 2)), jnp.var(x, axis=(0, 1, 2)))
    s1p, b1p = _pad_vec(s1, cin_p), _pad_vec(b1, cin_p)

    x_flat = jnp.pad(x.reshape(m, cin), ((0, mp - m), (0, cin_p - cin)))

    # ---- conv1 (1x1): fused bn1+relu+matmul, emits per-tile BN2 statistics ---
    y1_flat, y1_sum, y1_ssq = bn_relu_matmul_stats(
        x_flat, s1p, b1p, w1, rows_real=m, row_tile=row_tile)
    mean2 = y1_sum / m
    var2 = jnp.maximum(y1_ssq / m - mean2 * mean2, 0.0)
    s2, b2 = _fold_bn(_pad_vec(params["bn2_g"], pln_p),
                      _pad_vec(params["bn2_b"], pln_p), mean2, var2)

    # ---- conv2 (3x3): fused bn2+relu, 9 shifted full-slab matmuls per image --
    y1_img = y1_flat[:m].reshape(n, hw, pln_p)
    y2_dense = conv3x3_bn_relu(y1_img, s2, b2, w2, height=h, width=w)
    # TODO(synk): strided blocks still compute the dense output and subsample
    #             here; emitting only the strided rows needs strided VMEM reads.
    y2 = y2_dense.reshape(n, h, w, pln_p)[:, ::stride, ::stride, :]
    ho, wo = y2.shape[1], y2.shape[2]
    mo = n * ho * wo
    mop = _rup(mo, row_tile)
    y2_flat = y2.reshape(mo, pln_p)

    # bn3 statistics on the (small, strided) conv2 output.
    s3, b3 = _fold_bn(_pad_vec(params["bn3_g"], pln_p),
                      _pad_vec(params["bn3_b"], pln_p),
                      jnp.mean(y2_flat, axis=0), jnp.var(y2_flat, axis=0))
    y2_pad = jnp.pad(y2_flat, ((0, mop - mo), (0, 0)))

    # ---- shortcut branch ----
    if "short_w" in params:
        # TODO(synk): strided pixel selection still happens in XLA glue rather
        #             than via a strided/Element index_map.
        xs = x[:, ::stride, ::stride, :].reshape(mo, cin)
        xs = jnp.pad(xs, ((0, mop - mo), (0, cin_p - cin)))
        ws = _pad_mat(params["short_w"], cin_p, out_p).astype(jnp.bfloat16)
        shortcut = bn_relu_matmul(xs, s1p, b1p, ws, row_tile=row_tile)
    else:
        shortcut = jnp.pad(x.reshape(m, cin), ((0, mop - m), (0, out_p - cin)))

    # ---- conv3 (1x1): fused bn3+relu+matmul+residual add ----
    out_flat = bn_relu_matmul(y2_pad, s3, b3, w3, residual=shortcut,
                              row_tile=row_tile)
    out = out_flat[:mo, :out_planes].reshape(n, ho, wo, out_planes)
    return jnp.transpose(out, (0, 3, 1, 2))                   # back to NCHW


# --------------------------- Params & reference -------------------------------

def init_params(key, in_planes, planes, stride, expansion=4):
    out_planes = expansion * planes
    k = jax.random.split(key, 4)
    params = {
        "bn1_g": jnp.ones((in_planes,), jnp.float32),
        "bn1_b": jnp.zeros((in_planes,), jnp.float32),
        "bn2_g": jnp.ones((planes,), jnp.float32),
        "bn2_b": jnp.zeros((planes,), jnp.float32),
        "bn3_g": jnp.ones((planes,), jnp.float32),
        "bn3_b": jnp.zeros((planes,), jnp.float32),
        # 1x1 convs stored as (Cin, Cout) matrices, 3x3 conv as HWIO.
        "conv1_w": jax.random.normal(k[0], (in_planes, planes), jnp.float32)
                   / jnp.sqrt(in_planes),
        "conv2_w": jax.random.normal(k[1], (3, 3, planes, planes), jnp.float32)
                   / jnp.sqrt(9.0 * planes),
        "conv3_w": jax.random.normal(k[2], (planes, out_planes), jnp.float32)
                   / jnp.sqrt(planes),
    }
    if stride != 1 or in_planes != out_planes:
        params["short_w"] = (jax.random.normal(k[3], (in_planes, out_planes),
                                               jnp.float32) / jnp.sqrt(in_planes))
    return params


def reference_forward(x_nchw, params, stride):
    # Pure-JAX (XLA) reference; matmul/conv inputs are bf16 with f32 accumulate
    # (same numerics as the MXU-native Pallas path).
    x = jnp.transpose(x_nchw, (0, 2, 3, 1)).astype(jnp.float32)

    def bnr(t, g, b):
        s, sh = _fold_bn(g, b, jnp.mean(t, axis=(0, 1, 2)),
                         jnp.var(t, axis=(0, 1, 2)))
        return jnp.maximum(t * s + sh, 0.0)

    def mm(t, wmat):
        return jnp.einsum("nhwc,cd->nhwd", t.astype(jnp.bfloat16),
                          wmat.astype(jnp.bfloat16),
                          preferred_element_type=jnp.float32)

    def c3(t, wconv, s):
        return lax.conv_general_dilated(
            t.astype(jnp.bfloat16), wconv.astype(jnp.bfloat16), (s, s),
            ((1, 1), (1, 1)), dimension_numbers=("NHWC", "HWIO", "NHWC"),
            preferred_element_type=jnp.float32)

    pre = bnr(x, params["bn1_g"], params["bn1_b"])
    if "short_w" in params:
        shortcut = mm(pre[:, ::stride, ::stride, :], params["short_w"])
    else:
        shortcut = x
    out = mm(pre, params["conv1_w"])
    out = c3(bnr(out, params["bn2_g"], params["bn2_b"]), params["conv2_w"], stride)
    out = mm(bnr(out, params["bn3_g"], params["bn3_b"]), params["conv3_w"]) + shortcut
    return jnp.transpose(out, (0, 3, 1, 2))


# --------------------------- Main ---------------------------------------------

if __name__ == "__main__":
    key = jax.random.PRNGKey(0)
    k = jax.random.split(key, 4)

    configs = [
        # (N, in_planes, H, W, planes, stride)
        (2, 16, 12, 12, 8, 2),   # projection (conv) shortcut, strided
        (2, 32, 12, 12, 8, 1),   # identity shortcut
    ]
    key_pairs = [(k[0], k[1]), (k[2], k[3])]

    for (N, in_planes, H, W, planes, stride), (kx, kp) in zip(configs, key_pairs):
        x = jax.random.normal(kx, (N, in_planes, H, W), jnp.float32)  # NCHW
        params = init_params(kp, in_planes, planes, stride)

        fwd = jax.jit(functools.partial(preact_bottleneck_forward, stride=stride))
        out = jax.block_until_ready(fwd(x, params))

        ref = reference_forward(x, params, stride)
        Ho = (H + 2 - 3) // stride + 1
        assert out.shape == (N, 4 * planes, Ho, Ho), out.shape
        err = float(jnp.max(jnp.abs(out - ref)))
        assert jnp.allclose(out, ref, atol=5e-3, rtol=5e-3), err

    print("KERNEL_OK")
</pallas_src>

<mosaic_0001>
module attributes {stable_mosaic.version = 11 : i64} {
  func.func @_bn_relu_mm_stats_kernel(%arg0: i32, %arg1: memref<256x128xf32, #tpu.memory_space<vmem>>, %arg2: memref<1x128xf32, #tpu.memory_space<vmem>>, %arg3: memref<1x128xf32, #tpu.memory_space<vmem>>, %arg4: memref<128x128xbf16, #tpu.memory_space<vmem>>, %arg5: memref<256x128xf32, #tpu.memory_space<vmem>>, %arg6: memref<1x1x128xf32, #tpu.memory_space<vmem>>, %arg7: memref<1x1x128xf32, #tpu.memory_space<vmem>>) attributes {dimension_semantics = [#tpu.dimension_semantics<parallel>], iteration_bounds = array<i64: 2>, scalar_prefetch = 0 : i64, scratch_operands = 0 : i64, tpu.core_type = #tpu.core_type<tc>, window_params = [{transform_indices = @transform_0, window_bounds = array<i64: 256, 128>}, {pipeline_mode = #tpu.pipeline_mode<synchronous>, transform_indices = @transform_1, window_bounds = array<i64: 1, 128>}, {pipeline_mode = #tpu.pipeline_mode<synchronous>, transform_indices = @transform_2, window_bounds = array<i64: 1, 128>}, {pipeline_mode = #tpu.pipeline_mode<synchronous>, transform_indices = @transform_3, window_bounds = array<i64: 128, 128>}, {transform_indices = @transform_4, window_bounds = array<i64: 256, 128>}, {transform_indices = @transform_5, window_bounds = array<i64: 1, 1, 128>}, {transform_indices = @transform_6, window_bounds = array<i64: 1, 1, 128>}]} {
    %c0 = arith.constant 0 : index
    %c0_0 = arith.constant 0 : index
    %0 = vector.load %arg1[%c0, %c0_0] : memref<256x128xf32, #tpu.memory_space<vmem>>, vector<256x128xf32>
    %c0_1 = arith.constant 0 : index
    %c0_2 = arith.constant 0 : index
    %1 = vector.load %arg2[%c0_1, %c0_2] : memref<1x128xf32, #tpu.memory_space<vmem>>, vector<1x128xf32>
    %2 = vector.broadcast %1 : vector<1x128xf32> to vector<256x128xf32>
    %3 = arith.mulf %0, %2 : vector<256x128xf32>
    %c0_3 = arith.constant 0 : index
    %c0_4 = arith.constant 0 : index
    %4 = vector.load %arg3[%c0_3, %c0_4] : memref<1x128xf32, #tpu.memory_space<vmem>>, vector<1x128xf32>
    %5 = vector.broadcast %4 : vector<1x128xf32> to vector<256x128xf32>
    %6 = arith.addf %3, %5 : vector<256x128xf32>
    %cst = arith.constant 0.000000e+00 : f32
    %7 = vector.broadcast %cst : f32 to vector<256x128xf32>
    %8 = arith.maximumf %6, %7 : vector<256x128xf32>
    %9 = tpu.iota {dimensions = array<i32: 0>} : vector<256x1xi32>
    %c256_i32 = arith.constant 256 : i32
    %10 = arith.muli %arg0, %c256_i32 : i32
    %11 = vector.broadcast %10 : i32 to vector<256x1xi32>
    %12 = arith.addi %9, %11 : vector<256x1xi32>
    %c288_i32 = arith.constant 288 : i32
    %13 = vector.broadcast %c288_i32 : i32 to vector<256x1xi32>
    %14 = arith.cmpi slt, %12, %13 : vector<256x1xi32>
    %cst_5 = arith.constant 0.000000e+00 : f32
    %15 = vector.shape_cast %14 : vector<256x1xi1> to vector<256x1xi1>
    %16 = vector.broadcast %15 : vector<256x1xi1> to vector<256x128xi1>
    %17 = vector.broadcast %cst_5 : f32 to vector<256x128xf32>
    %18 = arith.select %16, %8, %17 : vector<256x128xi1>, vector<256x128xf32>
    %19 = arith.truncf %18 : vector<256x128xf32> to vector<256x128xbf16>
    %c0_6 = arith.constant 0 : index
    %c0_7 = arith.constant 0 : index
    %20 = vector.load %arg4[%c0_6, %c0_7] : memref<128x128xbf16, #tpu.memory_space<vmem>>, vector<128x128xbf16>
    %cst_8 = arith.constant dense<0.000000e+00> : vector<256x128xf32>
    %21 = tpu.matmul %19, %20, %cst_8 {dimension_numbers = #tpu.dot_dimension_numbers<[1], [0], [0], [1], [0, 0, 1, 1], [], []>} : vector<256x128xbf16>, vector<128x128xbf16>, vector<256x128xf32> -> vector<256x128xf32>
    %c0_9 = arith.constant 0 : index
    %c0_10 = arith.constant 0 : index
    %22 = vector.load %arg5[%c0_9, %c0_10] : memref<256x128xf32, #tpu.memory_space<vmem>>, vector<256x128xf32>
    tpu.vector_store %arg5[%c0_9, %c0_10], %21 {strides = array<i32>} : memref<256x128xf32, #tpu.memory_space<vmem>>, vector<256x128xf32>,
    %cst_11 = arith.constant dense<0.000000e+00> : vector<128xf32>
    %23 = vector.multi_reduction <add>, %21, %cst_11 [0] : vector<256x128xf32> to vector<128xf32>
    %24 = vector.shape_cast %23 : vector<128xf32> to vector<1x128xf32>
    %c0_12 = arith.constant 0 : index
    %c0_13 = arith.constant 0 : index
    %c0_14 = arith.constant 0 : index
    %25 = vector.load %arg6[%c0_12, %c0_13, %c0_14] : memref<1x1x128xf32, #tpu.memory_space<vmem>>, vector<1x1x128xf32>
    %26 = vector.shape_cast %25 : vector<1x1x128xf32> to vector<1x128xf32>
    %27 = vector.shape_cast %24 : vector<1x128xf32> to vector<1x1x128xf32>
    tpu.vector_store %arg6[%c0_12, %c0_13, %c0_14], %27 {strides = array<i32>} : memref<1x1x128xf32, #tpu.memory_space<vmem>>, vector<1x1x128xf32>,
    %28 = arith.mulf %21, %21 : vector<256x128xf32>
    %cst_15 = arith.constant dense<0.000000e+00> : vector<128xf32>
    %29 = vector.multi_reduction <add>, %28, %cst_15 [0] : vector<256x128xf32> to vector<128xf32>
    %30 = vector.shape_cast %29 : vector<128xf32> to vector<1x128xf32>
    %c0_16 = arith.constant 0 : index
    %c0_17 = arith.constant 0 : index
    %c0_18 = arith.constant 0 : index
    %31 = vector.load %arg7[%c0_16, %c0_17, %c0_18] : memref<1x1x128xf32, #tpu.memory_space<vmem>>, vector<1x1x128xf32>
    %32 = vector.shape_cast %31 : vector<1x1x128xf32> to vector<1x128xf32>
    %33 = vector.shape_cast %30 : vector<1x128xf32> to vector<1x1x128xf32>
    tpu.vector_store %arg7[%c0_16, %c0_17, %c0_18], %33 {strides = array<i32>} : memref<1x1x128xf32, #tpu.memory_space<vmem>>, vector<1x1x128xf32>,
    return
  }
  func.func @transform_0(%arg0: i32) -> (i32, i32) {
    %c0_i32 = arith.constant 0 : i32
    %c0_i32_0 = arith.constant 0 : i32
    return %arg0, %c0_i32 : i32, i32
  }
  func.func @transform_1(%arg0: i32) -> (i32, i32) {
    %c0_i32 = arith.constant 0 : i32
    %c0_i32_0 = arith.constant 0 : i32
    %c0_i32_1 = arith.constant 0 : i32
    return %c0_i32, %c0_i32_0 : i32, i32
  }
  func.func @transform_2(%arg0: i32) -> (i32, i32) {
    %c0_i32 = arith.constant 0 : i32
    %c0_i32_0 = arith.constant 0 : i32
    %c0_i32_1 = arith.constant 0 : i32
    return %c0_i32, %c0_i32_0 : i32, i32
  }
  func.func @transform_3(%arg0: i32) -> (i32, i32) {
    %c0_i32 = arith.constant 0 : i32
    %c0_i32_0 = arith.constant 0 : i32
    %c0_i32_1 = arith.constant 0 : i32
    return %c0_i32, %c0_i32_0 : i32, i32
  }
  func.func @transform_4(%arg0: i32) -> (i32, i32) {
    %c0_i32 = arith.constant 0 : i32
    %c0_i32_0 = arith.constant 0 : i32
    return %arg0, %c0_i32 : i32, i32
  }
  func.func @transform_5(%arg0: i32) -> (i32, i32, i32) {
    %c0_i32 = arith.constant 0 : i32
    %c0_i32_0 = arith.constant 0 : i32
    %c0_i32_1 = arith.constant 0 : i32
    return %arg0, %c0_i32, %c0_i32_0 : i32, i32, i32
  }
  func.func @transform_6(%arg0: i32) -> (i32, i32, i32) {
    %c0_i32 = arith.constant 0 : i32
    %c0_i32_0 = arith.constant 0 : i32
    %c0_i32_1 = arith.constant 0 : i32
    return %arg0, %c0_i32, %c0_i32_0 : i32, i32, i32
  }
}

module attributes {stable_mosaic.version = 11 : i64} {
  func.func @_conv3x3_kernel(%arg0: i32, %arg1: memref<1x144x128xf32, #tpu.memory_space<vmem>>, %arg2: memref<1x128xf32, #tpu.memory_space<vmem>>, %arg3: memref<1x128xf32, #tpu.memory_space<vmem>>, %arg4: memref<144x1xf32, #tpu.memory_space<vmem>>, %arg5: memref<144x1xf32, #tpu.memory_space<vmem>>, %arg6: memref<9x128x128xbf16, #tpu.memory_space<vmem>>, %arg7: memref<1x144x128xf32, #tpu.memory_space<vmem>>, %arg8: memref<176x128xf32, #tpu.memory_space<vmem>>) attributes {dimension_semantics = [#tpu.dimension_semantics<parallel>], iteration_bounds = array<i64: 2>, scalar_prefetch = 0 : i64, scratch_operands = 1 : i64, tpu.core_type = #tpu.core_type<tc>, window_params = [{transform_indices = @transform_0, window_bounds = array<i64: 1, 144, 128>}, {pipeline_mode = #tpu.pipeline_mode<synchronous>, transform_indices = @transform_1, window_bounds = array<i64: 1, 128>}, {pipeline_mode = #tpu.pipeline_mode<synchronous>, transform_indices = @transform_2, window_bounds = array<i64: 1, 128>}, {pipeline_mode = #tpu.pipeline_mode<synchronous>, transform_indices = @transform_3, window_bounds = array<i64: 144, 1>}, {pipeline_mode = #tpu.pipeline_mode<synchronous>, transform_indices = @transform_4, window_bounds = array<i64: 144, 1>}, {pipeline_mode = #tpu.pipeline_mode<synchronous>, transform_indices = @transform_5, window_bounds = array<i64: 9, 128, 128>}, {transform_indices = @transform_6, window_bounds = array<i64: 1, 144, 128>}]} {
    %c0 = arith.constant 0 : index
    %c0_0 = arith.constant 0 : index
    %c0_1 = arith.constant 0 : index
    %0 = vector.load %arg1[%c0, %c0_0, %c0_1] : memref<1x144x128xf32, #tpu.memory_space<vmem>>, vector<1x144x128xf32>
    %1 = vector.shape_cast %0 : vector<1x144x128xf32> to vector<144x128xf32>
    %c0_2 = arith.constant 0 : index
    %c0_3 = arith.constant 0 : index
    %2 = vector.load %arg2[%c0_2, %c0_3] : memref<1x128xf32, #tpu.memory_space<vmem>>, vector<1x128xf32>
    %3 = vector.broadcast %2 : vector<1x128xf32> to vector<144x128xf32>
    %4 = arith.mulf %1, %3 : vector<144x128xf32>
    %c0_4 = arith.constant 0 : index
    %c0_5 = arith.constant 0 : index
    %5 = vector.load %arg3[%c0_4, %c0_5] : memref<1x128xf32, #tpu.memory_space<vmem>>, vector<1x128xf32>
    %6 = vector.broadcast %5 : vector<1x128xf32> to vector<144x128xf32>
    %7 = arith.addf %4, %6 : vector<144x128xf32>
    %cst = arith.constant 0.000000e+00 : f32
    %8 = vector.broadcast %cst : f32 to vector<144x128xf32>
    %9 = arith.maximumf %7, %8 : vector<144x128xf32>
    %cst_6 = arith.constant 0.000000e+00 : f32
    %10 = vector.broadcast %cst_6 : f32 to vector<16x128xf32>
    %c0_7 = arith.constant 0 : index
    %c0_8 = arith.constant 0 : index
    %11 = vector.load %arg8[%c0_7, %c0_8] : memref<176x128xf32, #tpu.memory_space<vmem>>, vector<16x128xf32>
    tpu.vector_store %arg8[%c0_7, %c0_8], %10 {strides = array<i32>} : memref<176x128xf32, #tpu.memory_space<vmem>>, vector<16x128xf32>,
    %c16 = arith.constant 16 : index
    %c0_9 = arith.constant 0 : index
    %12 = vector.load %arg8[%c16, %c0_9] : memref<176x128xf32, #tpu.memory_space<vmem>>, vector<144x128xf32>
    tpu.vector_store %arg8[%c16, %c0_9], %9 {strides = array<i32>} : memref<176x128xf32, #tpu.memory_space<vmem>>, vector<144x128xf32>,
    %cst_10 = arith.constant 0.000000e+00 : f32
    %13 = vector.broadcast %cst_10 : f32 to vector<16x128xf32>
    %c160 = arith.constant 160 : index
    %c0_11 = arith.constant 0 : index
    %14 = vector.load %arg8[%c160, %c0_11] : memref<176x128xf32, #tpu.memory_space<vmem>>, vector<16x128xf32>
    tpu.vector_store %arg8[%c160, %c0_11], %13 {strides = array<i32>} : memref<176x128xf32, #tpu.memory_space<vmem>>, vector<16x128xf32>,
    %c0_12 = arith.constant 0 : index
    %c0_13 = arith.constant 0 : index
    %15 = vector.load %arg4[%c0_12, %c0_13] : memref<144x1xf32, #tpu.memory_space<vmem>>, vector<144x1xf32>
    %c0_14 = arith.constant 0 : index
    %c0_15 = arith.constant 0 : index
    %16 = vector.load %arg5[%c0_14, %c0_15] : memref<144x1xf32, #tpu.memory_space<vmem>>, vector<144x1xf32>
    %cst_16 = arith.constant 0.000000e+00 : f32
    %17 = vector.broadcast %cst_16 : f32 to vector<144x128xf32>
    %c3 = arith.constant 3 : index
    %c0_17 = arith.constant 0 : index
    %18 = vector.load %arg8[%c3, %c0_17] : memref<176x128xf32, #tpu.memory_space<vmem>>, vector<144x128xf32>
    %19 = vector.broadcast %15 : vector<144x1xf32> to vector<144x128xf32>
    %20 = arith.mulf %18, %19 : vector<144x128xf32>
    %21 = arith.truncf %20 : vector<144x128xf32> to vector<144x128xbf16>
    %c0_18 = arith.constant 0 : index
    %c0_19 = arith.constant 0 : index
    %c0_20 = arith.constant 0 : index
    %22 = vector.load %arg6[%c0_18, %c0_19, %c0_20] : memref<9x128x128xbf16, #tpu.memory_space<vmem>>, vector<1x128x128xbf16>
    %23 = vector.shape_cast %22 : vector<1x128x128xbf16> to vector<128x128xbf16>
    %cst_21 = arith.constant dense<0.000000e+00> : vector<144x128xf32>
    %24 = tpu.matmul %21, %23, %cst_21 {dimension_numbers = #tpu.dot_dimension_numbers<[1], [0], [0], [1], [0, 0, 1, 1], [], []>} : vector<144x128xbf16>, vector<128x128xbf16>, vector<144x128xf32> -> vector<144x128xf32>
    %25 = arith.addf %17, %24 : vector<144x128xf32>
    %c4 = arith.constant 4 : index
    %c0_22 = arith.constant 0 : index
    %26 = vector.load %arg8[%c4, %c0_22] : memref<176x128xf32, #tpu.memory_space<vmem>>, vector<144x128xf32>
    %27 = arith.truncf %26 : vector<144x128xf32> to vector<144x128xbf16>
    %c1 = arith.constant 1 : index
    %c0_23 = arith.constant 0 : index
    %c0_24 = arith.constant 0 : index
    %28 = vector.load %arg6[%c1, %c0_23, %c0_24] : memref<9x128x128xbf16, #tpu.memory_space<vmem>>, vector<1x128x128xbf16>
    %29 = vector.shape_cast %28 : vector<1x128x128xbf16> to vector<128x128xbf16>
    %cst_25 = arith.constant dense<0.000000e+00> : vector<144x128xf32>
    %30 = tpu.matmul %27, %29, %cst_25 {dimension_numbers = #tpu.dot_dimension_numbers<[1], [0], [0], [1], [0, 0, 1, 1], [], []>} : vector<144x128xbf16>, vector<128x128xbf16>, vector<144x128xf32> -> vector<144x128xf32>
    %31 = arith.addf %25, %30 : vector<144x128xf32>
    %c5 = arith.constant 5 : index
    %c0_26 = arith.constant 0 : index
    %32 = vector.load %arg8[%c5, %c0_26] : memref<176x128xf32, #tpu.memory_space<vmem>>, vector<144x128xf32>
    %33 = vector.broadcast %16 : vector<144x1xf32> to vector<144x128xf32>
    %34 = arith.mulf %32, %33 : vector<144x128xf32>
    %35 = arith.truncf %34 : vector<144x128xf32> to vector<144x128xbf16>
    %c2 = arith.constant 2 : index
    %c0_27 = arith.constant 0 : index
    %c0_28 = arith.constant 0 : index
    %36 = vector.load %arg6[%c2, %c0_27, %c0_28] : memref<9x128x128xbf16, #tpu.memory_space<vmem>>, vector<1x128x128xbf16>
    %37 = vector.shape_cast %36 : vector<1x128x128xbf16> to vector<128x128xbf16>
    %cst_29 = arith.constant dense<0.000000e+00> : vector<144x128xf32>
    %38 = tpu.matmul %35, %37, %cst_29 {dimension_numbers = #tpu.dot_dimension_numbers<[1], [0], [0], [1], [0, 0, 1, 1], [], []>} : vector<144x128xbf16>, vector<128x128xbf16>, vector<144x128xf32> -> vector<144x128xf32>
    %39 = arith.addf %31, %38 : vector<144x128xf32>
    %c15 = arith.constant 15 : index
    %c0_30 = arith.constant 0 : index
    %40 = vector.load %arg8[%c15, %c0_30] : memref<176x128xf32, #tpu.memory_space<vmem>>, vector<144x128xf32>
    %41 = vector.broadcast %15 : vector<144x1xf32> to vector<144x128xf32>
    %42 = arith.mulf %40, %41 : vector<144x128xf32>
    %43 = arith.truncf %42 : vector<144x128xf32> to vector<144x128xbf16>
    %c3_31 = arith.constant 3 : index
    %c0_32 = arith.constant 0 : index
    %c0_33 = arith.constant 0 : index
    %44 = vector.load %arg6[%c3_31, %c0_32, %c0_33] : memref<9x128x128xbf16, #tpu.memory_space<vmem>>, vector<1x128x128xbf16>
    %45 = vector.shape_cast %44 : vector<1x128x128xbf16> to vector<128x128xbf16>
    %cst_34 = arith.constant dense<0.000000e+00> : vector<144x128xf32>
    %46 = tpu.matmul %43, %45, %cst_34 {dimension_numbers = #tpu.dot_dimension_numbers<[1], [0], [0], [1], [0, 0, 1, 1], [], []>} : vector<144x128xbf16>, vector<128x128xbf16>, vector<144x128xf32> -> vector<144x128xf32>
    %47 = arith.addf %39, %46 : vector<144x128xf32>
    %c16_35 = arith.constant 16 : index
    %c0_36 = arith.constant 0 : index
    %48 = vector.load %arg8[%c16_35, %c0_36] : memref<176x128xf32, #tpu.memory_space<vmem>>, vector<144x128xf32>
    %49 = arith.truncf %48 : vector<144x128xf32> to vector<144x128xbf16>
    %c4_37 = arith.constant 4 : index
    %c0_38 = arith.constant 0 : index
    %c0_39 = arith.constant 0 : index
    %50 = vector.load %arg6[%c4_37, %c0_38, %c0_39] : memref<9x128x128xbf16, #tpu.memory_space<vmem>>, vector<1x128x128xbf16>
    %51 = vector.shape_cast %50 : vector<1x128x128xbf16> to vector<128x128xbf16>
    %cst_40 = arith.constant dense<0.000000e+00> : vector<144x128xf32>
    %52 = tpu.matmul %49, %51, %cst_40 {dimension_numbers = #tpu.dot_dimension_numbers<[1], [0], [0], [1], [0, 0, 1, 1], [], []>} : vector<144x128xbf16>, vector<128x128xbf16>, vector<144x128xf32> -> vector<144x128xf32>
    %53 = arith.addf %47, %52 : vector<144x128xf32>
    %c17 = arith.constant 17 : index
    %c0_41 = arith.constant 0 : index
    %54 = vector.load %arg8[%c17, %c0_41] : memref<176x128xf32, #tpu.memory_space<vmem>>, vector<144x128xf32>
    %55 = vector.broadcast %16 : vector<144x1xf32> to vector<144x128xf32>
    %56 = arith.mulf %54, %55 : vector<144x128xf32>
    %57 = arith.truncf %56 : vector<144x128xf32> to vector<144x128xbf16>
    %c5_42 = arith.constant 5 : index
    %c0_43 = arith.constant 0 : index
    %c0_44 = arith.constant 0 : index
    %58 = vector.load %arg6[%c5_42, %c0_43, %c0_44] : memref<9x128x128xbf16, #tpu.memory_space<vmem>>, vector<1x128x128xbf16>
    %59 = vector.shape_cast %58 : vector<1x128x128xbf16> to vector<128x128xbf16>
    %cst_45 = arith.constant dense<0.000000e+00> : vector<144x128xf32>
    %60 = tpu.matmul %57, %59, %cst_45 {dimension_numbers = #tpu.dot_dimension_numbers<[1], [0], [0], [1], [0, 0, 1, 1], [], []>} : vector<144x128xbf16>, vector<128x128xbf16>, vector<144x128xf32> -> vector<144x128xf32>
    %61 = arith.addf %53, %60 : vector<144x128xf32>
    %c27 = arith.constant 27 : index
    %c0_46 = arith.constant 0 : index
    %62 = vector.load %arg8[%c27, %c0_46] : memref<176x128xf32, #tpu.memory_space<vmem>>, vector<144x128xf32>
    %63 = vector.broadcast %15 : vector<144x1xf32> to vector<144x128xf32>
    %64 = arith.mulf %62, %63 : vector<144x128xf32>
    %65 = arith.truncf %64 : vector<144x128xf32> to vector<144x128xbf16>
    %c6 = arith.constant 6 : index
    %c0_47 = arith.constant 0 : index
    %c0_48 = arith.constant 0 : index
    %66 = vector.load %arg6[%c6, %c0_47, %c0_48] : memref<9x128x128xbf16, #tpu.memory_space<vmem>>, vector<1x128x128xbf16>
    %67 = vector.shape_cast %66 : vector<1x128x128xbf16> to vector<128x128xbf16>
    %cst_49 = arith.constant dense<0.000000e+00> : vector<144x128xf32>
    %68 = tpu.matmul %65, %67, %cst_49 {dimension_numbers = #tpu.dot_dimension_numbers<[1], [0], [0], [1], [0, 0, 1, 1], [], []>} : vector<144x128xbf16>, vector<128x128xbf16>, vector<144x128xf32> -> vector<144x128xf32>
    %69 = arith.addf %61, %68 : vector<144x128xf32>
    %c28 = arith.constant 28 : index
    %c0_50 = arith.constant 0 : index
    %70 = vector.load %arg8[%c28, %c0_50] : memref<176x128xf32, #tpu.memory_space<vmem>>, vector<144x128xf32>
    %71 = arith.truncf %70 : vector<144x128xf32> to vector<144x128xbf16>
    %c7 = arith.constant 7 : index
    %c0_51 = arith.constant 0 : index
    %c0_52 = arith.constant 0 : index
    %72 = vector.load %arg6[%c7, %c0_51, %c0_52] : memref<9x128x128xbf16, #tpu.memory_space<vmem>>, vector<1x128x128xbf16>
    %73 = vector.shape_cast %72 : vector<1x128x128xbf16> to vector<128x128xbf16>
    %cst_53 = arith.constant dense<0.000000e+00> : vector<144x128xf32>
    %74 = tpu.matmul %71, %73, %cst_53 {dimension_numbers = #tpu.dot_dimension_numbers<[1], [0], [0], [1], [0, 0, 1, 1], [], []>} : vector<144x128xbf16>, vector<128x128xbf16>, vector<144x128xf32> -> vector<144x128xf32>
    %75 = arith.addf %69, %74 : vector<144x128xf32>
    %c29 = arith.constant 29 : index
    %c0_54 = arith.constant 0 : index
    %76 = vector.load %arg8[%c29, %c0_54] : memref<176x128xf32, #tpu.memory_space<vmem>>, vector<144x128xf32>
    %77 = vector.broadcast %16 : vector<144x1xf32> to vector<144x128xf32>
    %78 = arith.mulf %76, %77 : vector<144x128xf32>
    %79 = arith.truncf %78 : vector<144x128xf32> to vector<144x128xbf16>
    %c8 = arith.constant 8 : index
    %c0_55 = arith.constant 0 : index
    %c0_56 = arith.constant 0 : index
    %80 = vector.load %arg6[%c8, %c0_55, %c0_56] : memref<9x128x128xbf16, #tpu.memory_space<vmem>>, vector<1x128x128xbf16>
    %81 = vector.shape_cast %80 : vector<1x128x128xbf16> to vector<128x128xbf16>
    %cst_57 = arith.constant dense<0.000000e+00> : vector<144x128xf32>
    %82 = tpu.matmul %79, %81, %cst_57 {dimension_numbers = #tpu.dot_dimension_numbers<[1], [0], [0], [1], [0, 0, 1, 1], [], []>} : vector<144x128xbf16>, vector<128x128xbf16>, vector<144x128xf32> -> vector<144x128xf32>
    %83 = arith.addf %75, %82 : vector<144x128xf32>
    %c0_58 = arith.constant 0 : index
    %c0_59 = arith.constant 0 : index
    %c0_60 = arith.constant 0 : index
    %84 = vector.load %arg7[%c0_58, %c0_59, %c0_60] : memref<1x144x128xf32, #tpu.memory_space<vmem>>, vector<1x144x128xf32>
    %85 = vector.shape_cast %84 : vector<1x144x128xf32> to vector<144x128xf32>
    %86 = vector.shape_cast %83 : vector<144x128xf32> to vector<1x144x128xf32>
    tpu.vector_store %arg7[%c0_58, %c0_59, %c0_60], %86 {strides = array<i32>} : memref<1x144x128xf32, #tpu.memory_space<vmem>>, vector<1x144x128xf32>,
    return
  }
  func.func @transform_0(%arg0: i32) -> (i32, i32, i32) {
    %c0_i32 = arith.constant 0 : i32
    %c0_i32_0 = arith.constant 0 : i32
    %c0_i32_1 = arith.constant 0 : i32
    return %arg0, %c0_i32, %c0_i32_0 : i32, i32, i32
  }
  func.func @transform_1(%arg0: i32) -> (i32, i32) {
    %c0_i32 = arith.constant 0 : i32
    %c0_i32_0 = arith.constant 0 : i32
    %c0_i32_1 = arith.constant 0 : i32
    return %c0_i32, %c0_i32_0 : i32, i32
  }
  func.func @transform_2(%arg0: i32) -> (i32, i32) {
    %c0_i32 = arith.constant 0 : i32
    %c0_i32_0 = arith.constant 0 : i32
    %c0_i32_1 = arith.constant 0 : i32
    return %c0_i32, %c0_i32_0 : i32, i32
  }
  func.func @transform_3(%arg0: i32) -> (i32, i32) {
    %c0_i32 = arith.constant 0 : i32
    %c0_i32_0 = arith.constant 0 : i32
    %c0_i32_1 = arith.constant 0 : i32
    return %c0_i32, %c0_i32_0 : i32, i32
  }
  func.func @transform_4(%arg0: i32) -> (i32, i32) {
    %c0_i32 = arith.constant 0 : i32
    %c0_i32_0 = arith.constant 0 : i32
    %c0_i32_1 = arith.constant 0 : i32
    return %c0_i32, %c0_i32_0 : i32, i32
  }
  func.func @transform_5(%arg0: i32) -> (i32, i32, i32) {
    %c0_i32 = arith.constant 0 : i32
    %c0_i32_0 = arith.constant 0 : i32
    %c0_i32_1 = arith.constant 0 : i32
    %c0_i32_2 = arith.constant 0 : i32
    return %c0_i32, %c0_i32_0, %c0_i32_1 : i32, i32, i32
  }
  func.func @transform_6(%arg0: i32) -> (i32, i32, i32) {
    %c0_i32 = arith.constant 0 : i32
    %c0_i32_0 = arith.constant 0 : i32
    %c0_i32_1 = arith.constant 0 : i32
    return %arg0, %c0_i32, %c0_i32_0 : i32, i32, i32
  }
}

module attributes {stable_mosaic.version = 11 : i64} {
  func.func @_bn_relu_mm_kernel(%arg0: i32, %arg1: memref<256x128xf32, #tpu.memory_space<vmem>>, %arg2: memref<1x128xf32, #tpu.memory_space<vmem>>, %arg3: memref<1x128xf32, #tpu.memory_space<vmem>>, %arg4: memref<128x128xbf16, #tpu.memory_space<vmem>>, %arg5: memref<256x128xf32, #tpu.memory_space<vmem>>) attributes {dimension_semantics = [#tpu.dimension_semantics<parallel>], iteration_bounds = array<i64: 1>, scalar_prefetch = 0 : i64, scratch_operands = 0 : i64, tpu.core_type = #tpu.core_type<tc>, window_params = [{transform_indices = @transform_0, window_bounds = array<i64: 256, 128>}, {pipeline_mode = #tpu.pipeline_mode<synchronous>, transform_indices = @transform_1, window_bounds = array<i64: 1, 128>}, {pipeline_mode = #tpu.pipeline_mode<synchronous>, transform_indices = @transform_2, window_bounds = array<i64: 1, 128>}, {pipeline_mode = #tpu.pipeline_mode<synchronous>, transform_indices = @transform_3, window_bounds = array<i64: 128, 128>}, {transform_indices = @transform_4, window_bounds = array<i64: 256, 128>}]} {
    %c0 = arith.constant 0 : index
    %c0_0 = arith.constant 0 : index
    %0 = vector.load %arg1[%c0, %c0_0] : memref<256x128xf32, #tpu.memory_space<vmem>>, vector<256x128xf32>
    %c0_1 = arith.constant 0 : index
    %c0_2 = arith.constant 0 : index
    %1 = vector.load %arg2[%c0_1, %c0_2] : memref<1x128xf32, #tpu.memory_space<vmem>>, vector<1x128xf32>
    %2 = vector.broadcast %1 : vector<1x128xf32> to vector<256x128xf32>
    %3 = arith.mulf %0, %2 : vector<256x128xf32>
    %c0_3 = arith.constant 0 : index
    %c0_4 = arith.constant 0 : index
    %4 = vector.load %arg3[%c0_3, %c0_4] : memref<1x128xf32, #tpu.memory_space<vmem>>, vector<1x128xf32>
    %5 = vector.broadcast %4 : vector<1x128xf32> to vector<256x128xf32>
    %6 = arith.addf %3, %5 : vector<256x128xf32>
    %cst = arith.constant 0.000000e+00 : f32
    %7 = vector.broadcast %cst : f32 to vector<256x128xf32>
    %8 = arith.maximumf %6, %7 : vector<256x128xf32>
    %9 = arith.truncf %8 : vector<256x128xf32> to vector<256x128xbf16>
    %c0_5 = arith.constant 0 : index
    %c0_6 = arith.constant 0 : index
    %10 = vector.load %arg4[%c0_5, %c0_6] : memref<128x128xbf16, #tpu.memory_space<vmem>>, vector<128x128xbf16>
    %cst_7 = arith.constant dense<0.000000e+00> : vector<256x128xf32>
    %11 = tpu.matmul %9, %10, %cst_7 {dimension_numbers = #tpu.dot_dimension_numbers<[1], [0], [0], [1], [0, 0, 1, 1], [], []>} : vector<256x128xbf16>, vector<128x128xbf16>, vector<256x128xf32> -> vector<256x128xf32>
    %c0_8 = arith.constant 0 : index
    %c0_9 = arith.constant 0 : index
    %12 = vector.load %arg5[%c0_8, %c0_9] : memref<256x128xf32, #tpu.memory_space<vmem>>, vector<256x128xf32>
    tpu.vector_store %arg5[%c0_8, %c0_9], %11 {strides = array<i32>} : memref<256x128xf32, #tpu.memory_space<vmem>>, vector<256x128xf32>,
    return
  }
  func.func @transform_0(%arg0: i32) -> (i32, i32) {
    %c0_i32 = arith.constant 0 : i32
    %c0_i32_0 = arith.constant 0 : i32
    return %arg0, %c0_i32 : i32, i32
  }
  func.func @transform_1(%arg0: i32) -> (i32, i32) {
    %c0_i32 = arith.constant 0 : i32
    %c0_i32_0 = arith.constant 0 : i32
    %c0_i32_1 = arith.constant 0 : i32
    return %c0_i32, %c0_i32_0 : i32, i32
  }
  func.func @transform_2(%arg0: i32) -> (i32, i32) {
    %c0_i32 = arith.constant 0 : i32
    %c0_i32_0 = arith.constant 0 : i32
    %c0_i32_1 = arith.constant 0 : i32
    return %c0_i32, %c0_i32_0 : i32, i32
  }
  func.func @transform_3(%arg0: i32) -> (i32, i32) {
    %c0_i32 = arith.constant 0 : i32
    %c0_i32_0 = arith.constant 0 : i32
    %c0_i32_1 = arith.constant 0 : i32
    return %c0_i32, %c0_i32_0 : i32, i32
  }
  func.func @transform_4(%arg0: i32) -> (i32, i32) {
    %c0_i32 = arith.constant 0 : i32
    %c0_i32_0 = arith.constant 0 : i32
    return %arg0, %c0_i32 : i32, i32
  }
}

module attributes {stable_mosaic.version = 11 : i64} {
  func.func @_bn_relu_mm_add_kernel(%arg0: i32, %arg1: memref<256x128xf32, #tpu.memory_space<vmem>>, %arg2: memref<1x128xf32, #tpu.memory_space<vmem>>, %arg3: memref<1x128xf32, #tpu.memory_space<vmem>>, %arg4: memref<128x128xbf16, #tpu.memory_space<vmem>>, %arg5: memref<256x128xf32, #tpu.memory_space<vmem>>, %arg6: memref<256x128xf32, #tpu.memory_space<vmem>>) attributes {dimension_semantics = [#tpu.dimension_semantics<parallel>], iteration_bounds = array<i64: 1>, scalar_prefetch = 0 : i64, scratch_operands = 0 : i64, tpu.core_type = #tpu.core_type<tc>, window_params = [{transform_indices = @transform_0, window_bounds = array<i64: 256, 128>}, {pipeline_mode = #tpu.pipeline_mode<synchronous>, transform_indices = @transform_1, window_bounds = array<i64: 1, 128>}, {pipeline_mode = #tpu.pipeline_mode<synchronous>, transform_indices = @transform_2, window_bounds = array<i64: 1, 128>}, {pipeline_mode = #tpu.pipeline_mode<synchronous>, transform_indices = @transform_3, window_bounds = array<i64: 128, 128>}, {transform_indices = @transform_4, window_bounds = array<i64: 256, 128>}, {transform_indices = @transform_5, window_bounds = array<i64: 256, 128>}]} {
    %c0 = arith.constant 0 : index
    %c0_0 = arith.constant 0 : index
    %0 = vector.load %arg1[%c0, %c0_0] : memref<256x128xf32, #tpu.memory_space<vmem>>, vector<256x128xf32>
    %c0_1 = arith.constant 0 : index
    %c0_2 = arith.constant 0 : index
    %1 = vector.load %arg2[%c0_1, %c0_2] : memref<1x128xf32, #tpu.memory_space<vmem>>, vector<1x128xf32>
    %2 = vector.broadcast %1 : vector<1x128xf32> to vector<256x128xf32>
    %3 = arith.mulf %0, %2 : vector<256x128xf32>
    %c0_3 = arith.constant 0 : index
    %c0_4 = arith.constant 0 : index
    %4 = vector.load %arg3[%c0_3, %c0_4] : memref<1x128xf32, #tpu.memory_space<vmem>>, vector<1x128xf32>
    %5 = vector.broadcast %4 : vector<1x128xf32> to vector<256x128xf32>
    %6 = arith.addf %3, %5 : vector<256x128xf32>
    %cst = arith.constant 0.000000e+00 : f32
    %7 = vector.broadcast %cst : f32 to vector<256x128xf32>
    %8 = arith.maximumf %6, %7 : vector<256x128xf32>
    %9 = arith.truncf %8 : vector<256x128xf32> to vector<256x128xbf16>
    %c0_5 = arith.constant 0 : index
    %c0_6 = arith.constant 0 : index
    %10 = vector.load %arg4[%c0_5, %c0_6] : memref<128x128xbf16, #tpu.memory_space<vmem>>, vector<128x128xbf16>
    %cst_7 = arith.constant dense<0.000000e+00> : vector<256x128xf32>
    %11 = tpu.matmul %9, %10, %cst_7 {dimension_numbers = #tpu.dot_dimension_numbers<[1], [0], [0], [1], [0, 0, 1, 1], [], []>} : vector<256x128xbf16>, vector<128x128xbf16>, vector<256x128xf32> -> vector<256x128xf32>
    %c0_8 = arith.constant 0 : index
    %c0_9 = arith.constant 0 : index
    %12 = vector.load %arg5[%c0_8, %c0_9] : memref<256x128xf32, #tpu.memory_space<vmem>>, vector<256x128xf32>
    %13 = arith.addf %11, %12 : vector<256x128xf32>
    %c0_10 = arith.constant 0 : index
    %c0_11 = arith.constant 0 : index
    %14 = vector.load %arg6[%c0_10, %c0_11] : memref<256x128xf32, #tpu.memory_space<vmem>>, vector<256x128xf32>
    tpu.vector_store %arg6[%c0_10, %c0_11], %13 {strides = array<i32>} : memref<256x128xf32, #tpu.memory_space<vmem>>, vector<256x128xf32>,
    return
  }
  func.func @transform_0(%arg0: i32) -> (i32, i32) {
    %c0_i32 = arith.constant 0 : i32
    %c0_i32_0 = arith.constant 0 : i32
    return %arg0, %c0_i32 : i32, i32
  }
  func.func @transform_1(%arg0: i32) -> (i32, i32) {
    %c0_i32 = arith.constant 0 : i32
    %c0_i32_0 = arith.constant 0 : i32
    %c0_i32_1 = arith.constant 0 : i32
    return %c0_i32, %c0_i32_0 : i32, i32
  }
  func.func @transform_2(%arg0: i32) -> (i32, i32) {
    %c0_i32 = arith.constant 0 : i32
    %c0_i32_0 = arith.constant 0 : i32
    %c0_i32_1 = arith.constant 0 : i32
    return %c0_i32, %c0_i32_0 : i32, i32
  }
  func.func @transform_3(%arg0: i32) -> (i32, i32) {
    %c0_i32 = arith.constant 0 : i32
    %c0_i32_0 = arith.constant 0 : i32
    %c0_i32_1 = arith.constant 0 : i32
    return %c0_i32, %c0_i32_0 : i32, i32
  }
  func.func @transform_4(%arg0: i32) -> (i32, i32) {
    %c0_i32 = arith.constant 0 : i32
    %c0_i32_0 = arith.constant 0 : i32
    return %arg0, %c0_i32 : i32, i32
  }
  func.func @transform_5(%arg0: i32) -> (i32, i32) {
    %c0_i32 = arith.constant 0 : i32
    %c0_i32_0 = arith.constant 0 : i32
    return %arg0, %c0_i32 : i32, i32
  }
}

</mosaic_0001>

<llo_original>
// kernel: preact_bottleneck_forward.4
$region0: #{preact_bottleneck_forward.4}
  #allocation0 [shape = 'u32[]', space=smem, size = 0x4, offset = 0x4, fixed_abs, tag = 'smem constant byte address 0x4 - core index']
  #allocation1 [shape = 'u32[72,128]{1,0:T(1,128)}', space=vmem, size = 0x9000, scoped, tag = 'internal scratch']
  %s0 = inlined_call_operand.vmem [shape: f32[512,128], index: 0, kind: input, shape index: {}]
  %s1 = inlined_call_operand.vmem [shape: f32[1,128], index: 1, kind: input, shape index: {}]
  %s2 = inlined_call_operand.vmem [shape: f32[1,128], index: 2, kind: input, shape index: {}]
  %s3 = inlined_call_operand.vmem [shape: bf16[128,128], index: 3, kind: input, shape index: {}]
  %s4 = inlined_call_operand.vmem [shape: f32[512,128], index: 4, kind: output, shape index: {0}]
  %s5 = inlined_call_operand.vmem [shape: f32[2,1,128], index: 5, kind: output, shape index: {1}]
  %s6 = inlined_call_operand.vmem [shape: f32[2,1,128], index: 6, kind: output, shape index: {2}]
  %7 = xla_tuple %s4, %s5, %s6
  %s8 = sld [smem:[#allocation0]]
  $region65: #{preact_bottleneck_forward.4} parent=0
    _
  %s10 = ssub.s32 1, %s8
  %s11 = scalar_select 0, %s10, %s8
  loop: start=0, step=1, limit=4
  $region2: #{preact_bottleneck_forward.4} parent=0 // loop_pre_header
    _
  $region3: #{preact_bottleneck_forward.4} parent=0 // loop_header
    %s13 = sphi 0, %s17
    %p14 = scmp.ge.s32.totalorder %s13, 4
    %s23 = sphi 0, %s25
    %s26 = sphi 0, %s23
    %s27 = sphi 0, %s26
    %s43 = sphi 0, %s27
    %s47 = sphi 0, %s47
    %s49 = sphi 0, %s47
    %s50 = sphi 0, %s49
    %s64 = sphi 0, %s50
    %s68 = sphi 0, %s68
    %s70 = sphi 0, %s68
    %s71 = sphi 0, %s70
    %s85 = sphi 0, %s71
    %s89 = sphi 0, %s89
    %s91 = sphi 0, %s89
    %s92 = sphi 0, %s91
    %s106 = sphi 0, %s92
    %s112 = sphi 0, %s114
    %s115 = sphi 0, %s112
    %s116 = sphi 0, %s115
    %s132 = sphi 0, %s116
    %s138 = sphi 0, %s140
    %s141 = sphi 0, %s138
    %s142 = sphi 0, %s141
    %s158 = sphi 0, %s142
    %s164 = sphi 0, %s166
    %s167 = sphi 0, %s164
    %s168 = sphi 0, %s167
    %s184 = sphi 0, %s168
  $region4: #{preact_bottleneck_forward.4} parent=0 // loop_header_branch
    %16 = sbr.rel (%p14) target = $region8
  $region5: #{preact_bottleneck_forward.4} parent=0 // loop_body
    %s18 = ssub.s32 %s13, 1
    %s19 = ssub.s32 %s13, 2
    %s20 = sadd.s32 %s13, 1
    %s21 = ssub.s32 %s13, %s20
    %p22 = scmp.eq.s32.totalorder %s21, 0
    %s24 = sadd.s32 %s23, 1
    %s25 = scalar_select %p22, %s23, %s24
    %p28 = pneg %p22
    %p29 = scmp.eq.s32.totalorder %s13, 1
    %p30 = por %p28, %p29
    %p31 = scmp.ne.s32.totalorder %s23, %s26
    %p32 = scmp.eq.s32.totalorder %s13, 0
    %p33 = por %p31, %p32
    %p34 = scmp.ne.s32.totalorder %s23, %s26
    %p35 = scmp.eq.s32.totalorder %s18, 1
    %p36 = por %p34, %p35
    %p37 = scmp.ne.s32.totalorder %s26, %s27
    %p38 = scmp.eq.s32.totalorder %s18, 0
    %p39 = por %p37, %p38
    %p40 = scmp.ne.s32.totalorder %s26, %s27
    %p41 = scmp.eq.s32.totalorder %s19, 1
    %p42 = por %p40, %p41
    %p44 = scmp.ne.s32.totalorder %s27, %s43
    %p45 = scmp.eq.s32.totalorder %s19, 0
    %p46 = por %p44, %p45
    %s48 = sadd.s32 %s47, 1
    %p51 = scmp.eq.s32.totalorder %s13, 1
    %p52 = scmp.ne.s32.totalorder %s47, %s49
    %p53 = scmp.eq.s32.totalorder %s13, 0
    %p54 = por %p52, %p53
    %p55 = scmp.ne.s32.totalorder %s47, %s49
    %p56 = scmp.eq.s32.totalorder %s18, 1
    %p57 = por %p55, %p56
    %p58 = scmp.ne.s32.totalorder %s49, %s50
    %p59 = scmp.eq.s32.totalorder %s18, 0
    %p60 = por %p58, %p59
    %p61 = scmp.ne.s32.totalorder %s49, %s50
    %p62 = scmp.eq.s32.totalorder %s19, 1
    %p63 = por %p61, %p62
    %p65 = scmp.ne.s32.totalorder %s50, %s64
    %p66 = scmp.eq.s32.totalorder %s19, 0
    %p67 = por %p65, %p66
    %s69 = sadd.s32 %s68, 1
    %p72 = scmp.eq.s32.totalorder %s13, 1
    %p73 = scmp.ne.s32.totalorder %s68, %s70
    %p74 = scmp.eq.s32.totalorder %s13, 0
    %p75 = por %p73, %p74
    %p76 = scmp.ne.s32.totalorder %s68, %s70
    %p77 = scmp.eq.s32.totalorder %s18, 1
    %p78 = por %p76, %p77
    %p79 = scmp.ne.s32.totalorder %s70, %s71
    %p80 = scmp.eq.s32.totalorder %s18, 0
    %p81 = por %p79, %p80
    %p82 = scmp.ne.s32.totalorder %s70, %s71
    %p83 = scmp.eq.s32.totalorder %s19, 1
    %p84 = por %p82, %p83
    %p86 = scmp.ne.s32.totalorder %s71, %s85
    %p87 = scmp.eq.s32.totalorder %s19, 0
    %p88 = por %p86, %p87
    %s90 = sadd.s32 %s89, 1
    %p93 = scmp.eq.s32.totalorder %s13, 1
    %p94 = scmp.ne.s32.totalorder %s89, %s91
    %p95 = scmp.eq.s32.totalorder %s13, 0
    %p96 = por %p94, %p95
    %p97 = scmp.ne.s32.totalorder %s89, %s91
    %p98 = scmp.eq.s32.totalorder %s18, 1
    %p99 = por %p97, %p98
    %p100 = scmp.ne.s32.totalorder %s91, %s92
    %p101 = scmp.eq.s32.totalorder %s18, 0
    %p102 = por %p100, %p101
    %p103 = scmp.ne.s32.totalorder %s91, %s92
    %p104 = scmp.eq.s32.totalorder %s19, 1
    %p105 = por %p103, %p104
    %p107 = scmp.ne.s32.totalorder %s92, %s106
    %p108 = scmp.eq.s32.totalorder %s19, 0
    %p109 = por %p107, %p108
    %s110 = ssub.s32 %s13, %s20
    %p111 = scmp.eq.s32.totalorder %s110, 0
    %s113 = sadd.s32 %s112, 1
    %s114 = scalar_select %p111, %s112, %s113
    %p117 = pneg %p111
    %p118 = scmp.eq.s32.totalorder %s13, 1
    %p119 = por %p117, %p118
    %p120 = scmp.ne.s32.totalorder %s112, %s115
    %p121 = scmp.eq.s32.totalorder %s13, 0
    %p122 = por %p120, %p121
    %p123 = scmp.ne.s32.totalorder %s112, %s115
    %p124 = scmp.eq.s32.totalorder %s18, 1
    %p125 = por %p123, %p124
    %p126 = scmp.ne.s32.totalorder %s115, %s116
    %p127 = scmp.eq.s32.totalorder %s18, 0
    %p128 = por %p126, %p127
    %p129 = scmp.ne.s32.totalorder %s115, %s116
    %p130 = scmp.eq.s32.totalorder %s19, 1
    %p131 = por %p129, %p130
    %p133 = scmp.ne.s32.totalorder %s116, %s132
    %p134 = scmp.eq.s32.totalorder %s19, 0
    %p135 = por %p133, %p134
    %s136 = ssub.s32 %s13, %s20
    %p137 = scmp.eq.s32.totalorder %s136, 0
    %s139 = sadd.s32 %s138, 1
    %s140 = scalar_select %p137, %s138, %s139
    %p143 = pneg %p137
    %p144 = scmp.eq.s32.totalorder %s13, 1
    %p145 = por %p143, %p144
    %p146 = scmp.ne.s32.totalorder %s138, %s141
    %p147 = scmp.eq.s32.totalorder %s13, 0
    %p148 = por %p146, %p147
    %p149 = scmp.ne.s32.totalorder %s138, %s141
    %p150 = scmp.eq.s32.totalorder %s18, 1
    %p151 = por %p149, %p150
    %p152 = scmp.ne.s32.totalorder %s141, %s142
    %p153 = scmp.eq.s32.totalorder %s18, 0
    %p154 = por %p152, %p153
    %p155 = scmp.ne.s32.totalorder %s141, %s142
    %p156 = scmp.eq.s32.totalorder %s19, 1
    %p157 = por %p155, %p156
    %p159 = scmp.ne.s32.totalorder %s142, %s158
    %p160 = scmp.eq.s32.totalorder %s19, 0
    %p161 = por %p159, %p160
    %s162 = ssub.s32 %s13, %s20
    %p163 = scmp.eq.s32.totalorder %s162, 0
    %s165 = sadd.s32 %s164, 1
    %s166 = scalar_select %p163, %s164, %s165
    %p169 = pneg %p163
    %p170 = scmp.eq.s32.totalorder %s13, 1
    %p171 = por %p169, %p170
    %p172 = scmp.ne.s32.totalorder %s164, %s167
    %p173 = scmp.eq.s32.totalorder %s13, 0
    %p174 = por %p172, %p173
    %p175 = scmp.ne.s32.totalorder %s164, %s167
    %p176 = scmp.eq.s32.totalorder %s18, 1
    %p177 = por %p175, %p176
    %p178 = scmp.ne.s32.totalorder %s167, %s168
    %p179 = scmp.eq.s32.totalorder %s18, 0
    %p180 = por %p178, %p179
    %p181 = scmp.ne.s32.totalorder %s167, %s168
    %p182 = scmp.eq.s32.totalorder %s19, 1
    %p183 = por %p181, %p182
    %p185 = scmp.ne.s32.totalorder %s168, %s184
    %p186 = scmp.eq.s32.totalorder %s19, 0
    %p187 = por %p185, %p186
    %p188 = scmp.le.s32.totalorder 1, %s13
    %p189 = scmp.lt.s32.totalorder %s13, 3
    %p190 = pnand %p188, %p189
    %p191 = pneg %p190
    // Predicated region
    $region9: #{preact_bottleneck_forward.4} parent=5 // pred_check
      _
    $region10: #{preact_bottleneck_forward.4} parent=5 // pred_check_branch
      %193 = sbr.rel (%p190) target = $region12
    $region11: #{preact_bottleneck_forward.4} parent=5 // pred_region
      %s194 = ssub.s32 %s13, 1
      // Predicated region
      $region13: #{preact_bottleneck_forward.4} parent=11 // pred_check
        %p195 = pneg %p60
      $region14: #{preact_bottleneck_forward.4} parent=11 // pred_check_branch
        %197 = sbr.rel (%p195) target = $region16
      $region15: #{preact_bottleneck_forward.4} parent=11 // pred_region
        _
      $region16: #{preact_bottleneck_forward.4} parent=11 // pred_fallthru
        _
      // Predicated region
      $region17: #{preact_bottleneck_forward.4} parent=11 // pred_check
        %p198 = pneg %p81
      $region18: #{preact_bottleneck_forward.4} parent=11 // pred_check_branch
        %200 = sbr.rel (%p198) target = $region20
      $region19: #{preact_bottleneck_forward.4} parent=11 // pred_region
        _
      $region20: #{preact_bottleneck_forward.4} parent=11 // pred_fallthru
        _
      // Predicated region
      $region21: #{preact_bottleneck_forward.4} parent=11 // pred_check
        %p201 = pneg %p102
      $region22: #{preact_bottleneck_forward.4} parent=11 // pred_check_branch
        %203 = sbr.rel (%p201) target = $region24
      $region23: #{preact_bottleneck_forward.4} parent=11 // pred_region
        _
      $region24: #{preact_bottleneck_forward.4} parent=11 // pred_fallthru
        _
    $region12: #{preact_bottleneck_forward.4} parent=5 // pred_fallthru
      _
    %p204 = scmp.lt.s32.totalorder %s13, 2
    // Predicated region
    $region25: #{preact_bottleneck_forward.4} parent=5 // pred_check
      %p205 = pneg %p204
    $region26: #{preact_bottleneck_forward.4} parent=5 // pred_check_branch
      %207 = sbr.rel (%p205) target = $region28
    $region27: #{preact_bottleneck_forward.4} parent=5 // pred_region
      // Predicated region
      $region29: #{preact_bottleneck_forward.4} parent=27 // pred_check
        %p208 = pneg %p33
      $region30: #{preact_bottleneck_forward.4} parent=27 // pred_check_branch
        %210 = sbr.rel (%p208) target = $region32
      $region31: #{preact_bottleneck_forward.4} parent=27 // pred_region
        %s211 = smul.u32 32, %s13
        %p212 = scmp.lt.s32.totalorder %s211, 63
        %s213 = scalar_select %p212, %s211, 63
        %s214 = smul.addr %s213, 8
        %s215 = scalar_lea.vmem %s0, %s214
        %s216 = smul.u32 32, %s13
      $region32: #{preact_bottleneck_forward.4} parent=27 // pred_fallthru
        _
    $region28: #{preact_bottleneck_forward.4} parent=5 // pred_fallthru
      _
    %p217 = scmp.le.s32.totalorder 1, %s13
    %p218 = scmp.lt.s32.totalorder %s13, 3
    %p219 = pnand %p217, %p218
    %p220 = pneg %p219
    // Predicated region
    $region33: #{preact_bottleneck_forward.4} parent=5 // pred_check
      _
    $region34: #{preact_bottleneck_forward.4} parent=5 // pred_check_branch
      %222 = sbr.rel (%p219) target = $region36
    $region35: #{preact_bottleneck_forward.4} parent=5 // pred_region
      %s223 = ssub.s32 %s13, 1
      %s224 = smul.u32 32, %s18
      %p225 = scmp.lt.s32.totalorder %s224, 63
      %s226 = scalar_select %p225, %s224, 63
      %s227 = smul.addr %s226, 8
      %s228 = scalar_lea.vmem %s0, %s227
      %p229 = pneg %p39
      %p230 = pneg %p36
      %p231 = pneg %p60
      %p232 = pneg %p57
      %p233 = pneg %p81
      %p234 = pneg %p78
      %p235 = pneg %p102
      %p236 = pneg %p99
      %p237 = pneg %p128
      %p238 = pneg %p125
      %s239 = smul.u32 32, %s18
      %p240 = scmp.lt.s32.totalorder %s239, 63
      %s241 = scalar_select %p240, %s239, 63
      %s242 = smul.addr %s241, 8
      %s243 = scalar_lea.vmem %s4, %s242
      %p244 = pneg %p154
      %p245 = pneg %p151
      %p246 = scmp.lt.s32.totalorder %s18, 1
      %s247 = scalar_select %p246, %s18, 1
      %s248 = scalar_lea.vmem %s5, %s247
      %p249 = pneg %p180
      %p250 = pneg %p177
      %p251 = scmp.lt.s32.totalorder %s18, 1
      %s252 = scalar_select %p251, %s18, 1
      %s253 = scalar_lea.vmem %s6, %s252
      %s254 = smul.u32 32, %s18
      %p255 = scmp.lt.s32.totalorder %s254, 63
      %s256 = scalar_select %p255, %s254, 63
      %s257 = smul.addr %s256, 8
      %s258 = scalar_lea.vmem %s0, %s257
      %s259 = smul.u32 32, %s18
      %s260 = smul.u32 32, %s18
      %p261 = scmp.lt.s32.totalorder %s260, 63
      %s262 = scalar_select %p261, %s260, 63
      %s263 = smul.addr %s262, 8
      %s264 = scalar_lea.vmem %s4, %s263
      %s265 = smul.u32 32, %s18
      %p266 = scmp.lt.s32.totalorder %s18, 1
      %s267 = scalar_select %p266, %s18, 1
      %s268 = scalar_lea.vmem %s5, %s267
      %p269 = scmp.lt.s32.totalorder %s18, 1
      %s270 = scalar_select %p269, %s18, 1
      %s271 = scalar_lea.vmem %s6, %s270
      %v272 = vld [vmem:[%s258] sm:$0xff]
      %v273 = vld [vmem:[%s258 + $0x8] sm:$0xff]
      %v274 = vld [vmem:[%s258 + $0x10] sm:$0xff]
      %v275 = vld [vmem:[%s258 + $0x18] sm:$0xff]
      %v276 = vld [vmem:[%s258 + $0x20] sm:$0xff]
      %v277 = vld [vmem:[%s258 + $0x28] sm:$0xff]
      %v278 = vld [vmem:[%s258 + $0x30] sm:$0xff]
      %v279 = vld [vmem:[%s258 + $0x38] sm:$0xff]
      %v280 = vld [vmem:[%s258 + $0x40] sm:$0xff]
      %v281 = vld [vmem:[%s258 + $0x48] sm:$0xff]
      %v282 = vld [vmem:[%s258 + $0x50] sm:$0xff]
      %v283 = vld [vmem:[%s258 + $0x58] sm:$0xff]
      %v284 = vld [vmem:[%s258 + $0x60] sm:$0xff]
      %v285 = vld [vmem:[%s258 + $0x68] sm:$0xff]
      %v286 = vld [vmem:[%s258 + $0x70] sm:$0xff]
      %v287 = vld [vmem:[%s258 + $0x78] sm:$0xff]
      %v288 = vld [vmem:[%s258 + $0x80] sm:$0xff]
      %v289 = vld [vmem:[%s258 + $0x88] sm:$0xff]
      %v290 = vld [vmem:[%s258 + $0x90] sm:$0xff]
      %v291 = vld [vmem:[%s258 + $0x98] sm:$0xff]
      %v292 = vld [vmem:[%s258 + $0xa0] sm:$0xff]
      %v293 = vld [vmem:[%s258 + $0xa8] sm:$0xff]
      %v294 = vld [vmem:[%s258 + $0xb0] sm:$0xff]
      %v295 = vld [vmem:[%s258 + $0xb8] sm:$0xff]
      %v296 = vld [vmem:[%s258 + $0xc0] sm:$0xff]
      %v297 = vld [vmem:[%s258 + $0xc8] sm:$0xff]
      %v298 = vld [vmem:[%s258 + $0xd0] sm:$0xff]
      %v299 = vld [vmem:[%s258 + $0xd8] sm:$0xff]
      %v300 = vld [vmem:[%s258 + $0xe0] sm:$0xff]
      %v301 = vld [vmem:[%s258 + $0xe8] sm:$0xff]
      %v302 = vld [vmem:[%s258 + $0xf0] sm:$0xff]
      %v303 = vld [vmem:[%s258 + $0xf8] sm:$0xff]
      %v304 = vld [vmem:[%s1] sm:$0x1]
      %v306 = vperm.slane %v304, 0
      %v308 = vmul.f32 %v272, %v306
      %v309 = vmul.f32 %v273, %v306
      %v310 = vmul.f32 %v274, %v306
      %v311 = vmul.f32 %v275, %v306
      %v312 = vmul.f32 %v276, %v306
      %v313 = vmul.f32 %v277, %v306
      %v314 = vmul.f32 %v278, %v306
      %v315 = vmul.f32 %v279, %v306
      %v316 = vmul.f32 %v280, %v306
      %v317 = vmul.f32 %v281, %v306
      %v318 = vmul.f32 %v282, %v306
      %v319 = vmul.f32 %v283, %v306
      %v320 = vmul.f32 %v284, %v306
      %v321 = vmul.f32 %v285, %v306
      %v322 = vmul.f32 %v286, %v306
      %v323 = vmul.f32 %v287, %v306
      %v324 = vmul.f32 %v288, %v306
      %v325 = vmul.f32 %v289, %v306
      %v326 = vmul.f32 %v290, %v306
      %v327 = vmul.f32 %v291, %v306
      %v328 = vmul.f32 %v292, %v306
      %v329 = vmul.f32 %v293, %v306
      %v330 = vmul.f32 %v294, %v306
      %v331 = vmul.f32 %v295, %v306
      %v332 = vmul.f32 %v296, %v306
      %v333 = vmul.f32 %v297, %v306
      %v334 = vmul.f32 %v298, %v306
      %v335 = vmul.f32 %v299, %v306
      %v336 = vmul.f32 %v300, %v306
      %v337 = vmul.f32 %v301, %v306
      %v338 = vmul.f32 %v302, %v306
      %v339 = vmul.f32 %v303, %v306
      %v340 = vld [vmem:[%s2] sm:$0x1]
      %v342 = vperm.slane %v340, 0
      %v344 = vadd.f32 %v308, %v342
      %v345 = vadd.f32 %v309, %v342
      %v346 = vadd.f32 %v310, %v342
      %v347 = vadd.f32 %v311, %v342
      %v348 = vadd.f32 %v312, %v342
      %v349 = vadd.f32 %v313, %v342
      %v350 = vadd.f32 %v314, %v342
      %v351 = vadd.f32 %v315, %v342
      %v352 = vadd.f32 %v316, %v342
      %v353 = vadd.f32 %v317, %v342
      %v354 = vadd.f32 %v318, %v342
      %v355 = vadd.f32 %v319, %v342
      %v356 = vadd.f32 %v320, %v342
      %v357 = vadd.f32 %v321, %v342
      %v358 = vadd.f32 %v322, %v342
      %v359 = vadd.f32 %v323, %v342
      %v360 = vadd.f32 %v324, %v342
      %v361 = vadd.f32 %v325, %v342
      %v362 = vadd.f32 %v326, %v342
      %v363 = vadd.f32 %v327, %v342
      %v364 = vadd.f32 %v328, %v342
      %v365 = vadd.f32 %v329, %v342
      %v366 = vadd.f32 %v330, %v342
      %v367 = vadd.f32 %v331, %v342
      %v368 = vadd.f32 %v332, %v342
      %v369 = vadd.f32 %v333, %v342
      %v370 = vadd.f32 %v334, %v342
      %v371 = vadd.f32 %v335, %v342
      %v372 = vadd.f32 %v336, %v342
      %v373 = vadd.f32 %v337, %v342
      %v374 = vadd.f32 %v338, %v342
      %v375 = vadd.f32 %v339, %v342
      %v376 = vmax.f32 %v344, 0.0
      %v377 = vmax.f32 %v345, 0.0
      %v378 = vmax.f32 %v346, 0.0
      %v379 = vmax.f32 %v347, 0.0
      %v380 = vmax.f32 %v348, 0.0
      %v381 = vmax.f32 %v349, 0.0
      %v382 = vmax.f32 %v350, 0.0
      %v383 = vmax.f32 %v351, 0.0
      %v384 = vmax.f32 %v352, 0.0
      %v385 = vmax.f32 %v353, 0.0
      %v386 = vmax.f32 %v354, 0.0
      %v387 = vmax.f32 %v355, 0.0
      %v388 = vmax.f32 %v356, 0.0
      %v389 = vmax.f32 %v357, 0.0
      %v390 = vmax.f32 %v358, 0.0
      %v391 = vmax.f32 %v359, 0.0
      %v392 = vmax.f32 %v360, 0.0
      %v393 = vmax.f32 %v361, 0.0
      %v394 = vmax.f32 %v362, 0.0
      %v395 = vmax.f32 %v363, 0.0
      %v396 = vmax.f32 %v364, 0.0
      %v397 = vmax.f32 %v365, 0.0
      %v398 = vmax.f32 %v366, 0.0
      %v399 = vmax.f32 %v367, 0.0
      %v400 = vmax.f32 %v368, 0.0
      %v401 = vmax.f32 %v369, 0.0
      %v402 = vmax.f32 %v370, 0.0
      %v403 = vmax.f32 %v371, 0.0
      %v404 = vmax.f32 %v372, 0.0
      %v405 = vmax.f32 %v373, 0.0
      %v406 = vmax.f32 %v374, 0.0
      %v407 = vmax.f32 %v375, 0.0
      %v408 = vlaneseq
      %v409 = vshrl.u32 %v408, 7
      %v410 = vadd.s32 %v409, 8
      %v411 = vadd.s32 %v409, 16
      %v412 = vadd.s32 %v409, 24
      %v413 = vadd.s32 %v409, 32
      %v414 = vadd.s32 %v409, 40
      %v415 = vadd.s32 %v409, 48
      %v416 = vadd.s32 %v409, 56
      %v417 = vadd.s32 %v409, 64
      %v418 = vadd.s32 %v409, 72
      %v419 = vadd.s32 %v409, 80
      %v420 = vadd.s32 %v409, 88
      %v421 = vadd.s32 %v409, 96
      %v422 = vadd.s32 %v409, 104
      %v423 = vadd.s32 %v409, 112
      %v424 = vadd.s32 %v409, 120
      %v425 = vadd.s32 %v409, 128
      %v426 = vadd.s32 %v409, 136
      %v427 = vadd.s32 %v409, 144
      %v428 = vadd.s32 %v409, 152
      %v429 = vadd.s32 %v409, 160
      %v430 = vadd.s32 %v409, 168
      %v431 = vadd.s32 %v409, 176
      %v432 = vadd.s32 %v409, 184
      %v433 = vadd.s32 %v409, 192
      %v434 = vadd.s32 %v409, 200
      %v435 = vadd.s32 %v409, 208
      %v436 = vadd.s32 %v409, 216
      %v437 = vadd.s32 %v409, 224
      %v438 = vadd.s32 %v409, 232
      %v439 = vadd.s32 %v409, 240
      %v440 = vadd.s32 %v409, 248
      %s441 = smul.u32 %s18, 256
      %v442 = vstv %s441
      %v443 = vadd.s32 %v409, %v442
      %v444 = vadd.s32 %v410, %v442
      %v445 = vadd.s32 %v411, %v442
      %v446 = vadd.s32 %v412, %v442
      %v447 = vadd.s32 %v413, %v442
      %v448 = vadd.s32 %v414, %v442
      %v449 = vadd.s32 %v415, %v442
      %v450 = vadd.s32 %v416, %v442
      %v451 = vadd.s32 %v417, %v442
      %v452 = vadd.s32 %v418, %v442
      %v453 = vadd.s32 %v419, %v442
      %v454 = vadd.s32 %v420, %v442
      %v455 = vadd.s32 %v421, %v442
      %v456 = vadd.s32 %v422, %v442
      %v457 = vadd.s32 %v423, %v442
      %v458 = vadd.s32 %v424, %v442
      %v459 = vadd.s32 %v425, %v442
      %v460 = vadd.s32 %v426, %v442
      %v461 = vadd.s32 %v427, %v442
      %v462 = vadd.s32 %v428, %v442
      %v463 = vadd.s32 %v429, %v442
      %v464 = vadd.s32 %v430, %v442
      %v465 = vadd.s32 %v431, %v442
      %v466 = vadd.s32 %v432, %v442
      %v467 = vadd.s32 %v433, %v442
      %v468 = vadd.s32 %v434, %v442
      %v469 = vadd.s32 %v435, %v442
      %v470 = vadd.s32 %v436, %v442
      %v471 = vadd.s32 %v437, %v442
      %v472 = vadd.s32 %v438, %v442
      %v473 = vadd.s32 %v439, %v442
      %v474 = vadd.s32 %v440, %v442
      %vm475 = vcmp.lt.s32.totalorder %v443, 288
      %vm476 = vcmp.lt.s32.totalorder %v444, 288
      %vm477 = vcmp.lt.s32.totalorder %v445, 288
      %vm478 = vcmp.lt.s32.totalorder %v446, 288
      %vm479 = vcmp.lt.s32.totalorder %v447, 288
      %vm480 = vcmp.lt.s32.totalorder %v448, 288
      %vm481 = vcmp.lt.s32.totalorder %v449, 288
      %vm482 = vcmp.lt.s32.totalorder %v450, 288
      %vm483 = vcmp.lt.s32.totalorder %v451, 288
      %vm484 = vcmp.lt.s32.totalorder %v452, 288
      %vm485 = vcmp.lt.s32.totalorder %v453, 288
      %vm486 = vcmp.lt.s32.totalorder %v454, 288
      %vm487 = vcmp.lt.s32.totalorder %v455, 288
      %vm488 = vcmp.lt.s32.totalorder %v456, 288
      %vm489 = vcmp.lt.s32.totalorder %v457, 288
      %vm490 = vcmp.lt.s32.totalorder %v458, 288
      %vm491 = vcmp.lt.s32.totalorder %v459, 288
      %vm492 = vcmp.lt.s32.totalorder %v460, 288
      %vm493 = vcmp.lt.s32.totalorder %v461, 288
      %vm494 = vcmp.lt.s32.totalorder %v462, 288
      %vm495 = vcmp.lt.s32.totalorder %v463, 288
      %vm496 = vcmp.lt.s32.totalorder %v464, 288
      %vm497 = vcmp.lt.s32.totalorder %v465, 288
      %vm498 = vcmp.lt.s32.totalorder %v466, 288
      %vm499 = vcmp.lt.s32.totalorder %v467, 288
      %vm500 = vcmp.lt.s32.totalorder %v468, 288
      %vm501 = vcmp.lt.s32.totalorder %v469, 288
      %vm502 = vcmp.lt.s32.totalorder %v470, 288
      %vm503 = vcmp.lt.s32.totalorder %v471, 288
      %vm504 = vcmp.lt.s32.totalorder %v472, 288
      %vm505 = vcmp.lt.s32.totalorder %v473, 288
      %vm506 = vcmp.lt.s32.totalorder %v474, 288
      %v507 = vsel %vm475, 1, 0
      %v508 = vsel %vm476, 1, 0
      %v509 = vsel %vm477, 1, 0
      %v510 = vsel %vm478, 1, 0
      %v511 = vsel %vm479, 1, 0
      %v512 = vsel %vm480, 1, 0
      %v513 = vsel %vm481, 1, 0
      %v514 = vsel %vm482, 1, 0
      %v515 = vsel %vm483, 1, 0
      %v516 = vsel %vm484, 1, 0
      %v517 = vsel %vm485, 1, 0
      %v518 = vsel %vm486, 1, 0
      %v519 = vsel %vm487, 1, 0
      %v520 = vsel %vm488, 1, 0
      %v521 = vsel %vm489, 1, 0
      %v522 = vsel %vm490, 1, 0
      %v523 = vsel %vm491, 1, 0
      %v524 = vsel %vm492, 1, 0
      %v525 = vsel %vm493, 1, 0
      %v526 = vsel %vm494, 1, 0
      %v527 = vsel %vm495, 1, 0
      %v528 = vsel %vm496, 1, 0
      %v529 = vsel %vm497, 1, 0
      %v530 = vsel %vm498, 1, 0
      %v531 = vsel %vm499, 1, 0
      %v532 = vsel %vm500, 1, 0
      %v533 = vsel %vm501, 1, 0
      %v534 = vsel %vm502, 1, 0
      %v535 = vsel %vm503, 1, 0
      %v536 = vsel %vm504, 1, 0
      %v537 = vsel %vm505, 1, 0
      %v538 = vsel %vm506, 1, 0
      %vm539 = vcmp.eq.s32.totalorder %v507, 1
      %vm540 = vcmp.eq.s32.totalorder %v508, 1
      %vm541 = vcmp.eq.s32.totalorder %v509, 1
      %vm542 = vcmp.eq.s32.totalorder %v510, 1
      %vm543 = vcmp.eq.s32.totalorder %v511, 1
      %vm544 = vcmp.eq.s32.totalorder %v512, 1
      %vm545 = vcmp.eq.s32.totalorder %v513, 1
      %vm546 = vcmp.eq.s32.totalorder %v514, 1
      %vm547 = vcmp.eq.s32.totalorder %v515, 1
      %vm548 = vcmp.eq.s32.totalorder %v516, 1
      %vm549 = vcmp.eq.s32.totalorder %v517, 1
      %vm550 = vcmp.eq.s32.totalorder %v518, 1
      %vm551 = vcmp.eq.s32.totalorder %v519, 1
      %vm552 = vcmp.eq.s32.totalorder %v520, 1
      %vm553 = vcmp.eq.s32.totalorder %v521, 1
      %vm554 = vcmp.eq.s32.totalorder %v522, 1
      %vm555 = vcmp.eq.s32.totalorder %v523, 1
      %vm556 = vcmp.eq.s32.totalorder %v524, 1
      %vm557 = vcmp.eq.s32.totalorder %v525, 1
      %vm558 = vcmp.eq.s32.totalorder %v526, 1
      %vm559 = vcmp.eq.s32.totalorder %v527, 1
      %vm560 = vcmp.eq.s32.totalorder %v528, 1
      %vm561 = vcmp.eq.s32.totalorder %v529, 1
      %vm562 = vcmp.eq.s32.totalorder %v530, 1
      %vm563 = vcmp.eq.s32.totalorder %v531, 1
      %vm564 = vcmp.eq.s32.totalorder %v532, 1
      %vm565 = vcmp.eq.s32.totalorder %v533, 1
      %vm566 = vcmp.eq.s32.totalorder %v534, 1
      %vm567 = vcmp.eq.s32.totalorder %v535, 1
      %vm568 = vcmp.eq.s32.totalorder %v536, 1
      %vm569 = vcmp.eq.s32.totalorder %v537, 1
      %vm570 = vcmp.eq.s32.totalorder %v538, 1
      %v571 = vsel %vm539, %v376, 0.0
      %v572 = vsel %vm540, %v377, 0.0
      %v573 = vsel %vm541, %v378, 0.0
      %v574 = vsel %vm542, %v379, 0.0
      %v575 = vsel %vm543, %v380, 0.0
      %v576 = vsel %vm544, %v381, 0.0
      %v577 = vsel %vm545, %v382, 0.0
      %v578 = vsel %vm546, %v383, 0.0
      %v579 = vsel %vm547, %v384, 0.0
      %v580 = vsel %vm548, %v385, 0.0
      %v581 = vsel %vm549, %v386, 0.0
      %v582 = vsel %vm550, %v387, 0.0
      %v583 = vsel %vm551, %v388, 0.0
      %v584 = vsel %vm552, %v389, 0.0
      %v585 = vsel %vm553, %v390, 0.0
      %v586 = vsel %vm554, %v391, 0.0
      %v587 = vsel %vm555, %v392, 0.0
      %v588 = vsel %vm556, %v393, 0.0
      %v589 = vsel %vm557, %v394, 0.0
      %v590 = vsel %vm558, %v395, 0.0
      %v591 = vsel %vm559, %v396, 0.0
      %v592 = vsel %vm560, %v397, 0.0
      %v593 = vsel %vm561, %v398, 0.0
      %v594 = vsel %vm562, %v399, 0.0
      %v595 = vsel %vm563, %v400, 0.0
      %v596 = vsel %vm564, %v401, 0.0
      %v597 = vsel %vm565, %v402, 0.0
      %v598 = vsel %vm566, %v403, 0.0
      %v599 = vsel %vm567, %v404, 0.0
      %v600 = vsel %vm568, %v405, 0.0
      %v601 = vsel %vm569, %v406, 0.0
      %v602 = vsel %vm570, %v407, 0.0
      %v603 = vpack.c.bf16 %v572, %v571
      %v604 = vpack.c.bf16 %v574, %v573
      %v605 = vpack.c.bf16 %v576, %v575
      %v606 = vpack.c.bf16 %v578, %v577
      %v607 = vpack.c.bf16 %v580, %v579
      %v608 = vpack.c.bf16 %v582, %v581
      %v609 = vpack.c.bf16 %v584, %v583
      %v610 = vpack.c.bf16 %v586, %v585
      %v611 = vpack.c.bf16 %v588, %v587
      %v612 = vpack.c.bf16 %v590, %v589
      %v613 = vpack.c.bf16 %v592, %v591
      %v614 = vpack.c.bf16 %v594, %v593
      %v615 = vpack.c.bf16 %v596, %v595
      %v616 = vpack.c.bf16 %v598, %v597
      %v617 = vpack.c.bf16 %v600, %v599
      %v618 = vpack.c.bf16 %v602, %v601
      %v619 = vld [vmem:[%s3] sm:$0xf]
      %v620 = vld [vmem:[%s3 + $0x4] sm:$0xf]
      %v621 = vld [vmem:[%s3 + $0x8] sm:$0xf]
      %v622 = vld [vmem:[%s3 + $0xc] sm:$0xf]
      %v623 = vld [vmem:[%s3 + $0x10] sm:$0xf]
      %v624 = vld [vmem:[%s3 + $0x14] sm:$0xf]
      %v625 = vld [vmem:[%s3 + $0x18] sm:$0xf]
      %v626 = vld [vmem:[%s3 + $0x1c] sm:$0xf]
      %v627 = vld [vmem:[%s3 + $0x20] sm:$0xf]
      %v628 = vld [vmem:[%s3 + $0x24] sm:$0xf]
      %v629 = vld [vmem:[%s3 + $0x28] sm:$0xf]
      %v630 = vld [vmem:[%s3 + $0x2c] sm:$0xf]
      %v631 = vld [vmem:[%s3 + $0x30] sm:$0xf]
      %v632 = vld [vmem:[%s3 + $0x34] sm:$0xf]
      %v633 = vld [vmem:[%s3 + $0x38] sm:$0xf]
      %v634 = vld [vmem:[%s3 + $0x3c] sm:$0xf]
      %v651 = vunpack.c.l.b16 %v619
      %v652 = vunpack.c.l.b16 %v620
      %v653 = vunpack.c.l.b16 %v621
      %v654 = vunpack.c.l.b16 %v622
      %v655 = vunpack.c.l.b16 %v623
      %v656 = vunpack.c.l.b16 %v624
      %v657 = vunpack.c.l.b16 %v625
      %v658 = vunpack.c.l.b16 %v626
      %v659 = vunpack.c.l.b16 %v627
      %v660 = vunpack.c.l.b16 %v628
      %v661 = vunpack.c.l.b16 %v629
      %v662 = vunpack.c.l.b16 %v630
      %v663 = vunpack.c.l.b16 %v631
      %v664 = vunpack.c.l.b16 %v632
      %v665 = vunpack.c.l.b16 %v633
      %v666 = vunpack.c.l.b16 %v634
      %v667 = vpack.c.b16 %v652, %v651
      %v668 = vpack.c.b16 %v654, %v653
      %v669 = vpack.c.b16 %v656, %v655
      %v670 = vpack.c.b16 %v658, %v657
      %v671 = vpack.c.b16 %v660, %v659
      %v672 = vpack.c.b16 %v662, %v661
      %v673 = vpack.c.b16 %v664, %v663
      %v674 = vpack.c.b16 %v666, %v665
      %683 = vmatpush.bf16.msra.mxu0 %v674
      %684 = vmatpush.bf16.msra.mxu0 %v673
      %685 = vmatpush.bf16.msra.mxu0 %v672
      %686 = vmatpush.bf16.msra.mxu0 %v671
      %687 = vmatpush.bf16.msra.mxu0 %v670
      %688 = vmatpush.bf16.msra.mxu0 %v669
      %689 = vmatpush.bf16.msra.mxu0 %v668
      %690 = vmatpush.bf16.msra.mxu0 %v667
      %691 = vmatmul.bf16.gmra.mxu0 %v603
      %v692 = vpop.f32.mrf.mxu0
      %v693 = vadd.f32 0.0, %v692
      %v694 = vpop.f32.mrf.mxu0
      %v695 = vadd.f32 0.0, %v694
      %696 = vmatmul.bf16.gmra.mxu0 %v604
      %v697 = vpop.f32.mrf.mxu0
      %v698 = vadd.f32 0.0, %v697
      %v699 = vpop.f32.mrf.mxu0
      %v700 = vadd.f32 0.0, %v699
      %701 = vmatmul.bf16.gmra.mxu0 %v605
      %v702 = vpop.f32.mrf.mxu0
      %v703 = vadd.f32 0.0, %v702
      %v704 = vpop.f32.mrf.mxu0
      %v705 = vadd.f32 0.0, %v704
      %706 = vmatmul.bf16.gmra.mxu0 %v606
      %v707 = vpop.f32.mrf.mxu0
      %v708 = vadd.f32 0.0, %v707
      %v709 = vpop.f32.mrf.mxu0
      %v710 = vadd.f32 0.0, %v709
      %711 = vmatmul.bf16.gmra.mxu0 %v607
      %v712 = vpop.f32.mrf.mxu0
      %v713 = vadd.f32 0.0, %v712
      %v714 = vpop.f32.mrf.mxu0
      %v715 = vadd.f32 0.0, %v714
      %716 = vmatmul.bf16.gmra.mxu0 %v608
      %v717 = vpop.f32.mrf.mxu0
      %v718 = vadd.f32 0.0, %v717
      %v719 = vpop.f32.mrf.mxu0
      %v720 = vadd.f32 0.0, %v719
      %721 = vmatmul.bf16.gmra.mxu0 %v609
      %v722 = vpop.f32.mrf.mxu0
      %v723 = vadd.f32 0.0, %v722
      %v724 = vpop.f32.mrf.mxu0
      %v725 = vadd.f32 0.0, %v724
      %726 = vmatmul.bf16.gmra.mxu0 %v610
      %v727 = vpop.f32.mrf.mxu0
      %v728 = vadd.f32 0.0, %v727
      %v729 = vpop.f32.mrf.mxu0
      %v730 = vadd.f32 0.0, %v729
      %731 = vmatmul.bf16.gmra.mxu0 %v611
      %v732 = vpop.f32.mrf.mxu0
      %v733 = vadd.f32 0.0, %v732
      %v734 = vpop.f32.mrf.mxu0
      %v735 = vadd.f32 0.0, %v734
      %736 = vmatmul.bf16.gmra.mxu0 %v612
      %v737 = vpop.f32.mrf.mxu0
      %v738 = vadd.f32 0.0, %v737
      %v739 = vpop.f32.mrf.mxu0
      %v740 = vadd.f32 0.0, %v739
      %741 = vmatmul.bf16.gmra.mxu0 %v613
      %v742 = vpop.f32.mrf.mxu0
      %v743 = vadd.f32 0.0, %v742
      %v744 = vpop.f32.mrf.mxu0
      %v745 = vadd.f32 0.0, %v744
      %746 = vmatmul.bf16.gmra.mxu0 %v614
      %v747 = vpop.f32.mrf.mxu0
      %v748 = vadd.f32 0.0, %v747
      %v749 = vpop.f32.mrf.mxu0
      %v750 = vadd.f32 0.0, %v749
      %751 = vmatmul.bf16.gmra.mxu0 %v615
      %v752 = vpop.f32.mrf.mxu0
      %v753 = vadd.f32 0.0, %v752
      %v754 = vpop.f32.mrf.mxu0
      %v755 = vadd.f32 0.0, %v754
      %756 = vmatmul.bf16.gmra.mxu0 %v616
      %v757 = vpop.f32.mrf.mxu0
      %v758 = vadd.f32 0.0, %v757
      %v759 = vpop.f32.mrf.mxu0
      %v760 = vadd.f32 0.0, %v759
      %761 = vmatmul.bf16.gmra.mxu0 %v617
      %v762 = vpop.f32.mrf.mxu0
      %v763 = vadd.f32 0.0, %v762
      %v764 = vpop.f32.mrf.mxu0
      %v765 = vadd.f32 0.0, %v764
      %766 = vmatmul.bf16.gmra.mxu0 %v618
      %v767 = vpop.f32.mrf.mxu0
      %v768 = vadd.f32 0.0, %v767
      %v769 = vpop.f32.mrf.mxu0
      %v770 = vadd.f32 0.0, %v769
      %771 = vdwg.mxu0
      %772 = vst [vmem:[%s264] sm:$0xff] %v693
      %773 = vst [vmem:[%s264 + $0x8] sm:$0xff] %v695
      %774 = vst [vmem:[%s264 + $0x10] sm:$0xff] %v698
      %775 = vst [vmem:[%s264 + $0x18] sm:$0xff] %v700
      %776 = vst [vmem:[%s264 + $0x20] sm:$0xff] %v703
      %777 = vst [vmem:[%s264 + $0x28] sm:$0xff] %v705
      %778 = vst [vmem:[%s264 + $0x30] sm:$0xff] %v708
      %779 = vst [vmem:[%s264 + $0x38] sm:$0xff] %v710
      %780 = vst [vmem:[%s264 + $0x40] sm:$0xff] %v713
      %781 = vst [vmem:[%s264 + $0x48] sm:$0xff] %v715
      %782 = vst [vmem:[%s264 + $0x50] sm:$0xff] %v718
      %783 = vst [vmem:[%s264 + $0x58] sm:$0xff] %v720
      %784 = vst [vmem:[%s264 + $0x60] sm:$0xff] %v723
      %785 = vst [vmem:[%s264 + $0x68] sm:$0xff] %v725
      %786 = vst [vmem:[%s264 + $0x70] sm:$0xff] %v728
      %787 = vst [vmem:[%s264 + $0x78] sm:$0xff] %v730
      %788 = vst [vmem:[%s264 + $0x80] sm:$0xff] %v733
      %789 = vst [vmem:[%s264 + $0x88] sm:$0xff] %v735
      %790 = vst [vmem:[%s264 + $0x90] sm:$0xff] %v738
      %791 = vst [vmem:[%s264 + $0x98] sm:$0xff] %v740
      %792 = vst [vmem:[%s264 + $0xa0] sm:$0xff] %v743
      %793 = vst [vmem:[%s264 + $0xa8] sm:$0xff] %v745
      %794 = vst [vmem:[%s264 + $0xb0] sm:$0xff] %v748
      %795 = vst [vmem:[%s264 + $0xb8] sm:$0xff] %v750
      %796 = vst [vmem:[%s264 + $0xc0] sm:$0xff] %v753
      %797 = vst [vmem:[%s264 + $0xc8] sm:$0xff] %v755
      %798 = vst [vmem:[%s264 + $0xd0] sm:$0xff] %v758
      %799 = vst [vmem:[%s264 + $0xd8] sm:$0xff] %v760
      %800 = vst [vmem:[%s264 + $0xe0] sm:$0xff] %v763
      %801 = vst [vmem:[%s264 + $0xe8] sm:$0xff] %v765
      %802 = vst [vmem:[%s264 + $0xf0] sm:$0xff] %v768
      %803 = vst [vmem:[%s264 + $0xf8] sm:$0xff] %v770
      %v804 = vadd.f32 %v693, %v695
      %v805 = vadd.f32 %v804, %v698
      %v806 = vadd.f32 %v805, %v700
      %v807 = vadd.f32 %v806, %v703
      %v808 = vadd.f32 %v807, %v705
      %v809 = vadd.f32 %v808, %v708
      %v810 = vadd.f32 %v809, %v710
      %v811 = vadd.f32 %v810, %v713
      %v812 = vadd.f32 %v811, %v715
      %v813 = vadd.f32 %v812, %v718
      %v814 = vadd.f32 %v813, %v720
      %v815 = vadd.f32 %v814, %v723
      %v816 = vadd.f32 %v815, %v725
      %v817 = vadd.f32 %v816, %v728
      %v818 = vadd.f32 %v817, %v730
      %v819 = vadd.f32 %v818, %v733
      %v820 = vadd.f32 %v819, %v735
      %v821 = vadd.f32 %v820, %v738
      %v822 = vadd.f32 %v821, %v740
      %v823 = vadd.f32 %v822, %v743
      %v824 = vadd.f32 %v823, %v745
      %v825 = vadd.f32 %v824, %v748
      %v826 = vadd.f32 %v825, %v750
      %v827 = vadd.f32 %v826, %v753
      %v828 = vadd.f32 %v827, %v755
      %v829 = vadd.f32 %v828, %v758
      %v830 = vadd.f32 %v829, %v760
      %v831 = vadd.f32 %v830, %v763
      %v832 = vadd.f32 %v831, %v765
      %v833 = vadd.f32 %v832, %v768
      %v834 = vadd.f32 %v833, %v770
      %v835 = vrot.slane %v834, 4
      %v836 = vadd.f32 %v834, %v835
      %v837 = vrot.slane %v836, 2
      %v838 = vadd.f32 %v836, %v837
      %v839 = vrot.slane %v838, 1
      %v840 = vadd.f32 %v838, %v839
      %841 = vst [vmem:[%s268] sm:$0x1] %v840
      %v842 = vmul.f32 %v693, %v693
      %v843 = vmul.f32 %v695, %v695
      %v844 = vmul.f32 %v698, %v698
      %v845 = vmul.f32 %v700, %v700
      %v846 = vmul.f32 %v703, %v703
      %v847 = vmul.f32 %v705, %v705
      %v848 = vmul.f32 %v708, %v708
      %v849 = vmul.f32 %v710, %v710
      %v850 = vmul.f32 %v713, %v713
      %v851 = vmul.f32 %v715, %v715
      %v852 = vmul.f32 %v718, %v718
      %v853 = vmul.f32 %v720, %v720
      %v854 = vmul.f32 %v723, %v723
      %v855 = vmul.f32 %v725, %v725
      %v856 = vmul.f32 %v728, %v728
      %v857 = vmul.f32 %v730, %v730
      %v858 = vmul.f32 %v733, %v733
      %v859 = vmul.f32 %v735, %v735
      %v860 = vmul.f32 %v738, %v738
      %v861 = vmul.f32 %v740, %v740
      %v862 = vmul.f32 %v743, %v743
      %v863 = vmul.f32 %v745, %v745
      %v864 = vmul.f32 %v748, %v748
      %v865 = vmul.f32 %v750, %v750
      %v866 = vmul.f32 %v753, %v753
      %v867 = vmul.f32 %v755, %v755
      %v868 = vmul.f32 %v758, %v758
      %v869 = vmul.f32 %v760, %v760
      %v870 = vmul.f32 %v763, %v763
      %v871 = vmul.f32 %v765, %v765
      %v872 = vmul.f32 %v768, %v768
      %v873 = vmul.f32 %v770, %v770
      %v874 = vadd.f32 %v842, %v843
      %v875 = vadd.f32 %v874, %v844
      %v876 = vadd.f32 %v875, %v845
      %v877 = vadd.f32 %v876, %v846
      %v878 = vadd.f32 %v877, %v847
      %v879 = vadd.f32 %v878, %v848
      %v880 = vadd.f32 %v879, %v849
      %v881 = vadd.f32 %v880, %v850
      %v882 = vadd.f32 %v881, %v851
      %v883 = vadd.f32 %v882, %v852
      %v884 = vadd.f32 %v883, %v853
      %v885 = vadd.f32 %v884, %v854
      %v886 = vadd.f32 %v885, %v855
      %v887 = vadd.f32 %v886, %v856
      %v888 = vadd.f32 %v887, %v857
      %v889 = vadd.f32 %v888, %v858
      %v890 = vadd.f32 %v889, %v859
      %v891 = vadd.f32 %v890, %v860
      %v892 = vadd.f32 %v891, %v861
      %v893 = vadd.f32 %v892, %v862
      %v894 = vadd.f32 %v893, %v863
      %v895 = vadd.f32 %v894, %v864
      %v896 = vadd.f32 %v895, %v865
      %v897 = vadd.f32 %v896, %v866
      %v898 = vadd.f32 %v897, %v867
      %v899 = vadd.f32 %v898, %v868
      %v900 = vadd.f32 %v899, %v869
      %v901 = vadd.f32 %v900, %v870
      %v902 = vadd.f32 %v901, %v871
      %v903 = vadd.f32 %v902, %v872
      %v904 = vadd.f32 %v903, %v873
      %v905 = vrot.slane %v904, 4
      %v906 = vadd.f32 %v904, %v905
      %v907 = vrot.slane %v906, 2
      %v908 = vadd.f32 %v906, %v907
      %v909 = vrot.slane %v908, 1
      %v910 = vadd.f32 %v908, %v909
      %911 = vst [vmem:[%s271] sm:$0x1] %v910
      %s912 = smul.u32 32, %s18
      %p913 = scmp.lt.s32.totalorder %s912, 63
      %s914 = scalar_select %p913, %s912, 63
      %s915 = smul.addr %s914, 8
      %s916 = scalar_lea.vmem %s4, %s915
      %p917 = scmp.lt.s32.totalorder %s18, 1
      %s918 = scalar_select %p917, %s18, 1
      %s919 = scalar_lea.vmem %s5, %s918
      %p920 = scmp.lt.s32.totalorder %s18, 1
      %s921 = scalar_select %p920, %s18, 1
      %s922 = scalar_lea.vmem %s6, %s921
      // Predicated region
      $region37: #{preact_bottleneck_forward.4} parent=35 // pred_check
        %p923 = pneg %p125
      $region38: #{preact_bottleneck_forward.4} parent=35 // pred_check_branch
        %925 = sbr.rel (%p923) target = $region40
      $region39: #{preact_bottleneck_forward.4} parent=35 // pred_region
        %s926 = smul.u32 32, %s18
      $region40: #{preact_bottleneck_forward.4} parent=35 // pred_fallthru
        _
      // Predicated region
      $region41: #{preact_bottleneck_forward.4} parent=35 // pred_check
        %p927 = pneg %p151
      $region42: #{preact_bottleneck_forward.4} parent=35 // pred_check_branch
        %929 = sbr.rel (%p927) target = $region44
      $region43: #{preact_bottleneck_forward.4} parent=35 // pred_region
        _
      $region44: #{preact_bottleneck_forward.4} parent=35 // pred_fallthru
        _
      // Predicated region
      $region45: #{preact_bottleneck_forward.4} parent=35 // pred_check
        %p930 = pneg %p177
      $region46: #{preact_bottleneck_forward.4} parent=35 // pred_check_branch
        %932 = sbr.rel (%p930) target = $region48
      $region47: #{preact_bottleneck_forward.4} parent=35 // pred_region
        _
      $region48: #{preact_bottleneck_forward.4} parent=35 // pred_fallthru
        _
    $region36: #{preact_bottleneck_forward.4} parent=5 // pred_fallthru
      _
    %p933 = scmp.le.s32.totalorder 2, %s13
    // Predicated region
    $region49: #{preact_bottleneck_forward.4} parent=5 // pred_check
      %p934 = pneg %p933
    $region50: #{preact_bottleneck_forward.4} parent=5 // pred_check_branch
      %936 = sbr.rel (%p934) target = $region52
    $region51: #{preact_bottleneck_forward.4} parent=5 // pred_region
      %s937 = ssub.s32 %s13, 2
      // Predicated region
      $region53: #{preact_bottleneck_forward.4} parent=51 // pred_check
        %p938 = pneg %p131
      $region54: #{preact_bottleneck_forward.4} parent=51 // pred_check_branch
        %940 = sbr.rel (%p938) target = $region56
      $region55: #{preact_bottleneck_forward.4} parent=51 // pred_region
        %s941 = smul.u32 32, %s19
        %p942 = scmp.lt.s32.totalorder %s941, 63
        %s943 = scalar_select %p942, %s941, 63
        %s944 = smul.addr %s943, 8
        %s945 = scalar_lea.vmem %s4, %s944
      $region56: #{preact_bottleneck_forward.4} parent=51 // pred_fallthru
        _
      // Predicated region
      $region57: #{preact_bottleneck_forward.4} parent=51 // pred_check
        %p946 = pneg %p157
      $region58: #{preact_bottleneck_forward.4} parent=51 // pred_check_branch
        %948 = sbr.rel (%p946) target = $region60
      $region59: #{preact_bottleneck_forward.4} parent=51 // pred_region
        %p949 = scmp.lt.s32.totalorder %s19, 1
        %s950 = scalar_select %p949, %s19, 1
        %s951 = scalar_lea.vmem %s5, %s950
      $region60: #{preact_bottleneck_forward.4} parent=51 // pred_fallthru
        _
      // Predicated region
      $region61: #{preact_bottleneck_forward.4} parent=51 // pred_check
        %p952 = pneg %p183
      $region62: #{preact_bottleneck_forward.4} parent=51 // pred_check_branch
        %954 = sbr.rel (%p952) target = $region64
      $region63: #{preact_bottleneck_forward.4} parent=51 // pred_region
        %p955 = scmp.lt.s32.totalorder %s19, 1
        %s956 = scalar_select %p955, %s19, 1
        %s957 = scalar_lea.vmem %s6, %s956
      $region64: #{preact_bottleneck_forward.4} parent=51 // pred_fallthru
        _
    $region52: #{preact_bottleneck_forward.4} parent=5 // pred_fallthru
      _
  $region6: #{preact_bottleneck_forward.4} parent=0 // loop_footer
    %s17 = sadd.s32 1, %s13
  $region7: #{preact_bottleneck_forward.4} parent=0 // loop_footer_branch
    %12 = sbr.rel target = $region3
  $region8: #{preact_bottleneck_forward.4} parent=0 // loop_exit
    _

// kernel: preact_bottleneck_forward.6
$region0: #{preact_bottleneck_forward.6}
  #allocation0 [shape = 'u32[]', space=smem, size = 0x4, offset = 0x4, fixed_abs, tag = 'smem constant byte address 0x4 - core index']
  #allocation1 [shape = 'u32[72,128]{1,0:T(1,128)}', space=vmem, size = 0x9000, scoped, tag = 'internal scratch']
  %s0 = inlined_call_operand.vmem [shape: f32[256,128], index: 0, kind: input, shape index: {}]
  %s1 = inlined_call_operand.vmem [shape: f32[1,128], index: 1, kind: input, shape index: {}]
  %s2 = inlined_call_operand.vmem [shape: f32[1,128], index: 2, kind: input, shape index: {}]
  %s3 = inlined_call_operand.vmem [shape: bf16[128,128], index: 3, kind: input, shape index: {}]
  %s4 = inlined_call_operand.vmem [shape: f32[256,128], index: 4, kind: output, shape index: {}]
  %s5 = sld [smem:[#allocation0]]
  $region26: #{preact_bottleneck_forward.6} parent=0
    _
  %s7 = ssub.s32 1, %s5
  %s8 = scalar_select 0, %s7, %s5
  // Predicated region
  $region2: #{preact_bottleneck_forward.6} parent=0 // pred_check
    _
  $region3: #{preact_bottleneck_forward.6} parent=0 // pred_check_branch
    %10 = sbr.rel (0) target = $region5
  $region4: #{preact_bottleneck_forward.6} parent=0 // pred_region
    _
  $region5: #{preact_bottleneck_forward.6} parent=0 // pred_fallthru
    _
  // Predicated region
  $region6: #{preact_bottleneck_forward.6} parent=0 // pred_check
    _
  $region7: #{preact_bottleneck_forward.6} parent=0 // pred_check_branch
    %12 = sbr.rel (0) target = $region9
  $region8: #{preact_bottleneck_forward.6} parent=0 // pred_region
    _
  $region9: #{preact_bottleneck_forward.6} parent=0 // pred_fallthru
    _
  // Predicated region
  $region10: #{preact_bottleneck_forward.6} parent=0 // pred_check
    _
  $region11: #{preact_bottleneck_forward.6} parent=0 // pred_check_branch
    %14 = sbr.rel (0) target = $region13
  $region12: #{preact_bottleneck_forward.6} parent=0 // pred_region
    _
  $region13: #{preact_bottleneck_forward.6} parent=0 // pred_fallthru
    _
  // Predicated region
  $region14: #{preact_bottleneck_forward.6} parent=0 // pred_check
    _
  $region15: #{preact_bottleneck_forward.6} parent=0 // pred_check_branch
    %16 = sbr.rel (0) target = $region17
  $region16: #{preact_bottleneck_forward.6} parent=0 // pred_region
    _
  $region17: #{preact_bottleneck_forward.6} parent=0 // pred_fallthru
    _
  %v17 = vld [vmem:[%s0] sm:$0xff]
  %v18 = vld [vmem:[%s0 + $0x8] sm:$0xff]
  %v19 = vld [vmem:[%s0 + $0x10] sm:$0xff]
  %v20 = vld [vmem:[%s0 + $0x18] sm:$0xff]
  %v21 = vld [vmem:[%s0 + $0x20] sm:$0xff]
  %v22 = vld [vmem:[%s0 + $0x28] sm:$0xff]
  %v23 = vld [vmem:[%s0 + $0x30] sm:$0xff]
  %v24 = vld [vmem:[%s0 + $0x38] sm:$0xff]
  %v25 = vld [vmem:[%s0 + $0x40] sm:$0xff]
  %v26 = vld [vmem:[%s0 + $0x48] sm:$0xff]
  %v27 = vld [vmem:[%s0 + $0x50] sm:$0xff]
  %v28 = vld [vmem:[%s0 + $0x58] sm:$0xff]
  %v29 = vld [vmem:[%s0 + $0x60] sm:$0xff]
  %v30 = vld [vmem:[%s0 + $0x68] sm:$0xff]
  %v31 = vld [vmem:[%s0 + $0x70] sm:$0xff]
  %v32 = vld [vmem:[%s0 + $0x78] sm:$0xff]
  %v33 = vld [vmem:[%s0 + $0x80] sm:$0xff]
  %v34 = vld [vmem:[%s0 + $0x88] sm:$0xff]
  %v35 = vld [vmem:[%s0 + $0x90] sm:$0xff]
  %v36 = vld [vmem:[%s0 + $0x98] sm:$0xff]
  %v37 = vld [vmem:[%s0 + $0xa0] sm:$0xff]
  %v38 = vld [vmem:[%s0 + $0xa8] sm:$0xff]
  %v39 = vld [vmem:[%s0 + $0xb0] sm:$0xff]
  %v40 = vld [vmem:[%s0 + $0xb8] sm:$0xff]
  %v41 = vld [vmem:[%s0 + $0xc0] sm:$0xff]
  %v42 = vld [vmem:[%s0 + $0xc8] sm:$0xff]
  %v43 = vld [vmem:[%s0 + $0xd0] sm:$0xff]
  %v44 = vld [vmem:[%s0 + $0xd8] sm:$0xff]
  %v45 = vld [vmem:[%s0 + $0xe0] sm:$0xff]
  %v46 = vld [vmem:[%s0 + $0xe8] sm:$0xff]
  %v47 = vld [vmem:[%s0 + $0xf0] sm:$0xff]
  %v48 = vld [vmem:[%s0 + $0xf8] sm:$0xff]
  %v49 = vld [vmem:[%s1] sm:$0x1]
  %v51 = vperm.slane %v49, 0
  %v53 = vmul.f32 %v17, %v51
  %v54 = vmul.f32 %v18, %v51
  %v55 = vmul.f32 %v19, %v51
  %v56 = vmul.f32 %v20, %v51
  %v57 = vmul.f32 %v21, %v51
  %v58 = vmul.f32 %v22, %v51
  %v59 = vmul.f32 %v23, %v51
  %v60 = vmul.f32 %v24, %v51
  %v61 = vmul.f32 %v25, %v51
  %v62 = vmul.f32 %v26, %v51
  %v63 = vmul.f32 %v27, %v51
  %v64 = vmul.f32 %v28, %v51
  %v65 = vmul.f32 %v29, %v51
  %v66 = vmul.f32 %v30, %v51
  %v67 = vmul.f32 %v31, %v51
  %v68 = vmul.f32 %v32, %v51
  %v69 = vmul.f32 %v33, %v51
  %v70 = vmul.f32 %v34, %v51
  %v71 = vmul.f32 %v35, %v51
  %v72 = vmul.f32 %v36, %v51
  %v73 = vmul.f32 %v37, %v51
  %v74 = vmul.f32 %v38, %v51
  %v75 = vmul.f32 %v39, %v51
  %v76 = vmul.f32 %v40, %v51
  %v77 = vmul.f32 %v41, %v51
  %v78 = vmul.f32 %v42, %v51
  %v79 = vmul.f32 %v43, %v51
  %v80 = vmul.f32 %v44, %v51
  %v81 = vmul.f32 %v45, %v51
  %v82 = vmul.f32 %v46, %v51
  %v83 = vmul.f32 %v47, %v51
  %v84 = vmul.f32 %v48, %v51
  %v85 = vld [vmem:[%s2] sm:$0x1]
  %v87 = vperm.slane %v85, 0
  %v89 = vadd.f32 %v53, %v87
  %v90 = vadd.f32 %v54, %v87
  %v91 = vadd.f32 %v55, %v87
  %v92 = vadd.f32 %v56, %v87
  %v93 = vadd.f32 %v57, %v87
  %v94 = vadd.f32 %v58, %v87
  %v95 = vadd.f32 %v59, %v87
  %v96 = vadd.f32 %v60, %v87
  %v97 = vadd.f32 %v61, %v87
  %v98 = vadd.f32 %v62, %v87
  %v99 = vadd.f32 %v63, %v87
  %v100 = vadd.f32 %v64, %v87
  %v101 = vadd.f32 %v65, %v87
  %v102 = vadd.f32 %v66, %v87
  %v103 = vadd.f32 %v67, %v87
  %v104 = vadd.f32 %v68, %v87
  %v105 = vadd.f32 %v69, %v87
  %v106 = vadd.f32 %v70, %v87
  %v107 = vadd.f32 %v71, %v87
  %v108 = vadd.f32 %v72, %v87
  %v109 = vadd.f32 %v73, %v87
  %v110 = vadd.f32 %v74, %v87
  %v111 = vadd.f32 %v75, %v87
  %v112 = vadd.f32 %v76, %v87
  %v113 = vadd.f32 %v77, %v87
  %v114 = vadd.f32 %v78, %v87
  %v115 = vadd.f32 %v79, %v87
  %v116 = vadd.f32 %v80, %v87
  %v117 = vadd.f32 %v81, %v87
  %v118 = vadd.f32 %v82, %v87
  %v119 = vadd.f32 %v83, %v87
  %v120 = vadd.f32 %v84, %v87
  %v121 = vmax.f32 %v89, 0.0
  %v122 = vmax.f32 %v90, 0.0
  %v123 = vmax.f32 %v91, 0.0
  %v124 = vmax.f32 %v92, 0.0
  %v125 = vmax.f32 %v93, 0.0
  %v126 = vmax.f32 %v94, 0.0
  %v127 = vmax.f32 %v95, 0.0
  %v128 = vmax.f32 %v96, 0.0
  %v129 = vmax.f32 %v97, 0.0
  %v130 = vmax.f32 %v98, 0.0
  %v131 = vmax.f32 %v99, 0.0
  %v132 = vmax.f32 %v100, 0.0
  %v133 = vmax.f32 %v101, 0.0
  %v134 = vmax.f32 %v102, 0.0
  %v135 = vmax.f32 %v103, 0.0
  %v136 = vmax.f32 %v104, 0.0
  %v137 = vmax.f32 %v105, 0.0
  %v138 = vmax.f32 %v106, 0.0
  %v139 = vmax.f32 %v107, 0.0
  %v140 = vmax.f32 %v108, 0.0
  %v141 = vmax.f32 %v109, 0.0
  %v142 = vmax.f32 %v110, 0.0
  %v143 = vmax.f32 %v111, 0.0
  %v144 = vmax.f32 %v112, 0.0
  %v145 = vmax.f32 %v113, 0.0
  %v146 = vmax.f32 %v114, 0.0
  %v147 = vmax.f32 %v115, 0.0
  %v148 = vmax.f32 %v116, 0.0
  %v149 = vmax.f32 %v117, 0.0
  %v150 = vmax.f32 %v118, 0.0
  %v151 = vmax.f32 %v119, 0.0
  %v152 = vmax.f32 %v120, 0.0
  %v153 = vpack.c.bf16 %v122, %v121
  %v154 = vpack.c.bf16 %v124, %v123
  %v155 = vpack.c.bf16 %v126, %v125
  %v156 = vpack.c.bf16 %v128, %v127
  %v157 = vpack.c.bf16 %v130, %v129
  %v158 = vpack.c.bf16 %v132, %v131
  %v159 = vpack.c.bf16 %v134, %v133
  %v160 = vpack.c.bf16 %v136, %v135
  %v161 = vpack.c.bf16 %v138, %v137
  %v162 = vpack.c.bf16 %v140, %v139
  %v163 = vpack.c.bf16 %v142, %v141
  %v164 = vpack.c.bf16 %v144, %v143
  %v165 = vpack.c.bf16 %v146, %v145
  %v166 = vpack.c.bf16 %v148, %v147
  %v167 = vpack.c.bf16 %v150, %v149
  %v168 = vpack.c.bf16 %v152, %v151
  %v169 = vld [vmem:[%s3] sm:$0xf]
  %v170 = vld [vmem:[%s3 + $0x4] sm:$0xf]
  %v171 = vld [vmem:[%s3 + $0x8] sm:$0xf]
  %v172 = vld [vmem:[%s3 + $0xc] sm:$0xf]
  %v173 = vld [vmem:[%s3 + $0x10] sm:$0xf]
  %v174 = vld [vmem:[%s3 + $0x14] sm:$0xf]
  %v175 = vld [vmem:[%s3 + $0x18] sm:$0xf]
  %v176 = vld [vmem:[%s3 + $0x1c] sm:$0xf]
  %v177 = vld [vmem:[%s3 + $0x20] sm:$0xf]
  %v178 = vld [vmem:[%s3 + $0x24] sm:$0xf]
  %v179 = vld [vmem:[%s3 + $0x28] sm:$0xf]
  %v180 = vld [vmem:[%s3 + $0x2c] sm:$0xf]
  %v181 = vld [vmem:[%s3 + $0x30] sm:$0xf]
  %v182 = vld [vmem:[%s3 + $0x34] sm:$0xf]
  %v183 = vld [vmem:[%s3 + $0x38] sm:$0xf]
  %v184 = vld [vmem:[%s3 + $0x3c] sm:$0xf]
  %v201 = vunpack.c.l.b16 %v169
  %v202 = vunpack.c.l.b16 %v170
  %v203 = vunpack.c.l.b16 %v171
  %v204 = vunpack.c.l.b16 %v172
  %v205 = vunpack.c.l.b16 %v173
  %v206 = vunpack.c.l.b16 %v174
  %v207 = vunpack.c.l.b16 %v175
  %v208 = vunpack.c.l.b16 %v176
  %v209 = vunpack.c.l.b16 %v177
  %v210 = vunpack.c.l.b16 %v178
  %v211 = vunpack.c.l.b16 %v179
  %v212 = vunpack.c.l.b16 %v180
  %v213 = vunpack.c.l.b16 %v181
  %v214 = vunpack.c.l.b16 %v182
  %v215 = vunpack.c.l.b16 %v183
  %v216 = vunpack.c.l.b16 %v184
  %v217 = vpack.c.b16 %v202, %v201
  %v218 = vpack.c.b16 %v204, %v203
  %v219 = vpack.c.b16 %v206, %v205
  %v220 = vpack.c.b16 %v208, %v207
  %v221 = vpack.c.b16 %v210, %v209
  %v222 = vpack.c.b16 %v212, %v211
  %v223 = vpack.c.b16 %v214, %v213
  %v224 = vpack.c.b16 %v216, %v215
  %233 = vmatpush.bf16.msra.mxu0 %v224
  %234 = vmatpush.bf16.msra.mxu0 %v223
  %235 = vmatpush.bf16.msra.mxu0 %v222
  %236 = vmatpush.bf16.msra.mxu0 %v221
  %237 = vmatpush.bf16.msra.mxu0 %v220
  %238 = vmatpush.bf16.msra.mxu0 %v219
  %239 = vmatpush.bf16.msra.mxu0 %v218
  %240 = vmatpush.bf16.msra.mxu0 %v217
  %241 = vmatmul.bf16.gmra.mxu0 %v153
  %v242 = vpop.f32.mrf.mxu0
  %v243 = vadd.f32 0.0, %v242
  %v244 = vpop.f32.mrf.mxu0
  %v245 = vadd.f32 0.0, %v244
  %246 = vmatmul.bf16.gmra.mxu0 %v154
  %v247 = vpop.f32.mrf.mxu0
  %v248 = vadd.f32 0.0, %v247
  %v249 = vpop.f32.mrf.mxu0
  %v250 = vadd.f32 0.0, %v249
  %251 = vmatmul.bf16.gmra.mxu0 %v155
  %v252 = vpop.f32.mrf.mxu0
  %v253 = vadd.f32 0.0, %v252
  %v254 = vpop.f32.mrf.mxu0
  %v255 = vadd.f32 0.0, %v254
  %256 = vmatmul.bf16.gmra.mxu0 %v156
  %v257 = vpop.f32.mrf.mxu0
  %v258 = vadd.f32 0.0, %v257
  %v259 = vpop.f32.mrf.mxu0
  %v260 = vadd.f32 0.0, %v259
  %261 = vmatmul.bf16.gmra.mxu0 %v157
  %v262 = vpop.f32.mrf.mxu0
  %v263 = vadd.f32 0.0, %v262
  %v264 = vpop.f32.mrf.mxu0
  %v265 = vadd.f32 0.0, %v264
  %266 = vmatmul.bf16.gmra.mxu0 %v158
  %v267 = vpop.f32.mrf.mxu0
  %v268 = vadd.f32 0.0, %v267
  %v269 = vpop.f32.mrf.mxu0
  %v270 = vadd.f32 0.0, %v269
  %271 = vmatmul.bf16.gmra.mxu0 %v159
  %v272 = vpop.f32.mrf.mxu0
  %v273 = vadd.f32 0.0, %v272
  %v274 = vpop.f32.mrf.mxu0
  %v275 = vadd.f32 0.0, %v274
  %276 = vmatmul.bf16.gmra.mxu0 %v160
  %v277 = vpop.f32.mrf.mxu0
  %v278 = vadd.f32 0.0, %v277
  %v279 = vpop.f32.mrf.mxu0
  %v280 = vadd.f32 0.0, %v279
  %281 = vmatmul.bf16.gmra.mxu0 %v161
  %v282 = vpop.f32.mrf.mxu0
  %v283 = vadd.f32 0.0, %v282
  %v284 = vpop.f32.mrf.mxu0
  %v285 = vadd.f32 0.0, %v284
  %286 = vmatmul.bf16.gmra.mxu0 %v162
  %v287 = vpop.f32.mrf.mxu0
  %v288 = vadd.f32 0.0, %v287
  %v289 = vpop.f32.mrf.mxu0
  %v290 = vadd.f32 0.0, %v289
  %291 = vmatmul.bf16.gmra.mxu0 %v163
  %v292 = vpop.f32.mrf.mxu0
  %v293 = vadd.f32 0.0, %v292
  %v294 = vpop.f32.mrf.mxu0
  %v295 = vadd.f32 0.0, %v294
  %296 = vmatmul.bf16.gmra.mxu0 %v164
  %v297 = vpop.f32.mrf.mxu0
  %v298 = vadd.f32 0.0, %v297
  %v299 = vpop.f32.mrf.mxu0
  %v300 = vadd.f32 0.0, %v299
  %301 = vmatmul.bf16.gmra.mxu0 %v165
  %v302 = vpop.f32.mrf.mxu0
  %v303 = vadd.f32 0.0, %v302
  %v304 = vpop.f32.mrf.mxu0
  %v305 = vadd.f32 0.0, %v304
  %306 = vmatmul.bf16.gmra.mxu0 %v166
  %v307 = vpop.f32.mrf.mxu0
  %v308 = vadd.f32 0.0, %v307
  %v309 = vpop.f32.mrf.mxu0
  %v310 = vadd.f32 0.0, %v309
  %311 = vmatmul.bf16.gmra.mxu0 %v167
  %v312 = vpop.f32.mrf.mxu0
  %v313 = vadd.f32 0.0, %v312
  %v314 = vpop.f32.mrf.mxu0
  %v315 = vadd.f32 0.0, %v314
  %316 = vmatmul.bf16.gmra.mxu0 %v168
  %v317 = vpop.f32.mrf.mxu0
  %v318 = vadd.f32 0.0, %v317
  %v319 = vpop.f32.mrf.mxu0
  %v320 = vadd.f32 0.0, %v319
  %321 = vdwg.mxu0
  %322 = vst [vmem:[%s4] sm:$0xff] %v243
  %323 = vst [vmem:[%s4 + $0x8] sm:$0xff] %v245
  %324 = vst [vmem:[%s4 + $0x10] sm:$0xff] %v248
  %325 = vst [vmem:[%s4 + $0x18] sm:$0xff] %v250
  %326 = vst [vmem:[%s4 + $0x20] sm:$0xff] %v253
  %327 = vst [vmem:[%s4 + $0x28] sm:$0xff] %v255
  %328 = vst [vmem:[%s4 + $0x30] sm:$0xff] %v258
  %329 = vst [vmem:[%s4 + $0x38] sm:$0xff] %v260
  %330 = vst [vmem:[%s4 + $0x40] sm:$0xff] %v263
  %331 = vst [vmem:[%s4 + $0x48] sm:$0xff] %v265
  %332 = vst [vmem:[%s4 + $0x50] sm:$0xff] %v268
  %333 = vst [vmem:[%s4 + $0x58] sm:$0xff] %v270
  %334 = vst [vmem:[%s4 + $0x60] sm:$0xff] %v273
  %335 = vst [vmem:[%s4 + $0x68] sm:$0xff] %v275
  %336 = vst [vmem:[%s4 + $0x70] sm:$0xff] %v278
  %337 = vst [vmem:[%s4 + $0x78] sm:$0xff] %v280
  %338 = vst [vmem:[%s4 + $0x80] sm:$0xff] %v283
  %339 = vst [vmem:[%s4 + $0x88] sm:$0xff] %v285
  %340 = vst [vmem:[%s4 + $0x90] sm:$0xff] %v288
  %341 = vst [vmem:[%s4 + $0x98] sm:$0xff] %v290
  %342 = vst [vmem:[%s4 + $0xa0] sm:$0xff] %v293
  %343 = vst [vmem:[%s4 + $0xa8] sm:$0xff] %v295
  %344 = vst [vmem:[%s4 + $0xb0] sm:$0xff] %v298
  %345 = vst [vmem:[%s4 + $0xb8] sm:$0xff] %v300
  %346 = vst [vmem:[%s4 + $0xc0] sm:$0xff] %v303
  %347 = vst [vmem:[%s4 + $0xc8] sm:$0xff] %v305
  %348 = vst [vmem:[%s4 + $0xd0] sm:$0xff] %v308
  %349 = vst [vmem:[%s4 + $0xd8] sm:$0xff] %v310
  %350 = vst [vmem:[%s4 + $0xe0] sm:$0xff] %v313
  %351 = vst [vmem:[%s4 + $0xe8] sm:$0xff] %v315
  %352 = vst [vmem:[%s4 + $0xf0] sm:$0xff] %v318
  %353 = vst [vmem:[%s4 + $0xf8] sm:$0xff] %v320
  // Predicated region
  $region18: #{preact_bottleneck_forward.6} parent=0 // pred_check
    _
  $region19: #{preact_bottleneck_forward.6} parent=0 // pred_check_branch
    %355 = sbr.rel (0) target = $region21
  $region20: #{preact_bottleneck_forward.6} parent=0 // pred_region
    _
  $region21: #{preact_bottleneck_forward.6} parent=0 // pred_fallthru
    _
  // Predicated region
  $region22: #{preact_bottleneck_forward.6} parent=0 // pred_check
    _
  $region23: #{preact_bottleneck_forward.6} parent=0 // pred_check_branch
    %357 = sbr.rel (0) target = $region25
  $region24: #{preact_bottleneck_forward.6} parent=0 // pred_region
    _
  $region25: #{preact_bottleneck_forward.6} parent=0 // pred_fallthru
    _

// kernel: preact_bottleneck_forward.7
$region0: #{preact_bottleneck_forward.7}
  #allocation0 [shape = 'u32[]', space=smem, size = 0x4, offset = 0x4, fixed_abs, tag = 'smem constant byte address 0x4 - core index']
  #allocation1 [shape = 'u32[72,128]{1,0:T(1,128)}', space=vmem, size = 0x9000, scoped, tag = 'internal scratch']
  %s0 = inlined_call_operand.vmem [shape: f32[256,128], index: 0, kind: input, shape index: {}]
  %s1 = inlined_call_operand.vmem [shape: f32[1,128], index: 1, kind: input, shape index: {}]
  %s2 = inlined_call_operand.vmem [shape: f32[1,128], index: 2, kind: input, shape index: {}]
  %s3 = inlined_call_operand.vmem [shape: bf16[128,128], index: 3, kind: input, shape index: {}]
  %s4 = inlined_call_operand.vmem [shape: f32[256,128], index: 4, kind: input, shape index: {}]
  %s5 = inlined_call_operand.vmem [shape: f32[256,128], index: 5, kind: output, shape index: {}]
  %s6 = sld [smem:[#allocation0]]
  $region30: #{preact_bottleneck_forward.7} parent=0
    _
  %s8 = ssub.s32 1, %s6
  %s9 = scalar_select 0, %s8, %s6
  // Predicated region
  $region2: #{preact_bottleneck_forward.7} parent=0 // pred_check
    _
  $region3: #{preact_bottleneck_forward.7} parent=0 // pred_check_branch
    %11 = sbr.rel (0) target = $region5
  $region4: #{preact_bottleneck_forward.7} parent=0 // pred_region
    _
  $region5: #{preact_bottleneck_forward.7} parent=0 // pred_fallthru
    _
  // Predicated region
  $region6: #{preact_bottleneck_forward.7} parent=0 // pred_check
    _
  $region7: #{preact_bottleneck_forward.7} parent=0 // pred_check_branch
    %13 = sbr.rel (0) target = $region9
  $region8: #{preact_bottleneck_forward.7} parent=0 // pred_region
    _
  $region9: #{preact_bottleneck_forward.7} parent=0 // pred_fallthru
    _
  // Predicated region
  $region10: #{preact_bottleneck_forward.7} parent=0 // pred_check
    _
  $region11: #{preact_bottleneck_forward.7} parent=0 // pred_check_branch
    %15 = sbr.rel (0) target = $region13
  $region12: #{preact_bottleneck_forward.7} parent=0 // pred_region
    _
  $region13: #{preact_bottleneck_forward.7} parent=0 // pred_fallthru
    _
  // Predicated region
  $region14: #{preact_bottleneck_forward.7} parent=0 // pred_check
    _
  $region15: #{preact_bottleneck_forward.7} parent=0 // pred_check_branch
    %17 = sbr.rel (0) target = $region17
  $region16: #{preact_bottleneck_forward.7} parent=0 // pred_region
    _
  $region17: #{preact_bottleneck_forward.7} parent=0 // pred_fallthru
    _
  // Predicated region
  $region18: #{preact_bottleneck_forward.7} parent=0 // pred_check
    _
  $region19: #{preact_bottleneck_forward.7} parent=0 // pred_check_branch
    %19 = sbr.rel (0) target = $region21
  $region20: #{preact_bottleneck_forward.7} parent=0 // pred_region
    _
  $region21: #{preact_bottleneck_forward.7} parent=0 // pred_fallthru
    _
  %v20 = vld [vmem:[%s0] sm:$0xff]
  %v21 = vld [vmem:[%s0 + $0x8] sm:$0xff]
  %v22 = vld [vmem:[%s0 + $0x10] sm:$0xff]
  %v23 = vld [vmem:[%s0 + $0x18] sm:$0xff]
  %v24 = vld [vmem:[%s0 + $0x20] sm:$0xff]
  %v25 = vld [vmem:[%s0 + $0x28] sm:$0xff]
  %v26 = vld [vmem:[%s0 + $0x30] sm:$0xff]
  %v27 = vld [vmem:[%s0 + $0x38] sm:$0xff]
  %v28 = vld [vmem:[%s0 + $0x40] sm:$0xff]
  %v29 = vld [vmem:[%s0 + $0x48] sm:$0xff]
  %v30 = vld [vmem:[%s0 + $0x50] sm:$0xff]
  %v31 = vld [vmem:[%s0 + $0x58] sm:$0xff]
  %v32 = vld [vmem:[%s0 + $0x60] sm:$0xff]
  %v33 = vld [vmem:[%s0 + $0x68] sm:$0xff]
  %v34 = vld [vmem:[%s0 + $0x70] sm:$0xff]
  %v35 = vld [vmem:[%s0 + $0x78] sm:$0xff]
  %v36 = vld [vmem:[%s0 + $0x80] sm:$0xff]
  %v37 = vld [vmem:[%s0 + $0x88] sm:$0xff]
  %v38 = vld [vmem:[%s0 + $0x90] sm:$0xff]
  %v39 = vld [vmem:[%s0 + $0x98] sm:$0xff]
  %v40 = vld [vmem:[%s0 + $0xa0] sm:$0xff]
  %v41 = vld [vmem:[%s0 + $0xa8] sm:$0xff]
  %v42 = vld [vmem:[%s0 + $0xb0] sm:$0xff]
  %v43 = vld [vmem:[%s0 + $0xb8] sm:$0xff]
  %v44 = vld [vmem:[%s0 + $0xc0] sm:$0xff]
  %v45 = vld [vmem:[%s0 + $0xc8] sm:$0xff]
  %v46 = vld [vmem:[%s0 + $0xd0] sm:$0xff]
  %v47 = vld [vmem:[%s0 + $0xd8] sm:$0xff]
  %v48 = vld [vmem:[%s0 + $0xe0] sm:$0xff]
  %v49 = vld [vmem:[%s0 + $0xe8] sm:$0xff]
  %v50 = vld [vmem:[%s0 + $0xf0] sm:$0xff]
  %v51 = vld [vmem:[%s0 + $0xf8] sm:$0xff]
  %v52 = vld [vmem:[%s1] sm:$0x1]
  %v54 = vperm.slane %v52, 0
  %v56 = vmul.f32 %v20, %v54
  %v57 = vmul.f32 %v21, %v54
  %v58 = vmul.f32 %v22, %v54
  %v59 = vmul.f32 %v23, %v54
  %v60 = vmul.f32 %v24, %v54
  %v61 = vmul.f32 %v25, %v54
  %v62 = vmul.f32 %v26, %v54
  %v63 = vmul.f32 %v27, %v54
  %v64 = vmul.f32 %v28, %v54
  %v65 = vmul.f32 %v29, %v54
  %v66 = vmul.f32 %v30, %v54
  %v67 = vmul.f32 %v31, %v54
  %v68 = vmul.f32 %v32, %v54
  %v69 = vmul.f32 %v33, %v54
  %v70 = vmul.f32 %v34, %v54
  %v71 = vmul.f32 %v35, %v54
  %v72 = vmul.f32 %v36, %v54
  %v73 = vmul.f32 %v37, %v54
  %v74 = vmul.f32 %v38, %v54
  %v75 = vmul.f32 %v39, %v54
  %v76 = vmul.f32 %v40, %v54
  %v77 = vmul.f32 %v41, %v54
  %v78 = vmul.f32 %v42, %v54
  %v79 = vmul.f32 %v43, %v54
  %v80 = vmul.f32 %v44, %v54
  %v81 = vmul.f32 %v45, %v54
  %v82 = vmul.f32 %v46, %v54
  %v83 = vmul.f32 %v47, %v54
  %v84 = vmul.f32 %v48, %v54
  %v85 = vmul.f32 %v49, %v54
  %v86 = vmul.f32 %v50, %v54
  %v87 = vmul.f32 %v51, %v54
  %v88 = vld [vmem:[%s2] sm:$0x1]
  %v90 = vperm.slane %v88, 0
  %v92 = vadd.f32 %v56, %v90
  %v93 = vadd.f32 %v57, %v90
  %v94 = vadd.f32 %v58, %v90
  %v95 = vadd.f32 %v59, %v90
  %v96 = vadd.f32 %v60, %v90
  %v97 = vadd.f32 %v61, %v90
  %v98 = vadd.f32 %v62, %v90
  %v99 = vadd.f32 %v63, %v90
  %v100 = vadd.f32 %v64, %v90
  %v101 = vadd.f32 %v65, %v90
  %v102 = vadd.f32 %v66, %v90
  %v103 = vadd.f32 %v67, %v90
  %v104 = vadd.f32 %v68, %v90
  %v105 = vadd.f32 %v69, %v90
  %v106 = vadd.f32 %v70, %v90
  %v107 = vadd.f32 %v71, %v90
  %v108 = vadd.f32 %v72, %v90
  %v109 = vadd.f32 %v73, %v90
  %v110 = vadd.f32 %v74, %v90
  %v111 = vadd.f32 %v75, %v90
  %v112 = vadd.f32 %v76, %v90
  %v113 = vadd.f32 %v77, %v90
  %v114 = vadd.f32 %v78, %v90
  %v115 = vadd.f32 %v79, %v90
  %v116 = vadd.f32 %v80, %v90
  %v117 = vadd.f32 %v81, %v90
  %v118 = vadd.f32 %v82, %v90
  %v119 = vadd.f32 %v83, %v90
  %v120 = vadd.f32 %v84, %v90
  %v121 = vadd.f32 %v85, %v90
  %v122 = vadd.f32 %v86, %v90
  %v123 = vadd.f32 %v87, %v90
  %v124 = vmax.f32 %v92, 0.0
  %v125 = vmax.f32 %v93, 0.0
  %v126 = vmax.f32 %v94, 0.0
  %v127 = vmax.f32 %v95, 0.0
  %v128 = vmax.f32 %v96, 0.0
  %v129 = vmax.f32 %v97, 0.0
  %v130 = vmax.f32 %v98, 0.0
  %v131 = vmax.f32 %v99, 0.0
  %v132 = vmax.f32 %v100, 0.0
  %v133 = vmax.f32 %v101, 0.0
  %v134 = vmax.f32 %v102, 0.0
  %v135 = vmax.f32 %v103, 0.0
  %v136 = vmax.f32 %v104, 0.0
  %v137 = vmax.f32 %v105, 0.0
  %v138 = vmax.f32 %v106, 0.0
  %v139 = vmax.f32 %v107, 0.0
  %v140 = vmax.f32 %v108, 0.0
  %v141 = vmax.f32 %v109, 0.0
  %v142 = vmax.f32 %v110, 0.0
  %v143 = vmax.f32 %v111, 0.0
  %v144 = vmax.f32 %v112, 0.0
  %v145 = vmax.f32 %v113, 0.0
  %v146 = vmax.f32 %v114, 0.0
  %v147 = vmax.f32 %v115, 0.0
  %v148 = vmax.f32 %v116, 0.0
  %v149 = vmax.f32 %v117, 0.0
  %v150 = vmax.f32 %v118, 0.0
  %v151 = vmax.f32 %v119, 0.0
  %v152 = vmax.f32 %v120, 0.0
  %v153 = vmax.f32 %v121, 0.0
  %v154 = vmax.f32 %v122, 0.0
  %v155 = vmax.f32 %v123, 0.0
  %v156 = vpack.c.bf16 %v125, %v124
  %v157 = vpack.c.bf16 %v127, %v126
  %v158 = vpack.c.bf16 %v129, %v128
  %v159 = vpack.c.bf16 %v131, %v130
  %v160 = vpack.c.bf16 %v133, %v132
  %v161 = vpack.c.bf16 %v135, %v134
  %v162 = vpack.c.bf16 %v137, %v136
  %v163 = vpack.c.bf16 %v139, %v138
  %v164 = vpack.c.bf16 %v141, %v140
  %v165 = vpack.c.bf16 %v143, %v142
  %v166 = vpack.c.bf16 %v145, %v144
  %v167 = vpack.c.bf16 %v147, %v146
  %v168 = vpack.c.bf16 %v149, %v148
  %v169 = vpack.c.bf16 %v151, %v150
  %v170 = vpack.c.bf16 %v153, %v152
  %v171 = vpack.c.bf16 %v155, %v154
  %v172 = vld [vmem:[%s3] sm:$0xf]
  %v173 = vld [vmem:[%s3 + $0x4] sm:$0xf]
  %v174 = vld [vmem:[%s3 + $0x8] sm:$0xf]
  %v175 = vld [vmem:[%s3 + $0xc] sm:$0xf]
  %v176 = vld [vmem:[%s3 + $0x10] sm:$0xf]
  %v177 = vld [vmem:[%s3 + $0x14] sm:$0xf]
  %v178 = vld [vmem:[%s3 + $0x18] sm:$0xf]
  %v179 = vld [vmem:[%s3 + $0x1c] sm:$0xf]
  %v180 = vld [vmem:[%s3 + $0x20] sm:$0xf]
  %v181 = vld [vmem:[%s3 + $0x24] sm:$0xf]
  %v182 = vld [vmem:[%s3 + $0x28] sm:$0xf]
  %v183 = vld [vmem:[%s3 + $0x2c] sm:$0xf]
  %v184 = vld [vmem:[%s3 + $0x30] sm:$0xf]
  %v185 = vld [vmem:[%s3 + $0x34] sm:$0xf]
  %v186 = vld [vmem:[%s3 + $0x38] sm:$0xf]
  %v187 = vld [vmem:[%s3 + $0x3c] sm:$0xf]
  %v188 = vld [vmem:[%s4] sm:$0xff]
  %v189 = vld [vmem:[%s4 + $0x8] sm:$0xff]
  %v190 = vld [vmem:[%s4 + $0x10] sm:$0xff]
  %v191 = vld [vmem:[%s4 + $0x18] sm:$0xff]
  %v192 = vld [vmem:[%s4 + $0x20] sm:$0xff]
  %v193 = vld [vmem:[%s4 + $0x28] sm:$0xff]
  %v194 = vld [vmem:[%s4 + $0x30] sm:$0xff]
  %v195 = vld [vmem:[%s4 + $0x38] sm:$0xff]
  %v196 = vld [vmem:[%s4 + $0x40] sm:$0xff]
  %v197 = vld [vmem:[%s4 + $0x48] sm:$0xff]
  %v198 = vld [vmem:[%s4 + $0x50] sm:$0xff]
  %v199 = vld [vmem:[%s4 + $0x58] sm:$0xff]
  %v200 = vld [vmem:[%s4 + $0x60] sm:$0xff]
  %v201 = vld [vmem:[%s4 + $0x68] sm:$0xff]
  %v202 = vld [vmem:[%s4 + $0x70] sm:$0xff]
  %v203 = vld [vmem:[%s4 + $0x78] sm:$0xff]
  %v204 = vld [vmem:[%s4 + $0x80] sm:$0xff]
  %v205 = vld [vmem:[%s4 + $0x88] sm:$0xff]
  %v206 = vld [vmem:[%s4 + $0x90] sm:$0xff]
  %v207 = vld [vmem:[%s4 + $0x98] sm:$0xff]
  %v208 = vld [vmem:[%s4 + $0xa0] sm:$0xff]
  %v209 = vld [vmem:[%s4 + $0xa8] sm:$0xff]
  %v210 = vld [vmem:[%s4 + $0xb0] sm:$0xff]
  %v211 = vld [vmem:[%s4 + $0xb8] sm:$0xff]
  %v212 = vld [vmem:[%s4 + $0xc0] sm:$0xff]
  %v213 = vld [vmem:[%s4 + $0xc8] sm:$0xff]
  %v214 = vld [vmem:[%s4 + $0xd0] sm:$0xff]
  %v215 = vld [vmem:[%s4 + $0xd8] sm:$0xff]
  %v216 = vld [vmem:[%s4 + $0xe0] sm:$0xff]
  %v217 = vld [vmem:[%s4 + $0xe8] sm:$0xff]
  %v218 = vld [vmem:[%s4 + $0xf0] sm:$0xff]
  %v219 = vld [vmem:[%s4 + $0xf8] sm:$0xff]
  %v236 = vunpack.c.l.b16 %v172
  %v237 = vunpack.c.l.b16 %v173
  %v238 = vunpack.c.l.b16 %v174
  %v239 = vunpack.c.l.b16 %v175
  %v240 = vunpack.c.l.b16 %v176
  %v241 = vunpack.c.l.b16 %v177
  %v242 = vunpack.c.l.b16 %v178
  %v243 = vunpack.c.l.b16 %v179
  %v244 = vunpack.c.l.b16 %v180
  %v245 = vunpack.c.l.b16 %v181
  %v246 = vunpack.c.l.b16 %v182
  %v247 = vunpack.c.l.b16 %v183
  %v248 = vunpack.c.l.b16 %v184
  %v249 = vunpack.c.l.b16 %v185
  %v250 = vunpack.c.l.b16 %v186
  %v251 = vunpack.c.l.b16 %v187
  %v252 = vpack.c.b16 %v237, %v236
  %v253 = vpack.c.b16 %v239, %v238
  %v254 = vpack.c.b16 %v241, %v240
  %v255 = vpack.c.b16 %v243, %v242
  %v256 = vpack.c.b16 %v245, %v244
  %v257 = vpack.c.b16 %v247, %v246
  %v258 = vpack.c.b16 %v249, %v248
  %v259 = vpack.c.b16 %v251, %v250
  %268 = vmatpush.bf16.msra.mxu0 %v259
  %269 = vmatpush.bf16.msra.mxu0 %v258
  %270 = vmatpush.bf16.msra.mxu0 %v257
  %271 = vmatpush.bf16.msra.mxu0 %v256
  %272 = vmatpush.bf16.msra.mxu0 %v255
  %273 = vmatpush.bf16.msra.mxu0 %v254
  %274 = vmatpush.bf16.msra.mxu0 %v253
  %275 = vmatpush.bf16.msra.mxu0 %v252
  %276 = vmatmul.bf16.gmra.mxu0 %v156
  %v277 = vpop.f32.mrf.mxu0
  %v278 = vadd.f32 %v188, %v277
  %v279 = vpop.f32.mrf.mxu0
  %v280 = vadd.f32 %v189, %v279
  %281 = vmatmul.bf16.gmra.mxu0 %v157
  %v282 = vpop.f32.mrf.mxu0
  %v283 = vadd.f32 %v190, %v282
  %v284 = vpop.f32.mrf.mxu0
  %v285 = vadd.f32 %v191, %v284
  %286 = vmatmul.bf16.gmra.mxu0 %v158
  %v287 = vpop.f32.mrf.mxu0
  %v288 = vadd.f32 %v192, %v287
  %v289 = vpop.f32.mrf.mxu0
  %v290 = vadd.f32 %v193, %v289
  %291 = vmatmul.bf16.gmra.mxu0 %v159
  %v292 = vpop.f32.mrf.mxu0
  %v293 = vadd.f32 %v194, %v292
  %v294 = vpop.f32.mrf.mxu0
  %v295 = vadd.f32 %v195, %v294
  %296 = vmatmul.bf16.gmra.mxu0 %v160
  %v297 = vpop.f32.mrf.mxu0
  %v298 = vadd.f32 %v196, %v297
  %v299 = vpop.f32.mrf.mxu0
  %v300 = vadd.f32 %v197, %v299
  %301 = vmatmul.bf16.gmra.mxu0 %v161
  %v302 = vpop.f32.mrf.mxu0
  %v303 = vadd.f32 %v198, %v302
  %v304 = vpop.f32.mrf.mxu0
  %v305 = vadd.f32 %v199, %v304
  %306 = vmatmul.bf16.gmra.mxu0 %v162
  %v307 = vpop.f32.mrf.mxu0
  %v308 = vadd.f32 %v200, %v307
  %v309 = vpop.f32.mrf.mxu0
  %v310 = vadd.f32 %v201, %v309
  %311 = vmatmul.bf16.gmra.mxu0 %v163
  %v312 = vpop.f32.mrf.mxu0
  %v313 = vadd.f32 %v202, %v312
  %v314 = vpop.f32.mrf.mxu0
  %v315 = vadd.f32 %v203, %v314
  %316 = vmatmul.bf16.gmra.mxu0 %v164
  %v317 = vpop.f32.mrf.mxu0
  %v318 = vadd.f32 %v204, %v317
  %v319 = vpop.f32.mrf.mxu0
  %v320 = vadd.f32 %v205, %v319
  %321 = vmatmul.bf16.gmra.mxu0 %v165
  %v322 = vpop.f32.mrf.mxu0
  %v323 = vadd.f32 %v206, %v322
  %v324 = vpop.f32.mrf.mxu0
  %v325 = vadd.f32 %v207, %v324
  %326 = vmatmul.bf16.gmra.mxu0 %v166
  %v327 = vpop.f32.mrf.mxu0
  %v328 = vadd.f32 %v208, %v327
  %v329 = vpop.f32.mrf.mxu0
  %v330 = vadd.f32 %v209, %v329
  %331 = vmatmul.bf16.gmra.mxu0 %v167
  %v332 = vpop.f32.mrf.mxu0
  %v333 = vadd.f32 %v210, %v332
  %v334 = vpop.f32.mrf.mxu0
  %v335 = vadd.f32 %v211, %v334
  %336 = vmatmul.bf16.gmra.mxu0 %v168
  %v337 = vpop.f32.mrf.mxu0
  %v338 = vadd.f32 %v212, %v337
  %v339 = vpop.f32.mrf.mxu0
  %v340 = vadd.f32 %v213, %v339
  %341 = vmatmul.bf16.gmra.mxu0 %v169
  %v342 = vpop.f32.mrf.mxu0
  %v343 = vadd.f32 %v214, %v342
  %v344 = vpop.f32.mrf.mxu0
  %v345 = vadd.f32 %v215, %v344
  %346 = vmatmul.bf16.gmra.mxu0 %v170
  %v347 = vpop.f32.mrf.mxu0
  %v348 = vadd.f32 %v216, %v347
  %v349 = vpop.f32.mrf.mxu0
  %v350 = vadd.f32 %v217, %v349
  %351 = vmatmul.bf16.gmra.mxu0 %v171
  %v352 = vpop.f32.mrf.mxu0
  %v353 = vadd.f32 %v218, %v352
  %v354 = vpop.f32.mrf.mxu0
  %v355 = vadd.f32 %v219, %v354
  %356 = vdwg.mxu0
  %357 = vst [vmem:[%s5] sm:$0xff] %v278
  %358 = vst [vmem:[%s5 + $0x8] sm:$0xff] %v280
  %359 = vst [vmem:[%s5 + $0x10] sm:$0xff] %v283
  %360 = vst [vmem:[%s5 + $0x18] sm:$0xff] %v285
  %361 = vst [vmem:[%s5 + $0x20] sm:$0xff] %v288
  %362 = vst [vmem:[%s5 + $0x28] sm:$0xff] %v290
  %363 = vst [vmem:[%s5 + $0x30] sm:$0xff] %v293
  %364 = vst [vmem:[%s5 + $0x38] sm:$0xff] %v295
  %365 = vst [vmem:[%s5 + $0x40] sm:$0xff] %v298
  %366 = vst [vmem:[%s5 + $0x48] sm:$0xff] %v300
  %367 = vst [vmem:[%s5 + $0x50] sm:$0xff] %v303
  %368 = vst [vmem:[%s5 + $0x58] sm:$0xff] %v305
  %369 = vst [vmem:[%s5 + $0x60] sm:$0xff] %v308
  %370 = vst [vmem:[%s5 + $0x68] sm:$0xff] %v310
  %371 = vst [vmem:[%s5 + $0x70] sm:$0xff] %v313
  %372 = vst [vmem:[%s5 + $0x78] sm:$0xff] %v315
  %373 = vst [vmem:[%s5 + $0x80] sm:$0xff] %v318
  %374 = vst [vmem:[%s5 + $0x88] sm:$0xff] %v320
  %375 = vst [vmem:[%s5 + $0x90] sm:$0xff] %v323
  %376 = vst [vmem:[%s5 + $0x98] sm:$0xff] %v325
  %377 = vst [vmem:[%s5 + $0xa0] sm:$0xff] %v328
  %378 = vst [vmem:[%s5 + $0xa8] sm:$0xff] %v330
  %379 = vst [vmem:[%s5 + $0xb0] sm:$0xff] %v333
  %380 = vst [vmem:[%s5 + $0xb8] sm:$0xff] %v335
  %381 = vst [vmem:[%s5 + $0xc0] sm:$0xff] %v338
  %382 = vst [vmem:[%s5 + $0xc8] sm:$0xff] %v340
  %383 = vst [vmem:[%s5 + $0xd0] sm:$0xff] %v343
  %384 = vst [vmem:[%s5 + $0xd8] sm:$0xff] %v345
  %385 = vst [vmem:[%s5 + $0xe0] sm:$0xff] %v348
  %386 = vst [vmem:[%s5 + $0xe8] sm:$0xff] %v350
  %387 = vst [vmem:[%s5 + $0xf0] sm:$0xff] %v353
  %388 = vst [vmem:[%s5 + $0xf8] sm:$0xff] %v355
  // Predicated region
  $region22: #{preact_bottleneck_forward.7} parent=0 // pred_check
    _
  $region23: #{preact_bottleneck_forward.7} parent=0 // pred_check_branch
    %390 = sbr.rel (0) target = $region25
  $region24: #{preact_bottleneck_forward.7} parent=0 // pred_region
    _
  $region25: #{preact_bottleneck_forward.7} parent=0 // pred_fallthru
    _
  // Predicated region
  $region26: #{preact_bottleneck_forward.7} parent=0 // pred_check
    _
  $region27: #{preact_bottleneck_forward.7} parent=0 // pred_check_branch
    %392 = sbr.rel (0) target = $region29
  $region28: #{preact_bottleneck_forward.7} parent=0 // pred_region
    _
  $region29: #{preact_bottleneck_forward.7} parent=0 // pred_fallthru
    _

// kernel: preact_bottleneck_forward.5
$region0: #{preact_bottleneck_forward.5}
  #allocation0 [shape = 'u32[]', space=smem, size = 0x4, offset = 0x4, fixed_abs, tag = 'smem constant byte address 0x4 - core index']
  #allocation1 [shape = 'u32[72,128]{1,0:T(1,128)}', space=vmem, size = 0x9000, scoped, tag = 'internal scratch']
  #allocation2 [shape = 'f32[176,128]{1,0:T(8,128)}', space=vmem, size = 0x16000, scoped, tag = 'scratch operand']
  %s0 = inlined_call_operand.vmem [shape: f32[2,144,128], index: 0, kind: input, shape index: {}]
  %s1 = inlined_call_operand.vmem [shape: f32[1,128], index: 1, kind: input, shape index: {}]
  %s2 = inlined_call_operand.vmem [shape: f32[1,128], index: 2, kind: input, shape index: {}]
  %s3 = inlined_call_operand.vmem [shape: f32[144,1], index: 3, kind: input, shape index: {}]
  %s4 = inlined_call_operand.vmem [shape: f32[144,1], index: 4, kind: input, shape index: {}]
  %s5 = inlined_call_operand.vmem [shape: bf16[9,128,128], index: 5, kind: input, shape index: {}]
  %s6 = inlined_call_operand.vmem [shape: f32[2,144,128], index: 6, kind: output, shape index: {}]
  %s7 = sld [smem:[#allocation0]]
  $region57: #{preact_bottleneck_forward.5} parent=0
    _
  %s9 = ssub.s32 1, %s7
  %s10 = scalar_select 0, %s9, %s7
  loop: start=0, step=1, limit=4
  $region2: #{preact_bottleneck_forward.5} parent=0 // loop_pre_header
    _
  $region3: #{preact_bottleneck_forward.5} parent=0 // loop_header
    %s12 = sphi 0, %s16
    %p13 = scmp.ge.s32.totalorder %s12, 4
    %s22 = sphi 0, %s24
    %s25 = sphi 0, %s22
    %s26 = sphi 0, %s25
    %s42 = sphi 0, %s26
    %s46 = sphi 0, %s46
    %s48 = sphi 0, %s46
    %s49 = sphi 0, %s48
    %s63 = sphi 0, %s49
    %s67 = sphi 0, %s67
    %s69 = sphi 0, %s67
    %s70 = sphi 0, %s69
    %s84 = sphi 0, %s70
    %s88 = sphi 0, %s88
    %s90 = sphi 0, %s88
    %s91 = sphi 0, %s90
    %s105 = sphi 0, %s91
    %s109 = sphi 0, %s109
    %s111 = sphi 0, %s109
    %s112 = sphi 0, %s111
    %s126 = sphi 0, %s112
    %s130 = sphi 0, %s130
    %s132 = sphi 0, %s130
    %s133 = sphi 0, %s132
    %s147 = sphi 0, %s133
    %s153 = sphi 0, %s155
    %s156 = sphi 0, %s153
    %s157 = sphi 0, %s156
    %s173 = sphi 0, %s157
  $region4: #{preact_bottleneck_forward.5} parent=0 // loop_header_branch
    %15 = sbr.rel (%p13) target = $region8
  $region5: #{preact_bottleneck_forward.5} parent=0 // loop_body
    %s17 = ssub.s32 %s12, 1
    %s18 = ssub.s32 %s12, 2
    %s19 = sadd.s32 %s12, 1
    %s20 = ssub.s32 %s12, %s19
    %p21 = scmp.eq.s32.totalorder %s20, 0
    %s23 = sadd.s32 %s22, 1
    %s24 = scalar_select %p21, %s22, %s23
    %p27 = pneg %p21
    %p28 = scmp.eq.s32.totalorder %s12, 1
    %p29 = por %p27, %p28
    %p30 = scmp.ne.s32.totalorder %s22, %s25
    %p31 = scmp.eq.s32.totalorder %s12, 0
    %p32 = por %p30, %p31
    %p33 = scmp.ne.s32.totalorder %s22, %s25
    %p34 = scmp.eq.s32.totalorder %s17, 1
    %p35 = por %p33, %p34
    %p36 = scmp.ne.s32.totalorder %s25, %s26
    %p37 = scmp.eq.s32.totalorder %s17, 0
    %p38 = por %p36, %p37
    %p39 = scmp.ne.s32.totalorder %s25, %s26
    %p40 = scmp.eq.s32.totalorder %s18, 1
    %p41 = por %p39, %p40
    %p43 = scmp.ne.s32.totalorder %s26, %s42
    %p44 = scmp.eq.s32.totalorder %s18, 0
    %p45 = por %p43, %p44
    %s47 = sadd.s32 %s46, 1
    %p50 = scmp.eq.s32.totalorder %s12, 1
    %p51 = scmp.ne.s32.totalorder %s46, %s48
    %p52 = scmp.eq.s32.totalorder %s12, 0
    %p53 = por %p51, %p52
    %p54 = scmp.ne.s32.totalorder %s46, %s48
    %p55 = scmp.eq.s32.totalorder %s17, 1
    %p56 = por %p54, %p55
    %p57 = scmp.ne.s32.totalorder %s48, %s49
    %p58 = scmp.eq.s32.totalorder %s17, 0
    %p59 = por %p57, %p58
    %p60 = scmp.ne.s32.totalorder %s48, %s49
    %p61 = scmp.eq.s32.totalorder %s18, 1
    %p62 = por %p60, %p61
    %p64 = scmp.ne.s32.totalorder %s49, %s63
    %p65 = scmp.eq.s32.totalorder %s18, 0
    %p66 = por %p64, %p65
    %s68 = sadd.s32 %s67, 1
    %p71 = scmp.eq.s32.totalorder %s12, 1
    %p72 = scmp.ne.s32.totalorder %s67, %s69
    %p73 = scmp.eq.s32.totalorder %s12, 0
    %p74 = por %p72, %p73
    %p75 = scmp.ne.s32.totalorder %s67, %s69
    %p76 = scmp.eq.s32.totalorder %s17, 1
    %p77 = por %p75, %p76
    %p78 = scmp.ne.s32.totalorder %s69, %s70
    %p79 = scmp.eq.s32.totalorder %s17, 0
    %p80 = por %p78, %p79
    %p81 = scmp.ne.s32.totalorder %s69, %s70
    %p82 = scmp.eq.s32.totalorder %s18, 1
    %p83 = por %p81, %p82
    %p85 = scmp.ne.s32.totalorder %s70, %s84
    %p86 = scmp.eq.s32.totalorder %s18, 0
    %p87 = por %p85, %p86
    %s89 = sadd.s32 %s88, 1
    %p92 = scmp.eq.s32.totalorder %s12, 1
    %p93 = scmp.ne.s32.totalorder %s88, %s90
    %p94 = scmp.eq.s32.totalorder %s12, 0
    %p95 = por %p93, %p94
    %p96 = scmp.ne.s32.totalorder %s88, %s90
    %p97 = scmp.eq.s32.totalorder %s17, 1
    %p98 = por %p96, %p97
    %p99 = scmp.ne.s32.totalorder %s90, %s91
    %p100 = scmp.eq.s32.totalorder %s17, 0
    %p101 = por %p99, %p100
    %p102 = scmp.ne.s32.totalorder %s90, %s91
    %p103 = scmp.eq.s32.totalorder %s18, 1
    %p104 = por %p102, %p103
    %p106 = scmp.ne.s32.totalorder %s91, %s105
    %p107 = scmp.eq.s32.totalorder %s18, 0
    %p108 = por %p106, %p107
    %s110 = sadd.s32 %s109, 1
    %p113 = scmp.eq.s32.totalorder %s12, 1
    %p114 = scmp.ne.s32.totalorder %s109, %s111
    %p115 = scmp.eq.s32.totalorder %s12, 0
    %p116 = por %p114, %p115
    %p117 = scmp.ne.s32.totalorder %s109, %s111
    %p118 = scmp.eq.s32.totalorder %s17, 1
    %p119 = por %p117, %p118
    %p120 = scmp.ne.s32.totalorder %s111, %s112
    %p121 = scmp.eq.s32.totalorder %s17, 0
    %p122 = por %p120, %p121
    %p123 = scmp.ne.s32.totalorder %s111, %s112
    %p124 = scmp.eq.s32.totalorder %s18, 1
    %p125 = por %p123, %p124
    %p127 = scmp.ne.s32.totalorder %s112, %s126
    %p128 = scmp.eq.s32.totalorder %s18, 0
    %p129 = por %p127, %p128
    %s131 = sadd.s32 %s130, 1
    %p134 = scmp.eq.s32.totalorder %s12, 1
    %p135 = scmp.ne.s32.totalorder %s130, %s132
    %p136 = scmp.eq.s32.totalorder %s12, 0
    %p137 = por %p135, %p136
    %p138 = scmp.ne.s32.totalorder %s130, %s132
    %p139 = scmp.eq.s32.totalorder %s17, 1
    %p140 = por %p138, %p139
    %p141 = scmp.ne.s32.totalorder %s132, %s133
    %p142 = scmp.eq.s32.totalorder %s17, 0
    %p143 = por %p141, %p142
    %p144 = scmp.ne.s32.totalorder %s132, %s133
    %p145 = scmp.eq.s32.totalorder %s18, 1
    %p146 = por %p144, %p145
    %p148 = scmp.ne.s32.totalorder %s133, %s147
    %p149 = scmp.eq.s32.totalorder %s18, 0
    %p150 = por %p148, %p149
    %s151 = ssub.s32 %s12, %s19
    %p152 = scmp.eq.s32.totalorder %s151, 0
    %s154 = sadd.s32 %s153, 1
    %s155 = scalar_select %p152, %s153, %s154
    %p158 = pneg %p152
    %p159 = scmp.eq.s32.totalorder %s12, 1
    %p160 = por %p158, %p159
    %p161 = scmp.ne.s32.totalorder %s153, %s156
    %p162 = scmp.eq.s32.totalorder %s12, 0
    %p163 = por %p161, %p162
    %p164 = scmp.ne.s32.totalorder %s153, %s156
    %p165 = scmp.eq.s32.totalorder %s17, 1
    %p166 = por %p164, %p165
    %p167 = scmp.ne.s32.totalorder %s156, %s157
    %p168 = scmp.eq.s32.totalorder %s17, 0
    %p169 = por %p167, %p168
    %p170 = scmp.ne.s32.totalorder %s156, %s157
    %p171 = scmp.eq.s32.totalorder %s18, 1
    %p172 = por %p170, %p171
    %p174 = scmp.ne.s32.totalorder %s157, %s173
    %p175 = scmp.eq.s32.totalorder %s18, 0
    %p176 = por %p174, %p175
    %p177 = scmp.le.s32.totalorder 1, %s12
    %p178 = scmp.lt.s32.totalorder %s12, 3
    %p179 = pnand %p177, %p178
    %p180 = pneg %p179
    // Predicated region
    $region9: #{preact_bottleneck_forward.5} parent=5 // pred_check
      _
    $region10: #{preact_bottleneck_forward.5} parent=5 // pred_check_branch
      %182 = sbr.rel (%p179) target = $region12
    $region11: #{preact_bottleneck_forward.5} parent=5 // pred_region
      %s183 = ssub.s32 %s12, 1
      // Predicated region
      $region13: #{preact_bottleneck_forward.5} parent=11 // pred_check
        %p184 = pneg %p59
      $region14: #{preact_bottleneck_forward.5} parent=11 // pred_check_branch
        %186 = sbr.rel (%p184) target = $region16
      $region15: #{preact_bottleneck_forward.5} parent=11 // pred_region
        _
      $region16: #{preact_bottleneck_forward.5} parent=11 // pred_fallthru
        _
      // Predicated region
      $region17: #{preact_bottleneck_forward.5} parent=11 // pred_check
        %p187 = pneg %p80
      $region18: #{preact_bottleneck_forward.5} parent=11 // pred_check_branch
        %189 = sbr.rel (%p187) target = $region20
      $region19: #{preact_bottleneck_forward.5} parent=11 // pred_region
        _
      $region20: #{preact_bottleneck_forward.5} parent=11 // pred_fallthru
        _
      // Predicated region
      $region21: #{preact_bottleneck_forward.5} parent=11 // pred_check
        %p190 = pneg %p101
      $region22: #{preact_bottleneck_forward.5} parent=11 // pred_check_branch
        %192 = sbr.rel (%p190) target = $region24
      $region23: #{preact_bottleneck_forward.5} parent=11 // pred_region
        _
      $region24: #{preact_bottleneck_forward.5} parent=11 // pred_fallthru
        _
      // Predicated region
      $region25: #{preact_bottleneck_forward.5} parent=11 // pred_check
        %p193 = pneg %p122
      $region26: #{preact_bottleneck_forward.5} parent=11 // pred_check_branch
        %195 = sbr.rel (%p193) target = $region28
      $region27: #{preact_bottleneck_forward.5} parent=11 // pred_region
        _
      $region28: #{preact_bottleneck_forward.5} parent=11 // pred_fallthru
        _
      // Predicated region
      $region29: #{preact_bottleneck_forward.5} parent=11 // pred_check
        %p196 = pneg %p143
      $region30: #{preact_bottleneck_forward.5} parent=11 // pred_check_branch
        %198 = sbr.rel (%p196) target = $region32
      $region31: #{preact_bottleneck_forward.5} parent=11 // pred_region
        _
      $region32: #{preact_bottleneck_forward.5} parent=11 // pred_fallthru
        _
    $region12: #{preact_bottleneck_forward.5} parent=5 // pred_fallthru
      _
    %p199 = scmp.lt.s32.totalorder %s12, 2
    // Predicated region
    $region33: #{preact_bottleneck_forward.5} parent=5 // pred_check
      %p200 = pneg %p199
    $region34: #{preact_bottleneck_forward.5} parent=5 // pred_check_branch
      %202 = sbr.rel (%p200) target = $region36
    $region35: #{preact_bottleneck_forward.5} parent=5 // pred_region
      // Predicated region
      $region37: #{preact_bottleneck_forward.5} parent=35 // pred_check
        %p203 = pneg %p32
      $region38: #{preact_bottleneck_forward.5} parent=35 // pred_check_branch
        %205 = sbr.rel (%p203) target = $region40
      $region39: #{preact_bottleneck_forward.5} parent=35 // pred_region
        %p206 = scmp.lt.s32.totalorder %s12, 1
        %s207 = scalar_select %p206, %s12, 1
        %s208 = smul.addr %s207, 18
        %s209 = smul.addr %s208, 8
        %s210 = scalar_lea.vmem %s0, %s209
      $region40: #{preact_bottleneck_forward.5} parent=35 // pred_fallthru
        _
    $region36: #{preact_bottleneck_forward.5} parent=5 // pred_fallthru
      _
    %p211 = scmp.le.s32.totalorder 1, %s12
    %p212 = scmp.lt.s32.totalorder %s12, 3
    %p213 = pnand %p211, %p212
    %p214 = pneg %p213
    // Predicated region
    $region41: #{preact_bottleneck_forward.5} parent=5 // pred_check
      _
    $region42: #{preact_bottleneck_forward.5} parent=5 // pred_check_branch
      %216 = sbr.rel (%p213) target = $region44
    $region43: #{preact_bottleneck_forward.5} parent=5 // pred_region
      %s217 = ssub.s32 %s12, 1
      %p218 = scmp.lt.s32.totalorder %s17, 1
      %s219 = scalar_select %p218, %s17, 1
      %s220 = smul.addr %s219, 18
      %s221 = smul.addr %s220, 8
      %s222 = scalar_lea.vmem %s0, %s221
      %p223 = pneg %p38
      %p224 = pneg %p35
      %p225 = pneg %p59
      %p226 = pneg %p56
      %p227 = pneg %p80
      %p228 = pneg %p77
      %p229 = pneg %p101
      %p230 = pneg %p98
      %p231 = pneg %p122
      %p232 = pneg %p119
      %p233 = pneg %p143
      %p234 = pneg %p140
      %p235 = pneg %p169
      %p236 = pneg %p166
      %p237 = scmp.lt.s32.totalorder %s17, 1
      %s238 = scalar_select %p237, %s17, 1
      %s239 = smul.addr %s238, 18
      %s240 = smul.addr %s239, 8
      %s241 = scalar_lea.vmem %s6, %s240
      %p242 = scmp.lt.s32.totalorder %s17, 1
      %s243 = scalar_select %p242, %s17, 1
      %s244 = smul.addr %s243, 18
      %s245 = smul.addr %s244, 8
      %s246 = scalar_lea.vmem %s0, %s245
      %p247 = scmp.lt.s32.totalorder %s17, 1
      %s248 = scalar_select %p247, %s17, 1
      %s249 = smul.addr %s248, 18
      %s250 = smul.addr %s249, 8
      %s251 = scalar_lea.vmem %s6, %s250
      %v252 = vld [vmem:[%s246] sm:$0xff]
      %v253 = vld [vmem:[%s246 + $0x8] sm:$0xff]
      %v254 = vld [vmem:[%s246 + $0x10] sm:$0xff]
      %v255 = vld [vmem:[%s246 + $0x18] sm:$0xff]
      %v256 = vld [vmem:[%s246 + $0x20] sm:$0xff]
      %v257 = vld [vmem:[%s246 + $0x28] sm:$0xff]
      %v258 = vld [vmem:[%s246 + $0x30] sm:$0xff]
      %v259 = vld [vmem:[%s246 + $0x38] sm:$0xff]
      %v260 = vld [vmem:[%s246 + $0x40] sm:$0xff]
      %v261 = vld [vmem:[%s246 + $0x48] sm:$0xff]
      %v262 = vld [vmem:[%s246 + $0x50] sm:$0xff]
      %v263 = vld [vmem:[%s246 + $0x58] sm:$0xff]
      %v264 = vld [vmem:[%s246 + $0x60] sm:$0xff]
      %v265 = vld [vmem:[%s246 + $0x68] sm:$0xff]
      %v266 = vld [vmem:[%s246 + $0x70] sm:$0xff]
      %v267 = vld [vmem:[%s246 + $0x78] sm:$0xff]
      %v268 = vld [vmem:[%s246 + $0x80] sm:$0xff]
      %v269 = vld [vmem:[%s246 + $0x88] sm:$0xff]
      %v270 = vld [vmem:[%s1] sm:$0x1]
      %v272 = vperm.slane %v270, 0
      %v274 = vmul.f32 %v252, %v272
      %v275 = vmul.f32 %v253, %v272
      %v276 = vmul.f32 %v254, %v272
      %v277 = vmul.f32 %v255, %v272
      %v278 = vmul.f32 %v256, %v272
      %v279 = vmul.f32 %v257, %v272
      %v280 = vmul.f32 %v258, %v272
      %v281 = vmul.f32 %v259, %v272
      %v282 = vmul.f32 %v260, %v272
      %v283 = vmul.f32 %v261, %v272
      %v284 = vmul.f32 %v262, %v272
      %v285 = vmul.f32 %v263, %v272
      %v286 = vmul.f32 %v264, %v272
      %v287 = vmul.f32 %v265, %v272
      %v288 = vmul.f32 %v266, %v272
      %v289 = vmul.f32 %v267, %v272
      %v290 = vmul.f32 %v268, %v272
      %v291 = vmul.f32 %v269, %v272
      %v292 = vld [vmem:[%s2] sm:$0x1]
      %v294 = vperm.slane %v292, 0
      %v296 = vadd.f32 %v274, %v294
      %v297 = vadd.f32 %v275, %v294
      %v298 = vadd.f32 %v276, %v294
      %v299 = vadd.f32 %v277, %v294
      %v300 = vadd.f32 %v278, %v294
      %v301 = vadd.f32 %v279, %v294
      %v302 = vadd.f32 %v280, %v294
      %v303 = vadd.f32 %v281, %v294
      %v304 = vadd.f32 %v282, %v294
      %v305 = vadd.f32 %v283, %v294
      %v306 = vadd.f32 %v284, %v294
      %v307 = vadd.f32 %v285, %v294
      %v308 = vadd.f32 %v286, %v294
      %v309 = vadd.f32 %v287, %v294
      %v310 = vadd.f32 %v288, %v294
      %v311 = vadd.f32 %v289, %v294
      %v312 = vadd.f32 %v290, %v294
      %v313 = vadd.f32 %v291, %v294
      %v314 = vmax.f32 %v296, 0.0
      %v315 = vmax.f32 %v297, 0.0
      %v316 = vmax.f32 %v298, 0.0
      %v317 = vmax.f32 %v299, 0.0
      %v318 = vmax.f32 %v300, 0.0
      %v319 = vmax.f32 %v301, 0.0
      %v320 = vmax.f32 %v302, 0.0
      %v321 = vmax.f32 %v303, 0.0
      %v322 = vmax.f32 %v304, 0.0
      %v323 = vmax.f32 %v305, 0.0
      %v324 = vmax.f32 %v306, 0.0
      %v325 = vmax.f32 %v307, 0.0
      %v326 = vmax.f32 %v308, 0.0
      %v327 = vmax.f32 %v309, 0.0
      %v328 = vmax.f32 %v310, 0.0
      %v329 = vmax.f32 %v311, 0.0
      %v330 = vmax.f32 %v312, 0.0
      %v331 = vmax.f32 %v313, 0.0
      %332 = vst [vmem:[#allocation2] sm:$0xff] 0.0
      %333 = vst [vmem:[#allocation2 + $0x8] sm:$0xff] 0.0
      %334 = vst [vmem:[#allocation2 + $0x10] sm:$0xff] %v314
      %335 = vst [vmem:[#allocation2 + $0x18] sm:$0xff] %v315
      %336 = vst [vmem:[#allocation2 + $0x20] sm:$0xff] %v316
      %337 = vst [vmem:[#allocation2 + $0x28] sm:$0xff] %v317
      %338 = vst [vmem:[#allocation2 + $0x30] sm:$0xff] %v318
      %339 = vst [vmem:[#allocation2 + $0x38] sm:$0xff] %v319
      %340 = vst [vmem:[#allocation2 + $0x40] sm:$0xff] %v320
      %341 = vst [vmem:[#allocation2 + $0x48] sm:$0xff] %v321
      %342 = vst [vmem:[#allocation2 + $0x50] sm:$0xff] %v322
      %343 = vst [vmem:[#allocation2 + $0x58] sm:$0xff] %v323
      %344 = vst [vmem:[#allocation2 + $0x60] sm:$0xff] %v324
      %345 = vst [vmem:[#allocation2 + $0x68] sm:$0xff] %v325
      %346 = vst [vmem:[#allocation2 + $0x70] sm:$0xff] %v326
      %347 = vst [vmem:[#allocation2 + $0x78] sm:$0xff] %v327
      %348 = vst [vmem:[#allocation2 + $0x80] sm:$0xff] %v328
      %349 = vst [vmem:[#allocation2 + $0x88] sm:$0xff] %v329
      %350 = vst [vmem:[#allocation2 + $0x90] sm:$0xff] %v330
      %351 = vst [vmem:[#allocation2 + $0x98] sm:$0xff] %v331
      %352 = vst [vmem:[#allocation2 + $0xa0] sm:$0xff] 0.0
      %353 = vst [vmem:[#allocation2 + $0xa8] sm:$0xff] 0.0
      %v354 = vld [vmem:[%s3] sm:$0xff]
      %v355 = vld [vmem:[%s3 + $0x8] sm:$0xff]
      %v356 = vld [vmem:[%s3 + $0x10] sm:$0xff]
      %v357 = vld [vmem:[%s3 + $0x18] sm:$0xff]
      %v358 = vld [vmem:[%s3 + $0x20] sm:$0xff]
      %v359 = vld [vmem:[%s3 + $0x28] sm:$0xff]
      %v360 = vld [vmem:[%s3 + $0x30] sm:$0xff]
      %v361 = vld [vmem:[%s3 + $0x38] sm:$0xff]
      %v362 = vld [vmem:[%s3 + $0x40] sm:$0xff]
      %v363 = vld [vmem:[%s3 + $0x48] sm:$0xff]
      %v364 = vld [vmem:[%s3 + $0x50] sm:$0xff]
      %v365 = vld [vmem:[%s3 + $0x58] sm:$0xff]
      %v366 = vld [vmem:[%s3 + $0x60] sm:$0xff]
      %v367 = vld [vmem:[%s3 + $0x68] sm:$0xff]
      %v368 = vld [vmem:[%s3 + $0x70] sm:$0xff]
      %v369 = vld [vmem:[%s3 + $0x78] sm:$0xff]
      %v370 = vld [vmem:[%s3 + $0x80] sm:$0xff]
      %v371 = vld [vmem:[%s3 + $0x88] sm:$0xff]
      %v372 = vld [vmem:[%s4] sm:$0xff]
      %v373 = vld [vmem:[%s4 + $0x8] sm:$0xff]
      %v374 = vld [vmem:[%s4 + $0x10] sm:$0xff]
      %v375 = vld [vmem:[%s4 + $0x18] sm:$0xff]
      %v376 = vld [vmem:[%s4 + $0x20] sm:$0xff]
      %v377 = vld [vmem:[%s4 + $0x28] sm:$0xff]
      %v378 = vld [vmem:[%s4 + $0x30] sm:$0xff]
      %v379 = vld [vmem:[%s4 + $0x38] sm:$0xff]
      %v380 = vld [vmem:[%s4 + $0x40] sm:$0xff]
      %v381 = vld [vmem:[%s4 + $0x48] sm:$0xff]
      %v382 = vld [vmem:[%s4 + $0x50] sm:$0xff]
      %v383 = vld [vmem:[%s4 + $0x58] sm:$0xff]
      %v384 = vld [vmem:[%s4 + $0x60] sm:$0xff]
      %v385 = vld [vmem:[%s4 + $0x68] sm:$0xff]
      %v386 = vld [vmem:[%s4 + $0x70] sm:$0xff]
      %v387 = vld [vmem:[%s4 + $0x78] sm:$0xff]
      %v388 = vld [vmem:[%s4 + $0x80] sm:$0xff]
      %v389 = vld [vmem:[%s4 + $0x88] sm:$0xff]
      %v390 = vld [vmem:[#allocation2 + $0x3] sm:$0xff]
      %v391 = vld [vmem:[#allocation2 + $0xb] sm:$0xff]
      %v392 = vld [vmem:[#allocation2 + $0x13] sm:$0xff]
      %v393 = vld [vmem:[#allocation2 + $0x1b] sm:$0xff]
      %v394 = vld [vmem:[#allocation2 + $0x23] sm:$0xff]
      %v395 = vld [vmem:[#allocation2 + $0x2b] sm:$0xff]
      %v396 = vld [vmem:[#allocation2 + $0x33] sm:$0xff]
      %v397 = vld [vmem:[#allocation2 + $0x3b] sm:$0xff]
      %v398 = vld [vmem:[#allocation2 + $0x43] sm:$0xff]
      %v399 = vld [vmem:[#allocation2 + $0x4b] sm:$0xff]
      %v400 = vld [vmem:[#allocation2 + $0x53] sm:$0xff]
      %v401 = vld [vmem:[#allocation2 + $0x5b] sm:$0xff]
      %v402 = vld [vmem:[#allocation2 + $0x63] sm:$0xff]
      %v403 = vld [vmem:[#allocation2 + $0x6b] sm:$0xff]
      %v404 = vld [vmem:[#allocation2 + $0x73] sm:$0xff]
      %v405 = vld [vmem:[#allocation2 + $0x7b] sm:$0xff]
      %v406 = vld [vmem:[#allocation2 + $0x83] sm:$0xff]
      %v407 = vld [vmem:[#allocation2 + $0x8b] sm:$0xff]
      %409 = vset.pattern.permute.xlu0 0
      %410 = vperm.xlu0 %409, %v354
      %v411 = vpop.permute.xlu0 %410
      %414 = vset.pattern.permute.xlu0 0
      %415 = vperm.xlu0 %414, %v355
      %v416 = vpop.permute.xlu0 %415
      %419 = vset.pattern.permute.xlu0 0
      %420 = vperm.xlu0 %419, %v356
      %v421 = vpop.permute.xlu0 %420
      %424 = vset.pattern.permute.xlu0 0
      %425 = vperm.xlu0 %424, %v357
      %v426 = vpop.permute.xlu0 %425
      %429 = vset.pattern.permute.xlu0 0
      %430 = vperm.xlu0 %429, %v358
      %v431 = vpop.permute.xlu0 %430
      %434 = vset.pattern.permute.xlu0 0
      %435 = vperm.xlu0 %434, %v359
      %v436 = vpop.permute.xlu0 %435
      %439 = vset.pattern.permute.xlu0 0
      %440 = vperm.xlu0 %439, %v360
      %v441 = vpop.permute.xlu0 %440
      %444 = vset.pattern.permute.xlu0 0
      %445 = vperm.xlu0 %444, %v361
      %v446 = vpop.permute.xlu0 %445
      %449 = vset.pattern.permute.xlu0 0
      %450 = vperm.xlu0 %449, %v362
      %v451 = vpop.permute.xlu0 %450
      %454 = vset.pattern.permute.xlu0 0
      %455 = vperm.xlu0 %454, %v363
      %v456 = vpop.permute.xlu0 %455
      %459 = vset.pattern.permute.xlu0 0
      %460 = vperm.xlu0 %459, %v364
      %v461 = vpop.permute.xlu0 %460
      %464 = vset.pattern.permute.xlu0 0
      %465 = vperm.xlu0 %464, %v365
      %v466 = vpop.permute.xlu0 %465
      %469 = vset.pattern.permute.xlu0 0
      %470 = vperm.xlu0 %469, %v366
      %v471 = vpop.permute.xlu0 %470
      %474 = vset.pattern.permute.xlu0 0
      %475 = vperm.xlu0 %474, %v367
      %v476 = vpop.permute.xlu0 %475
      %479 = vset.pattern.permute.xlu0 0
      %480 = vperm.xlu0 %479, %v368
      %v481 = vpop.permute.xlu0 %480
      %484 = vset.pattern.permute.xlu0 0
      %485 = vperm.xlu0 %484, %v369
      %v486 = vpop.permute.xlu0 %485
      %489 = vset.pattern.permute.xlu0 0
      %490 = vperm.xlu0 %489, %v370
      %v491 = vpop.permute.xlu0 %490
      %494 = vset.pattern.permute.xlu0 0
      %495 = vperm.xlu0 %494, %v371
      %v496 = vpop.permute.xlu0 %495
      %v498 = vmul.f32 %v390, %v411
      %v499 = vmul.f32 %v391, %v416
      %v500 = vmul.f32 %v392, %v421
      %v501 = vmul.f32 %v393, %v426
      %v502 = vmul.f32 %v394, %v431
      %v503 = vmul.f32 %v395, %v436
      %v504 = vmul.f32 %v396, %v441
      %v505 = vmul.f32 %v397, %v446
      %v506 = vmul.f32 %v398, %v451
      %v507 = vmul.f32 %v399, %v456
      %v508 = vmul.f32 %v400, %v461
      %v509 = vmul.f32 %v401, %v466
      %v510 = vmul.f32 %v402, %v471
      %v511 = vmul.f32 %v403, %v476
      %v512 = vmul.f32 %v404, %v481
      %v513 = vmul.f32 %v405, %v486
      %v514 = vmul.f32 %v406, %v491
      %v515 = vmul.f32 %v407, %v496
      %v516 = vpack.c.bf16 %v499, %v498
      %v517 = vpack.c.bf16 %v501, %v500
      %v518 = vpack.c.bf16 %v503, %v502
      %v519 = vpack.c.bf16 %v505, %v504
      %v520 = vpack.c.bf16 %v507, %v506
      %v521 = vpack.c.bf16 %v509, %v508
      %v522 = vpack.c.bf16 %v511, %v510
      %v523 = vpack.c.bf16 %v513, %v512
      %v524 = vpack.c.bf16 %v515, %v514
      %v525 = vld [vmem:[%s5] sm:$0xf]
      %v526 = vld [vmem:[%s5 + $0x4] sm:$0xf]
      %v527 = vld [vmem:[%s5 + $0x8] sm:$0xf]
      %v528 = vld [vmem:[%s5 + $0xc] sm:$0xf]
      %v529 = vld [vmem:[%s5 + $0x10] sm:$0xf]
      %v530 = vld [vmem:[%s5 + $0x14] sm:$0xf]
      %v531 = vld [vmem:[%s5 + $0x18] sm:$0xf]
      %v532 = vld [vmem:[%s5 + $0x1c] sm:$0xf]
      %v533 = vld [vmem:[%s5 + $0x20] sm:$0xf]
      %v534 = vld [vmem:[%s5 + $0x24] sm:$0xf]
      %v535 = vld [vmem:[%s5 + $0x28] sm:$0xf]
      %v536 = vld [vmem:[%s5 + $0x2c] sm:$0xf]
      %v537 = vld [vmem:[%s5 + $0x30] sm:$0xf]
      %v538 = vld [vmem:[%s5 + $0x34] sm:$0xf]
      %v539 = vld [vmem:[%s5 + $0x38] sm:$0xf]
      %v540 = vld [vmem:[%s5 + $0x3c] sm:$0xf]
      %v541 = vld [vmem:[#allocation2 + $0x4] sm:$0xff]
      %v542 = vld [vmem:[#allocation2 + $0xc] sm:$0xff]
      %v543 = vld [vmem:[#allocation2 + $0x14] sm:$0xff]
      %v544 = vld [vmem:[#allocation2 + $0x1c] sm:$0xff]
      %v545 = vld [vmem:[#allocation2 + $0x24] sm:$0xff]
      %v546 = vld [vmem:[#allocation2 + $0x2c] sm:$0xff]
      %v547 = vld [vmem:[#allocation2 + $0x34] sm:$0xff]
      %v548 = vld [vmem:[#allocation2 + $0x3c] sm:$0xff]
      %v549 = vld [vmem:[#allocation2 + $0x44] sm:$0xff]
      %v550 = vld [vmem:[#allocation2 + $0x4c] sm:$0xff]
      %v551 = vld [vmem:[#allocation2 + $0x54] sm:$0xff]
      %v552 = vld [vmem:[#allocation2 + $0x5c] sm:$0xff]
      %v553 = vld [vmem:[#allocation2 + $0x64] sm:$0xff]
      %v554 = vld [vmem:[#allocation2 + $0x6c] sm:$0xff]
      %v555 = vld [vmem:[#allocation2 + $0x74] sm:$0xff]
      %v556 = vld [vmem:[#allocation2 + $0x7c] sm:$0xff]
      %v557 = vld [vmem:[#allocation2 + $0x84] sm:$0xff]
      %v558 = vld [vmem:[#allocation2 + $0x8c] sm:$0xff]
      %v559 = vpack.c.bf16 %v542, %v541
      %v560 = vpack.c.bf16 %v544, %v543
      %v561 = vpack.c.bf16 %v546, %v545
      %v562 = vpack.c.bf16 %v548, %v547
      %v563 = vpack.c.bf16 %v550, %v549
      %v564 = vpack.c.bf16 %v552, %v551
      %v565 = vpack.c.bf16 %v554, %v553
      %v566 = vpack.c.bf16 %v556, %v555
      %v567 = vpack.c.bf16 %v558, %v557
      %s568 = scalar_lea.vmem %s5, 64
      %v569 = vld [vmem:[%s568] sm:$0xf]
      %v570 = vld [vmem:[%s568 + $0x4] sm:$0xf]
      %v571 = vld [vmem:[%s568 + $0x8] sm:$0xf]
      %v572 = vld [vmem:[%s568 + $0xc] sm:$0xf]
      %v573 = vld [vmem:[%s568 + $0x10] sm:$0xf]
      %v574 = vld [vmem:[%s568 + $0x14] sm:$0xf]
      %v575 = vld [vmem:[%s568 + $0x18] sm:$0xf]
      %v576 = vld [vmem:[%s568 + $0x1c] sm:$0xf]
      %v577 = vld [vmem:[%s568 + $0x20] sm:$0xf]
      %v578 = vld [vmem:[%s568 + $0x24] sm:$0xf]
      %v579 = vld [vmem:[%s568 + $0x28] sm:$0xf]
      %v580 = vld [vmem:[%s568 + $0x2c] sm:$0xf]
      %v581 = vld [vmem:[%s568 + $0x30] sm:$0xf]
      %v582 = vld [vmem:[%s568 + $0x34] sm:$0xf]
      %v583 = vld [vmem:[%s568 + $0x38] sm:$0xf]
      %v584 = vld [vmem:[%s568 + $0x3c] sm:$0xf]
      %v601 = vunpack.c.l.b16 %v569
      %v602 = vunpack.c.l.b16 %v570
      %v603 = vunpack.c.l.b16 %v571
      %v604 = vunpack.c.l.b16 %v572
      %v605 = vunpack.c.l.b16 %v573
      %v606 = vunpack.c.l.b16 %v574
      %v607 = vunpack.c.l.b16 %v575
      %v608 = vunpack.c.l.b16 %v576
      %v609 = vunpack.c.l.b16 %v577
      %v610 = vunpack.c.l.b16 %v578
      %v611 = vunpack.c.l.b16 %v579
      %v612 = vunpack.c.l.b16 %v580
      %v613 = vunpack.c.l.b16 %v581
      %v614 = vunpack.c.l.b16 %v582
      %v615 = vunpack.c.l.b16 %v583
      %v616 = vunpack.c.l.b16 %v584
      %v617 = vpack.c.b16 %v602, %v601
      %v618 = vpack.c.b16 %v604, %v603
      %v619 = vpack.c.b16 %v606, %v605
      %v620 = vpack.c.b16 %v608, %v607
      %v621 = vpack.c.b16 %v610, %v609
      %v622 = vpack.c.b16 %v612, %v611
      %v623 = vpack.c.b16 %v614, %v613
      %v624 = vpack.c.b16 %v616, %v615
      %633 = vmatpush.bf16.msra.mxu0 %v624
      %634 = vmatpush.bf16.msra.mxu0 %v623
      %635 = vmatpush.bf16.msra.mxu0 %v622
      %636 = vmatpush.bf16.msra.mxu0 %v621
      %637 = vmatpush.bf16.msra.mxu0 %v620
      %638 = vmatpush.bf16.msra.mxu0 %v619
      %639 = vmatpush.bf16.msra.mxu0 %v618
      %640 = vmatpush.bf16.msra.mxu0 %v617
      %641 = vmatmul.bf16.gmra.mxu0 %v559
      %v642 = vpop.f32.mrf.mxu0
      %v643 = vadd.f32 0.0, %v642
      %v644 = vpop.f32.mrf.mxu0
      %v645 = vadd.f32 0.0, %v644
      %646 = vmatmul.bf16.gmra.mxu0 %v560
      %v647 = vpop.f32.mrf.mxu0
      %v648 = vadd.f32 0.0, %v647
      %v649 = vpop.f32.mrf.mxu0
      %v650 = vadd.f32 0.0, %v649
      %651 = vmatmul.bf16.gmra.mxu0 %v561
      %v652 = vpop.f32.mrf.mxu0
      %v653 = vadd.f32 0.0, %v652
      %v654 = vpop.f32.mrf.mxu0
      %v655 = vadd.f32 0.0, %v654
      %656 = vmatmul.bf16.gmra.mxu0 %v562
      %v657 = vpop.f32.mrf.mxu0
      %v658 = vadd.f32 0.0, %v657
      %v659 = vpop.f32.mrf.mxu0
      %v660 = vadd.f32 0.0, %v659
      %661 = vmatmul.bf16.gmra.mxu0 %v563
      %v662 = vpop.f32.mrf.mxu0
      %v663 = vadd.f32 0.0, %v662
      %v664 = vpop.f32.mrf.mxu0
      %v665 = vadd.f32 0.0, %v664
      %666 = vmatmul.bf16.gmra.mxu0 %v564
      %v667 = vpop.f32.mrf.mxu0
      %v668 = vadd.f32 0.0, %v667
      %v669 = vpop.f32.mrf.mxu0
      %v670 = vadd.f32 0.0, %v669
      %671 = vmatmul.bf16.gmra.mxu0 %v565
      %v672 = vpop.f32.mrf.mxu0
      %v673 = vadd.f32 0.0, %v672
      %v674 = vpop.f32.mrf.mxu0
      %v675 = vadd.f32 0.0, %v674
      %676 = vmatmul.bf16.gmra.mxu0 %v566
      %v677 = vpop.f32.mrf.mxu0
      %v678 = vadd.f32 0.0, %v677
      %v679 = vpop.f32.mrf.mxu0
      %v680 = vadd.f32 0.0, %v679
      %681 = vmatmul.bf16.gmra.mxu0 %v567
      %v682 = vpop.f32.mrf.mxu0
      %v683 = vadd.f32 0.0, %v682
      %v684 = vpop.f32.mrf.mxu0
      %v685 = vadd.f32 0.0, %v684
      %686 = vdwg.mxu0
      %v703 = vunpack.c.l.b16 %v525
      %v704 = vunpack.c.l.b16 %v526
      %v705 = vunpack.c.l.b16 %v527
      %v706 = vunpack.c.l.b16 %v528
      %v707 = vunpack.c.l.b16 %v529
      %v708 = vunpack.c.l.b16 %v530
      %v709 = vunpack.c.l.b16 %v531
      %v710 = vunpack.c.l.b16 %v532
      %v711 = vunpack.c.l.b16 %v533
      %v712 = vunpack.c.l.b16 %v534
      %v713 = vunpack.c.l.b16 %v535
      %v714 = vunpack.c.l.b16 %v536
      %v715 = vunpack.c.l.b16 %v537
      %v716 = vunpack.c.l.b16 %v538
      %v717 = vunpack.c.l.b16 %v539
      %v718 = vunpack.c.l.b16 %v540
      %v719 = vpack.c.b16 %v704, %v703
      %v720 = vpack.c.b16 %v706, %v705
      %v721 = vpack.c.b16 %v708, %v707
      %v722 = vpack.c.b16 %v710, %v709
      %v723 = vpack.c.b16 %v712, %v711
      %v724 = vpack.c.b16 %v714, %v713
      %v725 = vpack.c.b16 %v716, %v715
      %v726 = vpack.c.b16 %v718, %v717
      %735 = vmatpush.bf16.msra.mxu0 %v726
      %736 = vmatpush.bf16.msra.mxu0 %v725
      %737 = vmatpush.bf16.msra.mxu0 %v724
      %738 = vmatpush.bf16.msra.mxu0 %v723
      %739 = vmatpush.bf16.msra.mxu0 %v722
      %740 = vmatpush.bf16.msra.mxu0 %v721
      %741 = vmatpush.bf16.msra.mxu0 %v720
      %742 = vmatpush.bf16.msra.mxu0 %v719
      %743 = vmatmul.bf16.gmra.mxu0 %v516
      %v744 = vpop.f32.mrf.mxu0
      %v745 = vadd.f32 %v643, %v744
      %v746 = vpop.f32.mrf.mxu0
      %v747 = vadd.f32 %v645, %v746
      %748 = vmatmul.bf16.gmra.mxu0 %v517
      %v749 = vpop.f32.mrf.mxu0
      %v750 = vadd.f32 %v648, %v749
      %v751 = vpop.f32.mrf.mxu0
      %v752 = vadd.f32 %v650, %v751
      %753 = vmatmul.bf16.gmra.mxu0 %v518
      %v754 = vpop.f32.mrf.mxu0
      %v755 = vadd.f32 %v653, %v754
      %v756 = vpop.f32.mrf.mxu0
      %v757 = vadd.f32 %v655, %v756
      %758 = vmatmul.bf16.gmra.mxu0 %v519
      %v759 = vpop.f32.mrf.mxu0
      %v760 = vadd.f32 %v658, %v759
      %v761 = vpop.f32.mrf.mxu0
      %v762 = vadd.f32 %v660, %v761
      %763 = vmatmul.bf16.gmra.mxu0 %v520
      %v764 = vpop.f32.mrf.mxu0
      %v765 = vadd.f32 %v663, %v764
      %v766 = vpop.f32.mrf.mxu0
      %v767 = vadd.f32 %v665, %v766
      %768 = vmatmul.bf16.gmra.mxu0 %v521
      %v769 = vpop.f32.mrf.mxu0
      %v770 = vadd.f32 %v668, %v769
      %v771 = vpop.f32.mrf.mxu0
      %v772 = vadd.f32 %v670, %v771
      %773 = vmatmul.bf16.gmra.mxu0 %v522
      %v774 = vpop.f32.mrf.mxu0
      %v775 = vadd.f32 %v673, %v774
      %v776 = vpop.f32.mrf.mxu0
      %v777 = vadd.f32 %v675, %v776
      %778 = vmatmul.bf16.gmra.mxu0 %v523
      %v779 = vpop.f32.mrf.mxu0
      %v780 = vadd.f32 %v678, %v779
      %v781 = vpop.f32.mrf.mxu0
      %v782 = vadd.f32 %v680, %v781
      %783 = vmatmul.bf16.gmra.mxu0 %v524
      %v784 = vpop.f32.mrf.mxu0
      %v785 = vadd.f32 %v683, %v784
      %v786 = vpop.f32.mrf.mxu0
      %v787 = vadd.f32 %v685, %v786
      %788 = vdwg.mxu0
      %v789 = vld [vmem:[#allocation2 + $0x5] sm:$0xff]
      %v790 = vld [vmem:[#allocation2 + $0xd] sm:$0xff]
      %v791 = vld [vmem:[#allocation2 + $0x15] sm:$0xff]
      %v792 = vld [vmem:[#allocation2 + $0x1d] sm:$0xff]
      %v793 = vld [vmem:[#allocation2 + $0x25] sm:$0xff]
      %v794 = vld [vmem:[#allocation2 + $0x2d] sm:$0xff]
      %v795 = vld [vmem:[#allocation2 + $0x35] sm:$0xff]
      %v796 = vld [vmem:[#allocation2 + $0x3d] sm:$0xff]
      %v797 = vld [vmem:[#allocation2 + $0x45] sm:$0xff]
      %v798 = vld [vmem:[#allocation2 + $0x4d] sm:$0xff]
      %v799 = vld [vmem:[#allocation2 + $0x55] sm:$0xff]
      %v800 = vld [vmem:[#allocation2 + $0x5d] sm:$0xff]
      %v801 = vld [vmem:[#allocation2 + $0x65] sm:$0xff]
      %v802 = vld [vmem:[#allocation2 + $0x6d] sm:$0xff]
      %v803 = vld [vmem:[#allocation2 + $0x75] sm:$0xff]
      %v804 = vld [vmem:[#allocation2 + $0x7d] sm:$0xff]
      %v805 = vld [vmem:[#allocation2 + $0x85] sm:$0xff]
      %v806 = vld [vmem:[#allocation2 + $0x8d] sm:$0xff]
      %808 = vset.pattern.permute.xlu0 0
      %809 = vperm.xlu0 %808, %v372
      %v810 = vpop.permute.xlu0 %809
      %813 = vset.pattern.permute.xlu0 0
      %814 = vperm.xlu0 %813, %v373
      %v815 = vpop.permute.xlu0 %814
      %818 = vset.pattern.permute.xlu0 0
      %819 = vperm.xlu0 %818, %v374
      %v820 = vpop.permute.xlu0 %819
      %823 = vset.pattern.permute.xlu0 0
      %824 = vperm.xlu0 %823, %v375
      %v825 = vpop.permute.xlu0 %824
      %828 = vset.pattern.permute.xlu0 0
      %829 = vperm.xlu0 %828, %v376
      %v830 = vpop.permute.xlu0 %829
      %833 = vset.pattern.permute.xlu0 0
      %834 = vperm.xlu0 %833, %v377
      %v835 = vpop.permute.xlu0 %834
      %838 = vset.pattern.permute.xlu0 0
      %839 = vperm.xlu0 %838, %v378
      %v840 = vpop.permute.xlu0 %839
      %843 = vset.pattern.permute.xlu0 0
      %844 = vperm.xlu0 %843, %v379
      %v845 = vpop.permute.xlu0 %844
      %848 = vset.pattern.permute.xlu0 0
      %849 = vperm.xlu0 %848, %v380
      %v850 = vpop.permute.xlu0 %849
      %853 = vset.pattern.permute.xlu0 0
      %854 = vperm.xlu0 %853, %v381
      %v855 = vpop.permute.xlu0 %854
      %858 = vset.pattern.permute.xlu0 0
      %859 = vperm.xlu0 %858, %v382
      %v860 = vpop.permute.xlu0 %859
      %863 = vset.pattern.permute.xlu0 0
      %864 = vperm.xlu0 %863, %v383
      %v865 = vpop.permute.xlu0 %864
      %868 = vset.pattern.permute.xlu0 0
      %869 = vperm.xlu0 %868, %v384
      %v870 = vpop.permute.xlu0 %869
      %873 = vset.pattern.permute.xlu0 0
      %874 = vperm.xlu0 %873, %v385
      %v875 = vpop.permute.xlu0 %874
      %878 = vset.pattern.permute.xlu0 0
      %879 = vperm.xlu0 %878, %v386
      %v880 = vpop.permute.xlu0 %879
      %883 = vset.pattern.permute.xlu0 0
      %884 = vperm.xlu0 %883, %v387
      %v885 = vpop.permute.xlu0 %884
      %888 = vset.pattern.permute.xlu0 0
      %889 = vperm.xlu0 %888, %v388
      %v890 = vpop.permute.xlu0 %889
      %893 = vset.pattern.permute.xlu0 0
      %894 = vperm.xlu0 %893, %v389
      %v895 = vpop.permute.xlu0 %894
      %v897 = vmul.f32 %v789, %v810
      %v898 = vmul.f32 %v790, %v815
      %v899 = vmul.f32 %v791, %v820
      %v900 = vmul.f32 %v792, %v825
      %v901 = vmul.f32 %v793, %v830
      %v902 = vmul.f32 %v794, %v835
      %v903 = vmul.f32 %v795, %v840
      %v904 = vmul.f32 %v796, %v845
      %v905 = vmul.f32 %v797, %v850
      %v906 = vmul.f32 %v798, %v855
      %v907 = vmul.f32 %v799, %v860
      %v908 = vmul.f32 %v800, %v865
      %v909 = vmul.f32 %v801, %v870
      %v910 = vmul.f32 %v802, %v875
      %v911 = vmul.f32 %v803, %v880
      %v912 = vmul.f32 %v804, %v885
      %v913 = vmul.f32 %v805, %v890
      %v914 = vmul.f32 %v806, %v895
      %v915 = vpack.c.bf16 %v898, %v897
      %v916 = vpack.c.bf16 %v900, %v899
      %v917 = vpack.c.bf16 %v902, %v901
      %v918 = vpack.c.bf16 %v904, %v903
      %v919 = vpack.c.bf16 %v906, %v905
      %v920 = vpack.c.bf16 %v908, %v907
      %v921 = vpack.c.bf16 %v910, %v909
      %v922 = vpack.c.bf16 %v912, %v911
      %v923 = vpack.c.bf16 %v914, %v913
      %s924 = scalar_lea.vmem %s5, 128
      %v925 = vld [vmem:[%s924] sm:$0xf]
      %v926 = vld [vmem:[%s924 + $0x4] sm:$0xf]
      %v927 = vld [vmem:[%s924 + $0x8] sm:$0xf]
      %v928 = vld [vmem:[%s924 + $0xc] sm:$0xf]
      %v929 = vld [vmem:[%s924 + $0x10] sm:$0xf]
      %v930 = vld [vmem:[%s924 + $0x14] sm:$0xf]
      %v931 = vld [vmem:[%s924 + $0x18] sm:$0xf]
      %v932 = vld [vmem:[%s924 + $0x1c] sm:$0xf]
      %v933 = vld [vmem:[%s924 + $0x20] sm:$0xf]
      %v934 = vld [vmem:[%s924 + $0x24] sm:$0xf]
      %v935 = vld [vmem:[%s924 + $0x28] sm:$0xf]
      %v936 = vld [vmem:[%s924 + $0x2c] sm:$0xf]
      %v937 = vld [vmem:[%s924 + $0x30] sm:$0xf]
      %v938 = vld [vmem:[%s924 + $0x34] sm:$0xf]
      %v939 = vld [vmem:[%s924 + $0x38] sm:$0xf]
      %v940 = vld [vmem:[%s924 + $0x3c] sm:$0xf]
      %v957 = vunpack.c.l.b16 %v925
      %v958 = vunpack.c.l.b16 %v926
      %v959 = vunpack.c.l.b16 %v927
      %v960 = vunpack.c.l.b16 %v928
      %v961 = vunpack.c.l.b16 %v929
      %v962 = vunpack.c.l.b16 %v930
      %v963 = vunpack.c.l.b16 %v931
      %v964 = vunpack.c.l.b16 %v932
      %v965 = vunpack.c.l.b16 %v933
      %v966 = vunpack.c.l.b16 %v934
      %v967 = vunpack.c.l.b16 %v935
      %v968 = vunpack.c.l.b16 %v936
      %v969 = vunpack.c.l.b16 %v937
      %v970 = vunpack.c.l.b16 %v938
      %v971 = vunpack.c.l.b16 %v939
      %v972 = vunpack.c.l.b16 %v940
      %v973 = vpack.c.b16 %v958, %v957
      %v974 = vpack.c.b16 %v960, %v959
      %v975 = vpack.c.b16 %v962, %v961
      %v976 = vpack.c.b16 %v964, %v963
      %v977 = vpack.c.b16 %v966, %v965
      %v978 = vpack.c.b16 %v968, %v967
      %v979 = vpack.c.b16 %v970, %v969
      %v980 = vpack.c.b16 %v972, %v971
      %989 = vmatpush.bf16.msra.mxu0 %v980
      %990 = vmatpush.bf16.msra.mxu0 %v979
      %991 = vmatpush.bf16.msra.mxu0 %v978
      %992 = vmatpush.bf16.msra.mxu0 %v977
      %993 = vmatpush.bf16.msra.mxu0 %v976
      %994 = vmatpush.bf16.msra.mxu0 %v975
      %995 = vmatpush.bf16.msra.mxu0 %v974
      %996 = vmatpush.bf16.msra.mxu0 %v973
      %997 = vmatmul.bf16.gmra.mxu0 %v915
      %v998 = vpop.f32.mrf.mxu0
      %v999 = vadd.f32 0.0, %v998
      %v1000 = vpop.f32.mrf.mxu0
      %v1001 = vadd.f32 0.0, %v1000
      %1002 = vmatmul.bf16.gmra.mxu0 %v916
      %v1003 = vpop.f32.mrf.mxu0
      %v1004 = vadd.f32 0.0, %v1003
      %v1005 = vpop.f32.mrf.mxu0
      %v1006 = vadd.f32 0.0, %v1005
      %1007 = vmatmul.bf16.gmra.mxu0 %v917
      %v1008 = vpop.f32.mrf.mxu0
      %v1009 = vadd.f32 0.0, %v1008
      %v1010 = vpop.f32.mrf.mxu0
      %v1011 = vadd.f32 0.0, %v1010
      %1012 = vmatmul.bf16.gmra.mxu0 %v918
      %v1013 = vpop.f32.mrf.mxu0
      %v1014 = vadd.f32 0.0, %v1013
      %v1015 = vpop.f32.mrf.mxu0
      %v1016 = vadd.f32 0.0, %v1015
      %1017 = vmatmul.bf16.gmra.mxu0 %v919
      %v1018 = vpop.f32.mrf.mxu0
      %v1019 = vadd.f32 0.0, %v1018
      %v1020 = vpop.f32.mrf.mxu0
      %v1021 = vadd.f32 0.0, %v1020
      %1022 = vmatmul.bf16.gmra.mxu0 %v920
      %v1023 = vpop.f32.mrf.mxu0
      %v1024 = vadd.f32 0.0, %v1023
      %v1025 = vpop.f32.mrf.mxu0
      %v1026 = vadd.f32 0.0, %v1025
      %1027 = vmatmul.bf16.gmra.mxu0 %v921
      %v1028 = vpop.f32.mrf.mxu0
      %v1029 = vadd.f32 0.0, %v1028
      %v1030 = vpop.f32.mrf.mxu0
      %v1031 = vadd.f32 0.0, %v1030
      %1032 = vmatmul.bf16.gmra.mxu0 %v922
      %v1033 = vpop.f32.mrf.mxu0
      %v1034 = vadd.f32 0.0, %v1033
      %v1035 = vpop.f32.mrf.mxu0
      %v1036 = vadd.f32 0.0, %v1035
      %1037 = vmatmul.bf16.gmra.mxu0 %v923
      %v1038 = vpop.f32.mrf.mxu0
      %v1039 = vadd.f32 0.0, %v1038
      %v1040 = vpop.f32.mrf.mxu0
      %v1041 = vadd.f32 0.0, %v1040
      %1042 = vdwg.mxu0
      %v1043 = vadd.f32 %v745, %v999
      %v1044 = vadd.f32 %v747, %v1001
      %v1045 = vadd.f32 %v750, %v1004
      %v1046 = vadd.f32 %v752, %v1006
      %v1047 = vadd.f32 %v755, %v1009
      %v1048 = vadd.f32 %v757, %v1011
      %v1049 = vadd.f32 %v760, %v1014
      %v1050 = vadd.f32 %v762, %v1016
      %v1051 = vadd.f32 %v765, %v1019
      %v1052 = vadd.f32 %v767, %v1021
      %v1053 = vadd.f32 %v770, %v1024
      %v1054 = vadd.f32 %v772, %v1026
      %v1055 = vadd.f32 %v775, %v1029
      %v1056 = vadd.f32 %v777, %v1031
      %v1057 = vadd.f32 %v780, %v1034
      %v1058 = vadd.f32 %v782, %v1036
      %v1059 = vadd.f32 %v785, %v1039
      %v1060 = vadd.f32 %v787, %v1041
      %v1061 = vld [vmem:[#allocation2 + $0xf] sm:$0xff]
      %v1062 = vld [vmem:[#allocation2 + $0x17] sm:$0xff]
      %v1063 = vld [vmem:[#allocation2 + $0x1f] sm:$0xff]
      %v1064 = vld [vmem:[#allocation2 + $0x27] sm:$0xff]
      %v1065 = vld [vmem:[#allocation2 + $0x2f] sm:$0xff]
      %v1066 = vld [vmem:[#allocation2 + $0x37] sm:$0xff]
      %v1067 = vld [vmem:[#allocation2 + $0x3f] sm:$0xff]
      %v1068 = vld [vmem:[#allocation2 + $0x47] sm:$0xff]
      %v1069 = vld [vmem:[#allocation2 + $0x4f] sm:$0xff]
      %v1070 = vld [vmem:[#allocation2 + $0x57] sm:$0xff]
      %v1071 = vld [vmem:[#allocation2 + $0x5f] sm:$0xff]
      %v1072 = vld [vmem:[#allocation2 + $0x67] sm:$0xff]
      %v1073 = vld [vmem:[#allocation2 + $0x6f] sm:$0xff]
      %v1074 = vld [vmem:[#allocation2 + $0x77] sm:$0xff]
      %v1075 = vld [vmem:[#allocation2 + $0x7f] sm:$0xff]
      %v1076 = vld [vmem:[#allocation2 + $0x87] sm:$0xff]
      %v1077 = vld [vmem:[#allocation2 + $0x8f] sm:$0xff]
      %v1078 = vld [vmem:[#allocation2 + $0x97] sm:$0xff]
      %v1079 = vmul.f32 %v1061, %v411
      %v1080 = vmul.f32 %v1062, %v416
      %v1081 = vmul.f32 %v1063, %v421
      %v1082 = vmul.f32 %v1064, %v426
      %v1083 = vmul.f32 %v1065, %v431
      %v1084 = vmul.f32 %v1066, %v436
      %v1085 = vmul.f32 %v1067, %v441
      %v1086 = vmul.f32 %v1068, %v446
      %v1087 = vmul.f32 %v1069, %v451
      %v1088 = vmul.f32 %v1070, %v456
      %v1089 = vmul.f32 %v1071, %v461
      %v1090 = vmul.f32 %v1072, %v466
      %v1091 = vmul.f32 %v1073, %v471
      %v1092 = vmul.f32 %v1074, %v476
      %v1093 = vmul.f32 %v1075, %v481
      %v1094 = vmul.f32 %v1076, %v486
      %v1095 = vmul.f32 %v1077, %v491
      %v1096 = vmul.f32 %v1078, %v496
      %v1097 = vpack.c.bf16 %v1080, %v1079
      %v1098 = vpack.c.bf16 %v1082, %v1081
      %v1099 = vpack.c.bf16 %v1084, %v1083
      %v1100 = vpack.c.bf16 %v1086, %v1085
      %v1101 = vpack.c.bf16 %v1088, %v1087
      %v1102 = vpack.c.bf16 %v1090, %v1089
      %v1103 = vpack.c.bf16 %v1092, %v1091
      %v1104 = vpack.c.bf16 %v1094, %v1093
      %v1105 = vpack.c.bf16 %v1096, %v1095
      %s1106 = scalar_lea.vmem %s5, 192
      %v1107 = vld [vmem:[%s1106] sm:$0xf]
      %v1108 = vld [vmem:[%s1106 + $0x4] sm:$0xf]
      %v1109 = vld [vmem:[%s1106 + $0x8] sm:$0xf]
      %v1110 = vld [vmem:[%s1106 + $0xc] sm:$0xf]
      %v1111 = vld [vmem:[%s1106 + $0x10] sm:$0xf]
      %v1112 = vld [vmem:[%s1106 + $0x14] sm:$0xf]
      %v1113 = vld [vmem:[%s1106 + $0x18] sm:$0xf]
      %v1114 = vld [vmem:[%s1106 + $0x1c] sm:$0xf]
      %v1115 = vld [vmem:[%s1106 + $0x20] sm:$0xf]
      %v1116 = vld [vmem:[%s1106 + $0x24] sm:$0xf]
      %v1117 = vld [vmem:[%s1106 + $0x28] sm:$0xf]
      %v1118 = vld [vmem:[%s1106 + $0x2c] sm:$0xf]
      %v1119 = vld [vmem:[%s1106 + $0x30] sm:$0xf]
      %v1120 = vld [vmem:[%s1106 + $0x34] sm:$0xf]
      %v1121 = vld [vmem:[%s1106 + $0x38] sm:$0xf]
      %v1122 = vld [vmem:[%s1106 + $0x3c] sm:$0xf]
      %v1139 = vunpack.c.l.b16 %v1107
      %v1140 = vunpack.c.l.b16 %v1108
      %v1141 = vunpack.c.l.b16 %v1109
      %v1142 = vunpack.c.l.b16 %v1110
      %v1143 = vunpack.c.l.b16 %v1111
      %v1144 = vunpack.c.l.b16 %v1112
      %v1145 = vunpack.c.l.b16 %v1113
      %v1146 = vunpack.c.l.b16 %v1114
      %v1147 = vunpack.c.l.b16 %v1115
      %v1148 = vunpack.c.l.b16 %v1116
      %v1149 = vunpack.c.l.b16 %v1117
      %v1150 = vunpack.c.l.b16 %v1118
      %v1151 = vunpack.c.l.b16 %v1119
      %v1152 = vunpack.c.l.b16 %v1120
      %v1153 = vunpack.c.l.b16 %v1121
      %v1154 = vunpack.c.l.b16 %v1122
      %v1155 = vpack.c.b16 %v1140, %v1139
      %v1156 = vpack.c.b16 %v1142, %v1141
      %v1157 = vpack.c.b16 %v1144, %v1143
      %v1158 = vpack.c.b16 %v1146, %v1145
      %v1159 = vpack.c.b16 %v1148, %v1147
      %v1160 = vpack.c.b16 %v1150, %v1149
      %v1161 = vpack.c.b16 %v1152, %v1151
      %v1162 = vpack.c.b16 %v1154, %v1153
      %1171 = vmatpush.bf16.msra.mxu0 %v1162
      %1172 = vmatpush.bf16.msra.mxu0 %v1161
      %1173 = vmatpush.bf16.msra.mxu0 %v1160
      %1174 = vmatpush.bf16.msra.mxu0 %v1159
      %1175 = vmatpush.bf16.msra.mxu0 %v1158
      %1176 = vmatpush.bf16.msra.mxu0 %v1157
      %1177 = vmatpush.bf16.msra.mxu0 %v1156
      %1178 = vmatpush.bf16.msra.mxu0 %v1155
      %1179 = vmatmul.bf16.gmra.mxu0 %v1097
      %v1180 = vpop.f32.mrf.mxu0
      %v1181 = vadd.f32 0.0, %v1180
      %v1182 = vpop.f32.mrf.mxu0
      %v1183 = vadd.f32 0.0, %v1182
      %1184 = vmatmul.bf16.gmra.mxu0 %v1098
      %v1185 = vpop.f32.mrf.mxu0
      %v1186 = vadd.f32 0.0, %v1185
      %v1187 = vpop.f32.mrf.mxu0
      %v1188 = vadd.f32 0.0, %v1187
      %1189 = vmatmul.bf16.gmra.mxu0 %v1099
      %v1190 = vpop.f32.mrf.mxu0
      %v1191 = vadd.f32 0.0, %v1190
      %v1192 = vpop.f32.mrf.mxu0
      %v1193 = vadd.f32 0.0, %v1192
      %1194 = vmatmul.bf16.gmra.mxu0 %v1100
      %v1195 = vpop.f32.mrf.mxu0
      %v1196 = vadd.f32 0.0, %v1195
      %v1197 = vpop.f32.mrf.mxu0
      %v1198 = vadd.f32 0.0, %v1197
      %1199 = vmatmul.bf16.gmra.mxu0 %v1101
      %v1200 = vpop.f32.mrf.mxu0
      %v1201 = vadd.f32 0.0, %v1200
      %v1202 = vpop.f32.mrf.mxu0
      %v1203 = vadd.f32 0.0, %v1202
      %1204 = vmatmul.bf16.gmra.mxu0 %v1102
      %v1205 = vpop.f32.mrf.mxu0
      %v1206 = vadd.f32 0.0, %v1205
      %v1207 = vpop.f32.mrf.mxu0
      %v1208 = vadd.f32 0.0, %v1207
      %1209 = vmatmul.bf16.gmra.mxu0 %v1103
      %v1210 = vpop.f32.mrf.mxu0
      %v1211 = vadd.f32 0.0, %v1210
      %v1212 = vpop.f32.mrf.mxu0
      %v1213 = vadd.f32 0.0, %v1212
      %1214 = vmatmul.bf16.gmra.mxu0 %v1104
      %v1215 = vpop.f32.mrf.mxu0
      %v1216 = vadd.f32 0.0, %v1215
      %v1217 = vpop.f32.mrf.mxu0
      %v1218 = vadd.f32 0.0, %v1217
      %1219 = vmatmul.bf16.gmra.mxu0 %v1105
      %v1220 = vpop.f32.mrf.mxu0
      %v1221 = vadd.f32 0.0, %v1220
      %v1222 = vpop.f32.mrf.mxu0
      %v1223 = vadd.f32 0.0, %v1222
      %1224 = vdwg.mxu0
      %v1225 = vadd.f32 %v1043, %v1181
      %v1226 = vadd.f32 %v1044, %v1183
      %v1227 = vadd.f32 %v1045, %v1186
      %v1228 = vadd.f32 %v1046, %v1188
      %v1229 = vadd.f32 %v1047, %v1191
      %v1230 = vadd.f32 %v1048, %v1193
      %v1231 = vadd.f32 %v1049, %v1196
      %v1232 = vadd.f32 %v1050, %v1198
      %v1233 = vadd.f32 %v1051, %v1201
      %v1234 = vadd.f32 %v1052, %v1203
      %v1235 = vadd.f32 %v1053, %v1206
      %v1236 = vadd.f32 %v1054, %v1208
      %v1237 = vadd.f32 %v1055, %v1211
      %v1238 = vadd.f32 %v1056, %v1213
      %v1239 = vadd.f32 %v1057, %v1216
      %v1240 = vadd.f32 %v1058, %v1218
      %v1241 = vadd.f32 %v1059, %v1221
      %v1242 = vadd.f32 %v1060, %v1223
      %v1243 = vld [vmem:[#allocation2 + $0x10] sm:$0xff]
      %v1244 = vld [vmem:[#allocation2 + $0x18] sm:$0xff]
      %v1245 = vld [vmem:[#allocation2 + $0x20] sm:$0xff]
      %v1246 = vld [vmem:[#allocation2 + $0x28] sm:$0xff]
      %v1247 = vld [vmem:[#allocation2 + $0x30] sm:$0xff]
      %v1248 = vld [vmem:[#allocation2 + $0x38] sm:$0xff]
      %v1249 = vld [vmem:[#allocation2 + $0x40] sm:$0xff]
      %v1250 = vld [vmem:[#allocation2 + $0x48] sm:$0xff]
      %v1251 = vld [vmem:[#allocation2 + $0x50] sm:$0xff]
      %v1252 = vld [vmem:[#allocation2 + $0x58] sm:$0xff]
      %v1253 = vld [vmem:[#allocation2 + $0x60] sm:$0xff]
      %v1254 = vld [vmem:[#allocation2 + $0x68] sm:$0xff]
      %v1255 = vld [vmem:[#allocation2 + $0x70] sm:$0xff]
      %v1256 = vld [vmem:[#allocation2 + $0x78] sm:$0xff]
      %v1257 = vld [vmem:[#allocation2 + $0x80] sm:$0xff]
      %v1258 = vld [vmem:[#allocation2 + $0x88] sm:$0xff]
      %v1259 = vld [vmem:[#allocation2 + $0x90] sm:$0xff]
      %v1260 = vld [vmem:[#allocation2 + $0x98] sm:$0xff]
      %v1261 = vpack.c.bf16 %v1244, %v1243
      %v1262 = vpack.c.bf16 %v1246, %v1245
      %v1263 = vpack.c.bf16 %v1248, %v1247
      %v1264 = vpack.c.bf16 %v1250, %v1249
      %v1265 = vpack.c.bf16 %v1252, %v1251
      %v1266 = vpack.c.bf16 %v1254, %v1253
      %v1267 = vpack.c.bf16 %v1256, %v1255
      %v1268 = vpack.c.bf16 %v1258, %v1257
      %v1269 = vpack.c.bf16 %v1260, %v1259
      %s1270 = scalar_lea.vmem %s5, 256
      %v1271 = vld [vmem:[%s1270] sm:$0xf]
      %v1272 = vld [vmem:[%s1270 + $0x4] sm:$0xf]
      %v1273 = vld [vmem:[%s1270 + $0x8] sm:$0xf]
      %v1274 = vld [vmem:[%s1270 + $0xc] sm:$0xf]
      %v1275 = vld [vmem:[%s1270 + $0x10] sm:$0xf]
      %v1276 = vld [vmem:[%s1270 + $0x14] sm:$0xf]
      %v1277 = vld [vmem:[%s1270 + $0x18] sm:$0xf]
      %v1278 = vld [vmem:[%s1270 + $0x1c] sm:$0xf]
      %v1279 = vld [vmem:[%s1270 + $0x20] sm:$0xf]
      %v1280 = vld [vmem:[%s1270 + $0x24] sm:$0xf]
      %v1281 = vld [vmem:[%s1270 + $0x28] sm:$0xf]
      %v1282 = vld [vmem:[%s1270 + $0x2c] sm:$0xf]
      %v1283 = vld [vmem:[%s1270 + $0x30] sm:$0xf]
      %v1284 = vld [vmem:[%s1270 + $0x34] sm:$0xf]
      %v1285 = vld [vmem:[%s1270 + $0x38] sm:$0xf]
      %v1286 = vld [vmem:[%s1270 + $0x3c] sm:$0xf]
      %v1303 = vunpack.c.l.b16 %v1271
      %v1304 = vunpack.c.l.b16 %v1272
      %v1305 = vunpack.c.l.b16 %v1273
      %v1306 = vunpack.c.l.b16 %v1274
      %v1307 = vunpack.c.l.b16 %v1275
      %v1308 = vunpack.c.l.b16 %v1276
      %v1309 = vunpack.c.l.b16 %v1277
      %v1310 = vunpack.c.l.b16 %v1278
      %v1311 = vunpack.c.l.b16 %v1279
      %v1312 = vunpack.c.l.b16 %v1280
      %v1313 = vunpack.c.l.b16 %v1281
      %v1314 = vunpack.c.l.b16 %v1282
      %v1315 = vunpack.c.l.b16 %v1283
      %v1316 = vunpack.c.l.b16 %v1284
      %v1317 = vunpack.c.l.b16 %v1285
      %v1318 = vunpack.c.l.b16 %v1286
      %v1319 = vpack.c.b16 %v1304, %v1303
      %v1320 = vpack.c.b16 %v1306, %v1305
      %v1321 = vpack.c.b16 %v1308, %v1307
      %v1322 = vpack.c.b16 %v1310, %v1309
      %v1323 = vpack.c.b16 %v1312, %v1311
      %v1324 = vpack.c.b16 %v1314, %v1313
      %v1325 = vpack.c.b16 %v1316, %v1315
      %v1326 = vpack.c.b16 %v1318, %v1317
      %1335 = vmatpush.bf16.msra.mxu0 %v1326
      %1336 = vmatpush.bf16.msra.mxu0 %v1325
      %1337 = vmatpush.bf16.msra.mxu0 %v1324
      %1338 = vmatpush.bf16.msra.mxu0 %v1323
      %1339 = vmatpush.bf16.msra.mxu0 %v1322
      %1340 = vmatpush.bf16.msra.mxu0 %v1321
      %1341 = vmatpush.bf16.msra.mxu0 %v1320
      %1342 = vmatpush.bf16.msra.mxu0 %v1319
      %1343 = vmatmul.bf16.gmra.mxu0 %v1261
      %v1344 = vpop.f32.mrf.mxu0
      %v1345 = vadd.f32 0.0, %v1344
      %v1346 = vpop.f32.mrf.mxu0
      %v1347 = vadd.f32 0.0, %v1346
      %1348 = vmatmul.bf16.gmra.mxu0 %v1262
      %v1349 = vpop.f32.mrf.mxu0
      %v1350 = vadd.f32 0.0, %v1349
      %v1351 = vpop.f32.mrf.mxu0
      %v1352 = vadd.f32 0.0, %v1351
      %1353 = vmatmul.bf16.gmra.mxu0 %v1263
      %v1354 = vpop.f32.mrf.mxu0
      %v1355 = vadd.f32 0.0, %v1354
      %v1356 = vpop.f32.mrf.mxu0
      %v1357 = vadd.f32 0.0, %v1356
      %1358 = vmatmul.bf16.gmra.mxu0 %v1264
      %v1359 = vpop.f32.mrf.mxu0
      %v1360 = vadd.f32 0.0, %v1359
      %v1361 = vpop.f32.mrf.mxu0
      %v1362 = vadd.f32 0.0, %v1361
      %1363 = vmatmul.bf16.gmra.mxu0 %v1265
      %v1364 = vpop.f32.mrf.mxu0
      %v1365 = vadd.f32 0.0, %v1364
      %v1366 = vpop.f32.mrf.mxu0
      %v1367 = vadd.f32 0.0, %v1366
      %1368 = vmatmul.bf16.gmra.mxu0 %v1266
      %v1369 = vpop.f32.mrf.mxu0
      %v1370 = vadd.f32 0.0, %v1369
      %v1371 = vpop.f32.mrf.mxu0
      %v1372 = vadd.f32 0.0, %v1371
      %1373 = vmatmul.bf16.gmra.mxu0 %v1267
      %v1374 = vpop.f32.mrf.mxu0
      %v1375 = vadd.f32 0.0, %v1374
      %v1376 = vpop.f32.mrf.mxu0
      %v1377 = vadd.f32 0.0, %v1376
      %1378 = vmatmul.bf16.gmra.mxu0 %v1268
      %v1379 = vpop.f32.mrf.mxu0
      %v1380 = vadd.f32 0.0, %v1379
      %v1381 = vpop.f32.mrf.mxu0
      %v1382 = vadd.f32 0.0, %v1381
      %1383 = vmatmul.bf16.gmra.mxu0 %v1269
      %v1384 = vpop.f32.mrf.mxu0
      %v1385 = vadd.f32 0.0, %v1384
      %v1386 = vpop.f32.mrf.mxu0
      %v1387 = vadd.f32 0.0, %v1386
      %1388 = vdwg.mxu0
      %v1389 = vadd.f32 %v1225, %v1345
      %v1390 = vadd.f32 %v1226, %v1347
      %v1391 = vadd.f32 %v1227, %v1350
      %v1392 = vadd.f32 %v1228, %v1352
      %v1393 = vadd.f32 %v1229, %v1355
      %v1394 = vadd.f32 %v1230, %v1357
      %v1395 = vadd.f32 %v1231, %v1360
      %v1396 = vadd.f32 %v1232, %v1362
      %v1397 = vadd.f32 %v1233, %v1365
      %v1398 = vadd.f32 %v1234, %v1367
      %v1399 = vadd.f32 %v1235, %v1370
      %v1400 = vadd.f32 %v1236, %v1372
      %v1401 = vadd.f32 %v1237, %v1375
      %v1402 = vadd.f32 %v1238, %v1377
      %v1403 = vadd.f32 %v1239, %v1380
      %v1404 = vadd.f32 %v1240, %v1382
      %v1405 = vadd.f32 %v1241, %v1385
      %v1406 = vadd.f32 %v1242, %v1387
      %v1407 = vld [vmem:[#allocation2 + $0x11] sm:$0xff]
      %v1408 = vld [vmem:[#allocation2 + $0x19] sm:$0xff]
      %v1409 = vld [vmem:[#allocation2 + $0x21] sm:$0xff]
      %v1410 = vld [vmem:[#allocation2 + $0x29] sm:$0xff]
      %v1411 = vld [vmem:[#allocation2 + $0x31] sm:$0xff]
      %v1412 = vld [vmem:[#allocation2 + $0x39] sm:$0xff]
      %v1413 = vld [vmem:[#allocation2 + $0x41] sm:$0xff]
      %v1414 = vld [vmem:[#allocation2 + $0x49] sm:$0xff]
      %v1415 = vld [vmem:[#allocation2 + $0x51] sm:$0xff]
      %v1416 = vld [vmem:[#allocation2 + $0x59] sm:$0xff]
      %v1417 = vld [vmem:[#allocation2 + $0x61] sm:$0xff]
      %v1418 = vld [vmem:[#allocation2 + $0x69] sm:$0xff]
      %v1419 = vld [vmem:[#allocation2 + $0x71] sm:$0xff]
      %v1420 = vld [vmem:[#allocation2 + $0x79] sm:$0xff]
      %v1421 = vld [vmem:[#allocation2 + $0x81] sm:$0xff]
      %v1422 = vld [vmem:[#allocation2 + $0x89] sm:$0xff]
      %v1423 = vld [vmem:[#allocation2 + $0x91] sm:$0xff]
      %v1424 = vld [vmem:[#allocation2 + $0x99] sm:$0xff]
      %v1425 = vmul.f32 %v1407, %v810
      %v1426 = vmul.f32 %v1408, %v815
      %v1427 = vmul.f32 %v1409, %v820
      %v1428 = vmul.f32 %v1410, %v825
      %v1429 = vmul.f32 %v1411, %v830
      %v1430 = vmul.f32 %v1412, %v835
      %v1431 = vmul.f32 %v1413, %v840
      %v1432 = vmul.f32 %v1414, %v845
      %v1433 = vmul.f32 %v1415, %v850
      %v1434 = vmul.f32 %v1416, %v855
      %v1435 = vmul.f32 %v1417, %v860
      %v1436 = vmul.f32 %v1418, %v865
      %v1437 = vmul.f32 %v1419, %v870
      %v1438 = vmul.f32 %v1420, %v875
      %v1439 = vmul.f32 %v1421, %v880
      %v1440 = vmul.f32 %v1422, %v885
      %v1441 = vmul.f32 %v1423, %v890
      %v1442 = vmul.f32 %v1424, %v895
      %v1443 = vpack.c.bf16 %v1426, %v1425
      %v1444 = vpack.c.bf16 %v1428, %v1427
      %v1445 = vpack.c.bf16 %v1430, %v1429
      %v1446 = vpack.c.bf16 %v1432, %v1431
      %v1447 = vpack.c.bf16 %v1434, %v1433
      %v1448 = vpack.c.bf16 %v1436, %v1435
      %v1449 = vpack.c.bf16 %v1438, %v1437
      %v1450 = vpack.c.bf16 %v1440, %v1439
      %v1451 = vpack.c.bf16 %v1442, %v1441
      %s1452 = scalar_lea.vmem %s5, 320
      %v1453 = vld [vmem:[%s1452] sm:$0xf]
      %v1454 = vld [vmem:[%s1452 + $0x4] sm:$0xf]
      %v1455 = vld [vmem:[%s1452 + $0x8] sm:$0xf]
      %v1456 = vld [vmem:[%s1452 + $0xc] sm:$0xf]
      %v1457 = vld [vmem:[%s1452 + $0x10] sm:$0xf]
      %v1458 = vld [vmem:[%s1452 + $0x14] sm:$0xf]
      %v1459 = vld [vmem:[%s1452 + $0x18] sm:$0xf]
      %v1460 = vld [vmem:[%s1452 + $0x1c] sm:$0xf]
      %v1461 = vld [vmem:[%s1452 + $0x20] sm:$0xf]
      %v1462 = vld [vmem:[%s1452 + $0x24] sm:$0xf]
      %v1463 = vld [vmem:[%s1452 + $0x28] sm:$0xf]
      %v1464 = vld [vmem:[%s1452 + $0x2c] sm:$0xf]
      %v1465 = vld [vmem:[%s1452 + $0x30] sm:$0xf]
      %v1466 = vld [vmem:[%s1452 + $0x34] sm:$0xf]
      %v1467 = vld [vmem:[%s1452 + $0x38] sm:$0xf]
      %v1468 = vld [vmem:[%s1452 + $0x3c] sm:$0xf]
      %v1485 = vunpack.c.l.b16 %v1453
      %v1486 = vunpack.c.l.b16 %v1454
      %v1487 = vunpack.c.l.b16 %v1455
      %v1488 = vunpack.c.l.b16 %v1456
      %v1489 = vunpack.c.l.b16 %v1457
      %v1490 = vunpack.c.l.b16 %v1458
      %v1491 = vunpack.c.l.b16 %v1459
      %v1492 = vunpack.c.l.b16 %v1460
      %v1493 = vunpack.c.l.b16 %v1461
      %v1494 = vunpack.c.l.b16 %v1462
      %v1495 = vunpack.c.l.b16 %v1463
      %v1496 = vunpack.c.l.b16 %v1464
      %v1497 = vunpack.c.l.b16 %v1465
      %v1498 = vunpack.c.l.b16 %v1466
      %v1499 = vunpack.c.l.b16 %v1467
      %v1500 = vunpack.c.l.b16 %v1468
      %v1501 = vpack.c.b16 %v1486, %v1485
      %v1502 = vpack.c.b16 %v1488, %v1487
      %v1503 = vpack.c.b16 %v1490, %v1489
      %v1504 = vpack.c.b16 %v1492, %v1491
      %v1505 = vpack.c.b16 %v1494, %v1493
      %v1506 = vpack.c.b16 %v1496, %v1495
      %v1507 = vpack.c.b16 %v1498, %v1497
      %v1508 = vpack.c.b16 %v1500, %v1499
      %1517 = vmatpush.bf16.msra.mxu0 %v1508
      %1518 = vmatpush.bf16.msra.mxu0 %v1507
      %1519 = vmatpush.bf16.msra.mxu0 %v1506
      %1520 = vmatpush.bf16.msra.mxu0 %v1505
      %1521 = vmatpush.bf16.msra.mxu0 %v1504
      %1522 = vmatpush.bf16.msra.mxu0 %v1503
      %1523 = vmatpush.bf16.msra.mxu0 %v1502
      %1524 = vmatpush.bf16.msra.mxu0 %v1501
      %1525 = vmatmul.bf16.gmra.mxu0 %v1443
      %v1526 = vpop.f32.mrf.mxu0
      %v1527 = vadd.f32 0.0, %v1526
      %v1528 = vpop.f32.mrf.mxu0
      %v1529 = vadd.f32 0.0, %v1528
      %1530 = vmatmul.bf16.gmra.mxu0 %v1444
      %v1531 = vpop.f32.mrf.mxu0
      %v1532 = vadd.f32 0.0, %v1531
      %v1533 = vpop.f32.mrf.mxu0
      %v1534 = vadd.f32 0.0, %v1533
      %1535 = vmatmul.bf16.gmra.mxu0 %v1445
      %v1536 = vpop.f32.mrf.mxu0
      %v1537 = vadd.f32 0.0, %v1536
      %v1538 = vpop.f32.mrf.mxu0
      %v1539 = vadd.f32 0.0, %v1538
      %1540 = vmatmul.bf16.gmra.mxu0 %v1446
      %v1541 = vpop.f32.mrf.mxu0
      %v1542 = vadd.f32 0.0, %v1541
      %v1543 = vpop.f32.mrf.mxu0
      %v1544 = vadd.f32 0.0, %v1543
      %1545 = vmatmul.bf16.gmra.mxu0 %v1447
      %v1546 = vpop.f32.mrf.mxu0
      %v1547 = vadd.f32 0.0, %v1546
      %v1548 = vpop.f32.mrf.mxu0
      %v1549 = vadd.f32 0.0, %v1548
      %1550 = vmatmul.bf16.gmra.mxu0 %v1448
      %v1551 = vpop.f32.mrf.mxu0
      %v1552 = vadd.f32 0.0, %v1551
      %v1553 = vpop.f32.mrf.mxu0
      %v1554 = vadd.f32 0.0, %v1553
      %1555 = vmatmul.bf16.gmra.mxu0 %v1449
      %v1556 = vpop.f32.mrf.mxu0
      %v1557 = vadd.f32 0.0, %v1556
      %v1558 = vpop.f32.mrf.mxu0
      %v1559 = vadd.f32 0.0, %v1558
      %1560 = vmatmul.bf16.gmra.mxu0 %v1450
      %v1561 = vpop.f32.mrf.mxu0
      %v1562 = vadd.f32 0.0, %v1561
      %v1563 = vpop.f32.mrf.mxu0
      %v1564 = vadd.f32 0.0, %v1563
      %1565 = vmatmul.bf16.gmra.mxu0 %v1451
      %v1566 = vpop.f32.mrf.mxu0
      %v1567 = vadd.f32 0.0, %v1566
      %v1568 = vpop.f32.mrf.mxu0
      %v1569 = vadd.f32 0.0, %v1568
      %1570 = vdwg.mxu0
      %v1571 = vadd.f32 %v1389, %v1527
      %v1572 = vadd.f32 %v1390, %v1529
      %v1573 = vadd.f32 %v1391, %v1532
      %v1574 = vadd.f32 %v1392, %v1534
      %v1575 = vadd.f32 %v1393, %v1537
      %v1576 = vadd.f32 %v1394, %v1539
      %v1577 = vadd.f32 %v1395, %v1542
      %v1578 = vadd.f32 %v1396, %v1544
      %v1579 = vadd.f32 %v1397, %v1547
      %v1580 = vadd.f32 %v1398, %v1549
      %v1581 = vadd.f32 %v1399, %v1552
      %v1582 = vadd.f32 %v1400, %v1554
      %v1583 = vadd.f32 %v1401, %v1557
      %v1584 = vadd.f32 %v1402, %v1559
      %v1585 = vadd.f32 %v1403, %v1562
      %v1586 = vadd.f32 %v1404, %v1564
      %v1587 = vadd.f32 %v1405, %v1567
      %v1588 = vadd.f32 %v1406, %v1569
      %v1589 = vld [vmem:[#allocation2 + $0x1b] sm:$0xff]
      %v1590 = vld [vmem:[#allocation2 + $0x23] sm:$0xff]
      %v1591 = vld [vmem:[#allocation2 + $0x2b] sm:$0xff]
      %v1592 = vld [vmem:[#allocation2 + $0x33] sm:$0xff]
      %v1593 = vld [vmem:[#allocation2 + $0x3b] sm:$0xff]
      %v1594 = vld [vmem:[#allocation2 + $0x43] sm:$0xff]
      %v1595 = vld [vmem:[#allocation2 + $0x4b] sm:$0xff]
      %v1596 = vld [vmem:[#allocation2 + $0x53] sm:$0xff]
      %v1597 = vld [vmem:[#allocation2 + $0x5b] sm:$0xff]
      %v1598 = vld [vmem:[#allocation2 + $0x63] sm:$0xff]
      %v1599 = vld [vmem:[#allocation2 + $0x6b] sm:$0xff]
      %v1600 = vld [vmem:[#allocation2 + $0x73] sm:$0xff]
      %v1601 = vld [vmem:[#allocation2 + $0x7b] sm:$0xff]
      %v1602 = vld [vmem:[#allocation2 + $0x83] sm:$0xff]
      %v1603 = vld [vmem:[#allocation2 + $0x8b] sm:$0xff]
      %v1604 = vld [vmem:[#allocation2 + $0x93] sm:$0xff]
      %v1605 = vld [vmem:[#allocation2 + $0x9b] sm:$0xff]
      %v1606 = vld [vmem:[#allocation2 + $0xa3] sm:$0xff]
      %v1607 = vmul.f32 %v1589, %v411
      %v1608 = vmul.f32 %v1590, %v416
      %v1609 = vmul.f32 %v1591, %v421
      %v1610 = vmul.f32 %v1592, %v426
      %v1611 = vmul.f32 %v1593, %v431
      %v1612 = vmul.f32 %v1594, %v436
      %v1613 = vmul.f32 %v1595, %v441
      %v1614 = vmul.f32 %v1596, %v446
      %v1615 = vmul.f32 %v1597, %v451
      %v1616 = vmul.f32 %v1598, %v456
      %v1617 = vmul.f32 %v1599, %v461
      %v1618 = vmul.f32 %v1600, %v466
      %v1619 = vmul.f32 %v1601, %v471
      %v1620 = vmul.f32 %v1602, %v476
      %v1621 = vmul.f32 %v1603, %v481
      %v1622 = vmul.f32 %v1604, %v486
      %v1623 = vmul.f32 %v1605, %v491
      %v1624 = vmul.f32 %v1606, %v496
      %v1625 = vpack.c.bf16 %v1608, %v1607
      %v1626 = vpack.c.bf16 %v1610, %v1609
      %v1627 = vpack.c.bf16 %v1612, %v1611
      %v1628 = vpack.c.bf16 %v1614, %v1613
      %v1629 = vpack.c.bf16 %v1616, %v1615
      %v1630 = vpack.c.bf16 %v1618, %v1617
      %v1631 = vpack.c.bf16 %v1620, %v1619
      %v1632 = vpack.c.bf16 %v1622, %v1621
      %v1633 = vpack.c.bf16 %v1624, %v1623
      %s1634 = scalar_lea.vmem %s5, 384
      %v1635 = vld [vmem:[%s1634] sm:$0xf]
      %v1636 = vld [vmem:[%s1634 + $0x4] sm:$0xf]
      %v1637 = vld [vmem:[%s1634 + $0x8] sm:$0xf]
      %v1638 = vld [vmem:[%s1634 + $0xc] sm:$0xf]
      %v1639 = vld [vmem:[%s1634 + $0x10] sm:$0xf]
      %v1640 = vld [vmem:[%s1634 + $0x14] sm:$0xf]
      %v1641 = vld [vmem:[%s1634 + $0x18] sm:$0xf]
      %v1642 = vld [vmem:[%s1634 + $0x1c] sm:$0xf]
      %v1643 = vld [vmem:[%s1634 + $0x20] sm:$0xf]
      %v1644 = vld [vmem:[%s1634 + $0x24] sm:$0xf]
      %v1645 = vld [vmem:[%s1634 + $0x28] sm:$0xf]
      %v1646 = vld [vmem:[%s1634 + $0x2c] sm:$0xf]
      %v1647 = vld [vmem:[%s1634 + $0x30] sm:$0xf]
      %v1648 = vld [vmem:[%s1634 + $0x34] sm:$0xf]
      %v1649 = vld [vmem:[%s1634 + $0x38] sm:$0xf]
      %v1650 = vld [vmem:[%s1634 + $0x3c] sm:$0xf]
      %v1667 = vunpack.c.l.b16 %v1635
      %v1668 = vunpack.c.l.b16 %v1636
      %v1669 = vunpack.c.l.b16 %v1637
      %v1670 = vunpack.c.l.b16 %v1638
      %v1671 = vunpack.c.l.b16 %v1639
      %v1672 = vunpack.c.l.b16 %v1640
      %v1673 = vunpack.c.l.b16 %v1641
      %v1674 = vunpack.c.l.b16 %v1642
      %v1675 = vunpack.c.l.b16 %v1643
      %v1676 = vunpack.c.l.b16 %v1644
      %v1677 = vunpack.c.l.b16 %v1645
      %v1678 = vunpack.c.l.b16 %v1646
      %v1679 = vunpack.c.l.b16 %v1647
      %v1680 = vunpack.c.l.b16 %v1648
      %v1681 = vunpack.c.l.b16 %v1649
      %v1682 = vunpack.c.l.b16 %v1650
      %v1683 = vpack.c.b16 %v1668, %v1667
      %v1684 = vpack.c.b16 %v1670, %v1669
      %v1685 = vpack.c.b16 %v1672, %v1671
      %v1686 = vpack.c.b16 %v1674, %v1673
      %v1687 = vpack.c.b16 %v1676, %v1675
      %v1688 = vpack.c.b16 %v1678, %v1677
      %v1689 = vpack.c.b16 %v1680, %v1679
      %v1690 = vpack.c.b16 %v1682, %v1681
      %1699 = vmatpush.bf16.msra.mxu0 %v1690
      %1700 = vmatpush.bf16.msra.mxu0 %v1689
      %1701 = vmatpush.bf16.msra.mxu0 %v1688
      %1702 = vmatpush.bf16.msra.mxu0 %v1687
      %1703 = vmatpush.bf16.msra.mxu0 %v1686
      %1704 = vmatpush.bf16.msra.mxu0 %v1685
      %1705 = vmatpush.bf16.msra.mxu0 %v1684
      %1706 = vmatpush.bf16.msra.mxu0 %v1683
      %1707 = vmatmul.bf16.gmra.mxu0 %v1625
      %v1708 = vpop.f32.mrf.mxu0
      %v1709 = vadd.f32 0.0, %v1708
      %v1710 = vpop.f32.mrf.mxu0
      %v1711 = vadd.f32 0.0, %v1710
      %1712 = vmatmul.bf16.gmra.mxu0 %v1626
      %v1713 = vpop.f32.mrf.mxu0
      %v1714 = vadd.f32 0.0, %v1713
      %v1715 = vpop.f32.mrf.mxu0
      %v1716 = vadd.f32 0.0, %v1715
      %1717 = vmatmul.bf16.gmra.mxu0 %v1627
      %v1718 = vpop.f32.mrf.mxu0
      %v1719 = vadd.f32 0.0, %v1718
      %v1720 = vpop.f32.mrf.mxu0
      %v1721 = vadd.f32 0.0, %v1720
      %1722 = vmatmul.bf16.gmra.mxu0 %v1628
      %v1723 = vpop.f32.mrf.mxu0
      %v1724 = vadd.f32 0.0, %v1723
      %v1725 = vpop.f32.mrf.mxu0
      %v1726 = vadd.f32 0.0, %v1725
      %1727 = vmatmul.bf16.gmra.mxu0 %v1629
      %v1728 = vpop.f32.mrf.mxu0
      %v1729 = vadd.f32 0.0, %v1728
      %v1730 = vpop.f32.mrf.mxu0
      %v1731 = vadd.f32 0.0, %v1730
      %1732 = vmatmul.bf16.gmra.mxu0 %v1630
      %v1733 = vpop.f32.mrf.mxu0
      %v1734 = vadd.f32 0.0, %v1733
      %v1735 = vpop.f32.mrf.mxu0
      %v1736 = vadd.f32 0.0, %v1735
      %1737 = vmatmul.bf16.gmra.mxu0 %v1631
      %v1738 = vpop.f32.mrf.mxu0
      %v1739 = vadd.f32 0.0, %v1738
      %v1740 = vpop.f32.mrf.mxu0
      %v1741 = vadd.f32 0.0, %v1740
      %1742 = vmatmul.bf16.gmra.mxu0 %v1632
      %v1743 = vpop.f32.mrf.mxu0
      %v1744 = vadd.f32 0.0, %v1743
      %v1745 = vpop.f32.mrf.mxu0
      %v1746 = vadd.f32 0.0, %v1745
      %1747 = vmatmul.bf16.gmra.mxu0 %v1633
      %v1748 = vpop.f32.mrf.mxu0
      %v1749 = vadd.f32 0.0, %v1748
      %v1750 = vpop.f32.mrf.mxu0
      %v1751 = vadd.f32 0.0, %v1750
      %1752 = vdwg.mxu0
      %v1753 = vadd.f32 %v1571, %v1709
      %v1754 = vadd.f32 %v1572, %v1711
      %v1755 = vadd.f32 %v1573, %v1714
      %v1756 = vadd.f32 %v1574, %v1716
      %v1757 = vadd.f32 %v1575, %v1719
      %v1758 = vadd.f32 %v1576, %v1721
      %v1759 = vadd.f32 %v1577, %v1724
      %v1760 = vadd.f32 %v1578, %v1726
      %v1761 = vadd.f32 %v1579, %v1729
      %v1762 = vadd.f32 %v1580, %v1731
      %v1763 = vadd.f32 %v1581, %v1734
      %v1764 = vadd.f32 %v1582, %v1736
      %v1765 = vadd.f32 %v1583, %v1739
      %v1766 = vadd.f32 %v1584, %v1741
      %v1767 = vadd.f32 %v1585, %v1744
      %v1768 = vadd.f32 %v1586, %v1746
      %v1769 = vadd.f32 %v1587, %v1749
      %v1770 = vadd.f32 %v1588, %v1751
      %v1771 = vld [vmem:[#allocation2 + $0x1c] sm:$0xff]
      %v1772 = vld [vmem:[#allocation2 + $0x24] sm:$0xff]
      %v1773 = vld [vmem:[#allocation2 + $0x2c] sm:$0xff]
      %v1774 = vld [vmem:[#allocation2 + $0x34] sm:$0xff]
      %v1775 = vld [vmem:[#allocation2 + $0x3c] sm:$0xff]
      %v1776 = vld [vmem:[#allocation2 + $0x44] sm:$0xff]
      %v1777 = vld [vmem:[#allocation2 + $0x4c] sm:$0xff]
      %v1778 = vld [vmem:[#allocation2 + $0x54] sm:$0xff]
      %v1779 = vld [vmem:[#allocation2 + $0x5c] sm:$0xff]
      %v1780 = vld [vmem:[#allocation2 + $0x64] sm:$0xff]
      %v1781 = vld [vmem:[#allocation2 + $0x6c] sm:$0xff]
      %v1782 = vld [vmem:[#allocation2 + $0x74] sm:$0xff]
      %v1783 = vld [vmem:[#allocation2 + $0x7c] sm:$0xff]
      %v1784 = vld [vmem:[#allocation2 + $0x84] sm:$0xff]
      %v1785 = vld [vmem:[#allocation2 + $0x8c] sm:$0xff]
      %v1786 = vld [vmem:[#allocation2 + $0x94] sm:$0xff]
      %v1787 = vld [vmem:[#allocation2 + $0x9c] sm:$0xff]
      %v1788 = vld [vmem:[#allocation2 + $0xa4] sm:$0xff]
      %v1789 = vpack.c.bf16 %v1772, %v1771
      %v1790 = vpack.c.bf16 %v1774, %v1773
      %v1791 = vpack.c.bf16 %v1776, %v1775
      %v1792 = vpack.c.bf16 %v1778, %v1777
      %v1793 = vpack.c.bf16 %v1780, %v1779
      %v1794 = vpack.c.bf16 %v1782, %v1781
      %v1795 = vpack.c.bf16 %v1784, %v1783
      %v1796 = vpack.c.bf16 %v1786, %v1785
      %v1797 = vpack.c.bf16 %v1788, %v1787
      %s1798 = scalar_lea.vmem %s5, 448
      %v1799 = vld [vmem:[%s1798] sm:$0xf]
      %v1800 = vld [vmem:[%s1798 + $0x4] sm:$0xf]
      %v1801 = vld [vmem:[%s1798 + $0x8] sm:$0xf]
      %v1802 = vld [vmem:[%s1798 + $0xc] sm:$0xf]
      %v1803 = vld [vmem:[%s1798 + $0x10] sm:$0xf]
      %v1804 = vld [vmem:[%s1798 + $0x14] sm:$0xf]
      %v1805 = vld [vmem:[%s1798 + $0x18] sm:$0xf]
      %v1806 = vld [vmem:[%s1798 + $0x1c] sm:$0xf]
      %v1807 = vld [vmem:[%s1798 + $0x20] sm:$0xf]
      %v1808 = vld [vmem:[%s1798 + $0x24] sm:$0xf]
      %v1809 = vld [vmem:[%s1798 + $0x28] sm:$0xf]
      %v1810 = vld [vmem:[%s1798 + $0x2c] sm:$0xf]
      %v1811 = vld [vmem:[%s1798 + $0x30] sm:$0xf]
      %v1812 = vld [vmem:[%s1798 + $0x34] sm:$0xf]
      %v1813 = vld [vmem:[%s1798 + $0x38] sm:$0xf]
      %v1814 = vld [vmem:[%s1798 + $0x3c] sm:$0xf]
      %v1831 = vunpack.c.l.b16 %v1799
      %v1832 = vunpack.c.l.b16 %v1800
      %v1833 = vunpack.c.l.b16 %v1801
      %v1834 = vunpack.c.l.b16 %v1802
      %v1835 = vunpack.c.l.b16 %v1803
      %v1836 = vunpack.c.l.b16 %v1804
      %v1837 = vunpack.c.l.b16 %v1805
      %v1838 = vunpack.c.l.b16 %v1806
      %v1839 = vunpack.c.l.b16 %v1807
      %v1840 = vunpack.c.l.b16 %v1808
      %v1841 = vunpack.c.l.b16 %v1809
      %v1842 = vunpack.c.l.b16 %v1810
      %v1843 = vunpack.c.l.b16 %v1811
      %v1844 = vunpack.c.l.b16 %v1812
      %v1845 = vunpack.c.l.b16 %v1813
      %v1846 = vunpack.c.l.b16 %v1814
      %v1847 = vpack.c.b16 %v1832, %v1831
      %v1848 = vpack.c.b16 %v1834, %v1833
      %v1849 = vpack.c.b16 %v1836, %v1835
      %v1850 = vpack.c.b16 %v1838, %v1837
      %v1851 = vpack.c.b16 %v1840, %v1839
      %v1852 = vpack.c.b16 %v1842, %v1841
      %v1853 = vpack.c.b16 %v1844, %v1843
      %v1854 = vpack.c.b16 %v1846, %v1845
      %1863 = vmatpush.bf16.msra.mxu0 %v1854
      %1864 = vmatpush.bf16.msra.mxu0 %v1853
      %1865 = vmatpush.bf16.msra.mxu0 %v1852
      %1866 = vmatpush.bf16.msra.mxu0 %v1851
      %1867 = vmatpush.bf16.msra.mxu0 %v1850
      %1868 = vmatpush.bf16.msra.mxu0 %v1849
      %1869 = vmatpush.bf16.msra.mxu0 %v1848
      %1870 = vmatpush.bf16.msra.mxu0 %v1847
      %1871 = vmatmul.bf16.gmra.mxu0 %v1789
      %v1872 = vpop.f32.mrf.mxu0
      %v1873 = vadd.f32 0.0, %v1872
      %v1874 = vpop.f32.mrf.mxu0
      %v1875 = vadd.f32 0.0, %v1874
      %1876 = vmatmul.bf16.gmra.mxu0 %v1790
      %v1877 = vpop.f32.mrf.mxu0
      %v1878 = vadd.f32 0.0, %v1877
      %v1879 = vpop.f32.mrf.mxu0
      %v1880 = vadd.f32 0.0, %v1879
      %1881 = vmatmul.bf16.gmra.mxu0 %v1791
      %v1882 = vpop.f32.mrf.mxu0
      %v1883 = vadd.f32 0.0, %v1882
      %v1884 = vpop.f32.mrf.mxu0
      %v1885 = vadd.f32 0.0, %v1884
      %1886 = vmatmul.bf16.gmra.mxu0 %v1792
      %v1887 = vpop.f32.mrf.mxu0
      %v1888 = vadd.f32 0.0, %v1887
      %v1889 = vpop.f32.mrf.mxu0
      %v1890 = vadd.f32 0.0, %v1889
      %1891 = vmatmul.bf16.gmra.mxu0 %v1793
      %v1892 = vpop.f32.mrf.mxu0
      %v1893 = vadd.f32 0.0, %v1892
      %v1894 = vpop.f32.mrf.mxu0
      %v1895 = vadd.f32 0.0, %v1894
      %1896 = vmatmul.bf16.gmra.mxu0 %v1794
      %v1897 = vpop.f32.mrf.mxu0
      %v1898 = vadd.f32 0.0, %v1897
      %v1899 = vpop.f32.mrf.mxu0
      %v1900 = vadd.f32 0.0, %v1899
      %1901 = vmatmul.bf16.gmra.mxu0 %v1795
      %v1902 = vpop.f32.mrf.mxu0
      %v1903 = vadd.f32 0.0, %v1902
      %v1904 = vpop.f32.mrf.mxu0
      %v1905 = vadd.f32 0.0, %v1904
      %1906 = vmatmul.bf16.gmra.mxu0 %v1796
      %v1907 = vpop.f32.mrf.mxu0
      %v1908 = vadd.f32 0.0, %v1907
      %v1909 = vpop.f32.mrf.mxu0
      %v1910 = vadd.f32 0.0, %v1909
      %1911 = vmatmul.bf16.gmra.mxu0 %v1797
      %v1912 = vpop.f32.mrf.mxu0
      %v1913 = vadd.f32 0.0, %v1912
      %v1914 = vpop.f32.mrf.mxu0
      %v1915 = vadd.f32 0.0, %v1914
      %1916 = vdwg.mxu0
      %v1917 = vadd.f32 %v1753, %v1873
      %v1918 = vadd.f32 %v1754, %v1875
      %v1919 = vadd.f32 %v1755, %v1878
      %v1920 = vadd.f32 %v1756, %v1880
      %v1921 = vadd.f32 %v1757, %v1883
      %v1922 = vadd.f32 %v1758, %v1885
      %v1923 = vadd.f32 %v1759, %v1888
      %v1924 = vadd.f32 %v1760, %v1890
      %v1925 = vadd.f32 %v1761, %v1893
      %v1926 = vadd.f32 %v1762, %v1895
      %v1927 = vadd.f32 %v1763, %v1898
      %v1928 = vadd.f32 %v1764, %v1900
      %v1929 = vadd.f32 %v1765, %v1903
      %v1930 = vadd.f32 %v1766, %v1905
      %v1931 = vadd.f32 %v1767, %v1908
      %v1932 = vadd.f32 %v1768, %v1910
      %v1933 = vadd.f32 %v1769, %v1913
      %v1934 = vadd.f32 %v1770, %v1915
      %v1935 = vld [vmem:[#allocation2 + $0x1d] sm:$0xff]
      %v1936 = vld [vmem:[#allocation2 + $0x25] sm:$0xff]
      %v1937 = vld [vmem:[#allocation2 + $0x2d] sm:$0xff]
      %v1938 = vld [vmem:[#allocation2 + $0x35] sm:$0xff]
      %v1939 = vld [vmem:[#allocation2 + $0x3d] sm:$0xff]
      %v1940 = vld [vmem:[#allocation2 + $0x45] sm:$0xff]
      %v1941 = vld [vmem:[#allocation2 + $0x4d] sm:$0xff]
      %v1942 = vld [vmem:[#allocation2 + $0x55] sm:$0xff]
      %v1943 = vld [vmem:[#allocation2 + $0x5d] sm:$0xff]
      %v1944 = vld [vmem:[#allocation2 + $0x65] sm:$0xff]
      %v1945 = vld [vmem:[#allocation2 + $0x6d] sm:$0xff]
      %v1946 = vld [vmem:[#allocation2 + $0x75] sm:$0xff]
      %v1947 = vld [vmem:[#allocation2 + $0x7d] sm:$0xff]
      %v1948 = vld [vmem:[#allocation2 + $0x85] sm:$0xff]
      %v1949 = vld [vmem:[#allocation2 + $0x8d] sm:$0xff]
      %v1950 = vld [vmem:[#allocation2 + $0x95] sm:$0xff]
      %v1951 = vld [vmem:[#allocation2 + $0x9d] sm:$0xff]
      %v1952 = vld [vmem:[#allocation2 + $0xa5] sm:$0xff]
      %v1953 = vmul.f32 %v1935, %v810
      %v1954 = vmul.f32 %v1936, %v815
      %v1955 = vmul.f32 %v1937, %v820
      %v1956 = vmul.f32 %v1938, %v825
      %v1957 = vmul.f32 %v1939, %v830
      %v1958 = vmul.f32 %v1940, %v835
      %v1959 = vmul.f32 %v1941, %v840
      %v1960 = vmul.f32 %v1942, %v845
      %v1961 = vmul.f32 %v1943, %v850
      %v1962 = vmul.f32 %v1944, %v855
      %v1963 = vmul.f32 %v1945, %v860
      %v1964 = vmul.f32 %v1946, %v865
      %v1965 = vmul.f32 %v1947, %v870
      %v1966 = vmul.f32 %v1948, %v875
      %v1967 = vmul.f32 %v1949, %v880
      %v1968 = vmul.f32 %v1950, %v885
      %v1969 = vmul.f32 %v1951, %v890
      %v1970 = vmul.f32 %v1952, %v895
      %v1971 = vpack.c.bf16 %v1954, %v1953
      %v1972 = vpack.c.bf16 %v1956, %v1955
      %v1973 = vpack.c.bf16 %v1958, %v1957
      %v1974 = vpack.c.bf16 %v1960, %v1959
      %v1975 = vpack.c.bf16 %v1962, %v1961
      %v1976 = vpack.c.bf16 %v1964, %v1963
      %v1977 = vpack.c.bf16 %v1966, %v1965
      %v1978 = vpack.c.bf16 %v1968, %v1967
      %v1979 = vpack.c.bf16 %v1970, %v1969
      %s1980 = scalar_lea.vmem %s5, 512
      %v1981 = vld [vmem:[%s1980] sm:$0xf]
      %v1982 = vld [vmem:[%s1980 + $0x4] sm:$0xf]
      %v1983 = vld [vmem:[%s1980 + $0x8] sm:$0xf]
      %v1984 = vld [vmem:[%s1980 + $0xc] sm:$0xf]
      %v1985 = vld [vmem:[%s1980 + $0x10] sm:$0xf]
      %v1986 = vld [vmem:[%s1980 + $0x14] sm:$0xf]
      %v1987 = vld [vmem:[%s1980 + $0x18] sm:$0xf]
      %v1988 = vld [vmem:[%s1980 + $0x1c] sm:$0xf]
      %v1989 = vld [vmem:[%s1980 + $0x20] sm:$0xf]
      %v1990 = vld [vmem:[%s1980 + $0x24] sm:$0xf]
      %v1991 = vld [vmem:[%s1980 + $0x28] sm:$0xf]
      %v1992 = vld [vmem:[%s1980 + $0x2c] sm:$0xf]
      %v1993 = vld [vmem:[%s1980 + $0x30] sm:$0xf]
      %v1994 = vld [vmem:[%s1980 + $0x34] sm:$0xf]
      %v1995 = vld [vmem:[%s1980 + $0x38] sm:$0xf]
      %v1996 = vld [vmem:[%s1980 + $0x3c] sm:$0xf]
      %v2013 = vunpack.c.l.b16 %v1981
      %v2014 = vunpack.c.l.b16 %v1982
      %v2015 = vunpack.c.l.b16 %v1983
      %v2016 = vunpack.c.l.b16 %v1984
      %v2017 = vunpack.c.l.b16 %v1985
      %v2018 = vunpack.c.l.b16 %v1986
      %v2019 = vunpack.c.l.b16 %v1987
      %v2020 = vunpack.c.l.b16 %v1988
      %v2021 = vunpack.c.l.b16 %v1989
      %v2022 = vunpack.c.l.b16 %v1990
      %v2023 = vunpack.c.l.b16 %v1991
      %v2024 = vunpack.c.l.b16 %v1992
      %v2025 = vunpack.c.l.b16 %v1993
      %v2026 = vunpack.c.l.b16 %v1994
      %v2027 = vunpack.c.l.b16 %v1995
      %v2028 = vunpack.c.l.b16 %v1996
      %v2029 = vpack.c.b16 %v2014, %v2013
      %v2030 = vpack.c.b16 %v2016, %v2015
      %v2031 = vpack.c.b16 %v2018, %v2017
      %v2032 = vpack.c.b16 %v2020, %v2019
      %v2033 = vpack.c.b16 %v2022, %v2021
      %v2034 = vpack.c.b16 %v2024, %v2023
      %v2035 = vpack.c.b16 %v2026, %v2025
      %v2036 = vpack.c.b16 %v2028, %v2027
      %2045 = vmatpush.bf16.msra.mxu0 %v2036
      %2046 = vmatpush.bf16.msra.mxu0 %v2035
      %2047 = vmatpush.bf16.msra.mxu0 %v2034
      %2048 = vmatpush.bf16.msra.mxu0 %v2033
      %2049 = vmatpush.bf16.msra.mxu0 %v2032
      %2050 = vmatpush.bf16.msra.mxu0 %v2031
      %2051 = vmatpush.bf16.msra.mxu0 %v2030
      %2052 = vmatpush.bf16.msra.mxu0 %v2029
      %2053 = vmatmul.bf16.gmra.mxu0 %v1971
      %v2054 = vpop.f32.mrf.mxu0
      %v2055 = vadd.f32 0.0, %v2054
      %v2056 = vpop.f32.mrf.mxu0
      %v2057 = vadd.f32 0.0, %v2056
      %2058 = vmatmul.bf16.gmra.mxu0 %v1972
      %v2059 = vpop.f32.mrf.mxu0
      %v2060 = vadd.f32 0.0, %v2059
      %v2061 = vpop.f32.mrf.mxu0
      %v2062 = vadd.f32 0.0, %v2061
      %2063 = vmatmul.bf16.gmra.mxu0 %v1973
      %v2064 = vpop.f32.mrf.mxu0
      %v2065 = vadd.f32 0.0, %v2064
      %v2066 = vpop.f32.mrf.mxu0
      %v2067 = vadd.f32 0.0, %v2066
      %2068 = vmatmul.bf16.gmra.mxu0 %v1974
      %v2069 = vpop.f32.mrf.mxu0
      %v2070 = vadd.f32 0.0, %v2069
      %v2071 = vpop.f32.mrf.mxu0
      %v2072 = vadd.f32 0.0, %v2071
      %2073 = vmatmul.bf16.gmra.mxu0 %v1975
      %v2074 = vpop.f32.mrf.mxu0
      %v2075 = vadd.f32 0.0, %v2074
      %v2076 = vpop.f32.mrf.mxu0
      %v2077 = vadd.f32 0.0, %v2076
      %2078 = vmatmul.bf16.gmra.mxu0 %v1976
      %v2079 = vpop.f32.mrf.mxu0
      %v2080 = vadd.f32 0.0, %v2079
      %v2081 = vpop.f32.mrf.mxu0
      %v2082 = vadd.f32 0.0, %v2081
      %2083 = vmatmul.bf16.gmra.mxu0 %v1977
      %v2084 = vpop.f32.mrf.mxu0
      %v2085 = vadd.f32 0.0, %v2084
      %v2086 = vpop.f32.mrf.mxu0
      %v2087 = vadd.f32 0.0, %v2086
      %2088 = vmatmul.bf16.gmra.mxu0 %v1978
      %v2089 = vpop.f32.mrf.mxu0
      %v2090 = vadd.f32 0.0, %v2089
      %v2091 = vpop.f32.mrf.mxu0
      %v2092 = vadd.f32 0.0, %v2091
      %2093 = vmatmul.bf16.gmra.mxu0 %v1979
      %v2094 = vpop.f32.mrf.mxu0
      %v2095 = vadd.f32 0.0, %v2094
      %v2096 = vpop.f32.mrf.mxu0
      %v2097 = vadd.f32 0.0, %v2096
      %2098 = vdwg.mxu0
      %v2099 = vadd.f32 %v1917, %v2055
      %v2100 = vadd.f32 %v1918, %v2057
      %v2101 = vadd.f32 %v1919, %v2060
      %v2102 = vadd.f32 %v1920, %v2062
      %v2103 = vadd.f32 %v1921, %v2065
      %v2104 = vadd.f32 %v1922, %v2067
      %v2105 = vadd.f32 %v1923, %v2070
      %v2106 = vadd.f32 %v1924, %v2072
      %v2107 = vadd.f32 %v1925, %v2075
      %v2108 = vadd.f32 %v1926, %v2077
      %v2109 = vadd.f32 %v1927, %v2080
      %v2110 = vadd.f32 %v1928, %v2082
      %v2111 = vadd.f32 %v1929, %v2085
      %v2112 = vadd.f32 %v1930, %v2087
      %v2113 = vadd.f32 %v1931, %v2090
      %v2114 = vadd.f32 %v1932, %v2092
      %v2115 = vadd.f32 %v1933, %v2095
      %v2116 = vadd.f32 %v1934, %v2097
      %2117 = vst [vmem:[%s251] sm:$0xff] %v2099
      %2118 = vst [vmem:[%s251 + $0x8] sm:$0xff] %v2100
      %2119 = vst [vmem:[%s251 + $0x10] sm:$0xff] %v2101
      %2120 = vst [vmem:[%s251 + $0x18] sm:$0xff] %v2102
      %2121 = vst [vmem:[%s251 + $0x20] sm:$0xff] %v2103
      %2122 = vst [vmem:[%s251 + $0x28] sm:$0xff] %v2104
      %2123 = vst [vmem:[%s251 + $0x30] sm:$0xff] %v2105
      %2124 = vst [vmem:[%s251 + $0x38] sm:$0xff] %v2106
      %2125 = vst [vmem:[%s251 + $0x40] sm:$0xff] %v2107
      %2126 = vst [vmem:[%s251 + $0x48] sm:$0xff] %v2108
      %2127 = vst [vmem:[%s251 + $0x50] sm:$0xff] %v2109
      %2128 = vst [vmem:[%s251 + $0x58] sm:$0xff] %v2110
      %2129 = vst [vmem:[%s251 + $0x60] sm:$0xff] %v2111
      %2130 = vst [vmem:[%s251 + $0x68] sm:$0xff] %v2112
      %2131 = vst [vmem:[%s251 + $0x70] sm:$0xff] %v2113
      %2132 = vst [vmem:[%s251 + $0x78] sm:$0xff] %v2114
      %2133 = vst [vmem:[%s251 + $0x80] sm:$0xff] %v2115
      %2134 = vst [vmem:[%s251 + $0x88] sm:$0xff] %v2116
      %p2135 = scmp.lt.s32.totalorder %s17, 1
      %s2136 = scalar_select %p2135, %s17, 1
      %s2137 = smul.addr %s2136, 18
      %s2138 = smul.addr %s2137, 8
      %s2139 = scalar_lea.vmem %s6, %s2138
      // Predicated region
      $region45: #{preact_bottleneck_forward.5} parent=43 // pred_check
        %p2140 = pneg %p166
      $region46: #{preact_bottleneck_forward.5} parent=43 // pred_check_branch
        %2142 = sbr.rel (%p2140) target = $region48
      $region47: #{preact_bottleneck_forward.5} parent=43 // pred_region
        _
      $region48: #{preact_bottleneck_forward.5} parent=43 // pred_fallthru
        _
    $region44: #{preact_bottleneck_forward.5} parent=5 // pred_fallthru
      _
    %p2143 = scmp.le.s32.totalorder 2, %s12
    // Predicated region
    $region49: #{preact_bottleneck_forward.5} parent=5 // pred_check
      %p2144 = pneg %p2143
    $region50: #{preact_bottleneck_forward.5} parent=5 // pred_check_branch
      %2146 = sbr.rel (%p2144) target = $region52
    $region51: #{preact_bottleneck_forward.5} parent=5 // pred_region
      %s2147 = ssub.s32 %s12, 2
      // Predicated region
      $region53: #{preact_bottleneck_forward.5} parent=51 // pred_check
        %p2148 = pneg %p172
      $region54: #{preact_bottleneck_forward.5} parent=51 // pred_check_branch
        %2150 = sbr.rel (%p2148) target = $region56
      $region55: #{preact_bottleneck_forward.5} parent=51 // pred_region
        %p2151 = scmp.lt.s32.totalorder %s18, 1
        %s2152 = scalar_select %p2151, %s18, 1
        %s2153 = smul.addr %s2152, 18
        %s2154 = smul.addr %s2153, 8
        %s2155 = scalar_lea.vmem %s6, %s2154
      $region56: #{preact_bottleneck_forward.5} parent=51 // pred_fallthru
        _
    $region52: #{preact_bottleneck_forward.5} parent=5 // pred_fallthru
      _
  $region6: #{preact_bottleneck_forward.5} parent=0 // loop_footer
    %s16 = sadd.s32 1, %s12
  $region7: #{preact_bottleneck_forward.5} parent=0 // loop_footer_branch
    %11 = sbr.rel target = $region3
  $region8: #{preact_bottleneck_forward.5} parent=0 // loop_exit
    _

</llo_original>
